<compile_context>
chip_gen: v7x
topology: tpu7x:2x2x1
jax: 0.10.0
libtpu: 0.0.40
codegen_flags: <defaults>
</compile_context>

<pallas_src>
import numpy as np
import jax
import jax.numpy as jnp
from jax import lax
from jax.experimental import pallas as pl
from jax.experimental.pallas import tpu as pltpu


# -----------------------------------------------------------------------------
# Model hyper-parameters (small, deterministic)
# -----------------------------------------------------------------------------
OUTPUT_HORIZON = 4
NUM_QUANTILES = 3
INPUT_SIZE = 4          # num_features
EMBEDDING_SIZE = 10
ENC_HIDDEN = 32
ENC_LAYERS = 3
DEC_HIDDEN = 32

BATCH = 2               # num_time_series
SEQ = 8                 # num_periods

BP = 8                  # batch padded to one full sublane group
OUT_PAD = 128           # lane-dense padded output width (>= horizon*Q)

F = INPUT_SIZE
H = ENC_HIDDEN
H4 = 4 * H
HZ = OUTPUT_HORIZON
Q = NUM_QUANTILES
HD = DEC_HIDDEN
GOUT = (HZ + 1) * HD

# ---- row layout of the packed 128-lane weight slab (static offsets) ---------
R_WIH0X = 0
R_WY = R_WIH0X + F
R_B0 = R_WY + 1
R_B1 = R_B0 + 1
R_B2 = R_B1 + 1
R_WHH0 = R_B2 + 1            # == F + 4 == 8 -> all matrices sublane-aligned
R_WIH1 = R_WHH0 + H
R_WHH1 = R_WIH1 + H
R_WIH2 = R_WHH1 + H
R_WHH2 = R_WIH2 + H
R_WLX = R_WHH2 + H
R_WLC = R_WLX + HZ * F
R_WLA = R_WLC + HZ * HD
R_BL = R_WLA + HD
N_ROWS_W = R_BL + 1

# ---- row layout of the packed GOUT-lane (global MLP) slab --------------------
R_WGX = 0
R_WGH = R_WGX + HZ * F
R_BG = R_WGH + H
N_ROWS_G = R_BG + 1


# -----------------------------------------------------------------------------
# Pallas kernel: full MQRNN forward
# -----------------------------------------------------------------------------
def mqrnn_kernel(X_ref, y_ref, xf_ref, w_ref, g_ref, out_ref):
    f32 = jnp.float32
    TB = X_ref.shape[0]
    Bp = xf_ref.shape[0]
    T = TB // Bp

    def sig(x):
        # sigmoid(x) == 0.5 * tanh(0.5*x) + 0.5  -> single EUP tanh
        return 0.5 * jnp.tanh(0.5 * x) + 0.5

    def lstm_cell(gates, c):
        # one full-vreg sigmoid + one full-vreg tanh, then slice gate blocks
        sg = sig(gates)
        th = jnp.tanh(gates)
        i = sg[:, 0 * H:1 * H]
        f = sg[:, 1 * H:2 * H]
        g = th[:, 2 * H:3 * H]
        o = sg[:, 3 * H:4 * H]
        c_new = f * c + i * g
        h_new = o * jnp.tanh(c_new)
        return h_new, c_new

    # ---- off-critical-path: layer-0 input projection for ALL timesteps ------
    #   g0_in = X @ Wih0x + y * (We @ Wih0e) + (be @ Wih0e + bih0 + bhh0)
    Wih0x = w_ref[R_WIH0X:R_WIH0X + F, :]
    Wy = w_ref[R_WY:R_WY + 1, :]
    b0p = w_ref[R_B0:R_B0 + 1, :]
    g0_in = (jnp.dot(X_ref[...], Wih0x, preferred_element_type=f32)
             + y_ref[...] * Wy + b0p)                          # (T*Bp, 4H)

    # ---- recurrent weights / biases hoisted out of the unrolled loop --------
    Whh0 = w_ref[R_WHH0:R_WHH0 + H, :]
    Wih1 = w_ref[R_WIH1:R_WIH1 + H, :]
    Whh1 = w_ref[R_WHH1:R_WHH1 + H, :]
    Wih2 = w_ref[R_WIH2:R_WIH2 + H, :]
    Whh2 = w_ref[R_WHH2:R_WHH2 + H, :]
    b1 = jnp.broadcast_to(w_ref[R_B1:R_B1 + 1, :], (Bp, H4))
    b2 = jnp.broadcast_to(w_ref[R_B2:R_B2 + 1, :], (Bp, H4))

    zeros = jnp.zeros((Bp, H), dtype=f32)
    h0, c0, h1, c1, h2, c2 = zeros, zeros, zeros, zeros, zeros, zeros

    # ---- fully-unrolled recurrence (T static). Layer-1/2 input & recurrent
    # matmuls are split: the h_self @ Whh half only depends on t-1 state, so it
    # leaves the freshly-computed-h critical path.
    for t in range(T):
        g0 = g0_in[t * Bp:(t + 1) * Bp, :] + jnp.dot(
            h0, Whh0, preferred_element_type=f32)
        h0, c0 = lstm_cell(g0, c0)

        g1 = (jnp.dot(h0, Wih1, preferred_element_type=f32)
              + jnp.dot(h1, Whh1, preferred_element_type=f32) + b1)
        h1, c1 = lstm_cell(g1, c1)

        g2 = (jnp.dot(h1, Wih2, preferred_element_type=f32)
              + jnp.dot(h2, Whh2, preferred_element_type=f32) + b2)
        h2, c2 = lstm_cell(g2, c2)

    ht = jnp.maximum(h2, 0.0)                                  # relu(h[-1])

    # ---- decoder -------------------------------------------------------------
    xf = xf_ref[...]                                           # (Bp, HZ*F)
    Wgx = g_ref[R_WGX:R_WGX + HZ * F, :]
    Wgh = g_ref[R_WGH:R_WGH + H, :]
    bg = g_ref[R_BG:R_BG + 1, :]
    contexts = (jnp.dot(xf, Wgx, preferred_element_type=f32)
                + jnp.dot(ht, Wgh, preferred_element_type=f32)
                + bg)                                          # (Bp, (HZ+1)*HD)
    ca = contexts[:, HZ * HD:]                                 # last context (no relu)
    C = jnp.maximum(contexts[:, :HZ * HD], 0.0)                # (Bp, HZ*HD)

    # local_mlp for all horizons at once; weights padded to 128 output lanes so
    # the store below is a single unmasked lane-dense (Bp, 128) write.
    Wlx = w_ref[R_WLX:R_WLX + HZ * F, :]
    Wlc = w_ref[R_WLC:R_WLC + HZ * HD, :]
    Wla = w_ref[R_WLA:R_WLA + HD, :]
    bl = w_ref[R_BL:R_BL + 1, :]
    out_ref[...] = (jnp.dot(xf, Wlx, preferred_element_type=f32)
                    + jnp.dot(C, Wlc, preferred_element_type=f32)
                    + jnp.dot(ca, Wla, preferred_element_type=f32)
                    + bl)


# -----------------------------------------------------------------------------
# Parameter init (deterministic, mirrors the nn.Module shapes)
# -----------------------------------------------------------------------------
def init_params(key):
    ks = list(jax.random.split(key, 32))

    def u(k, shape, fan_in):
        bound = 1.0 / float(np.sqrt(fan_in))
        return jax.random.uniform(k, shape, jnp.float32, -bound, bound)

    p = {}
    p["We"] = u(ks[0], (1, EMBEDDING_SIZE), 1)        # Linear(1, E), transposed
    p["be"] = u(ks[1], (EMBEDDING_SIZE,), 1)

    in_sizes = [INPUT_SIZE + EMBEDDING_SIZE] + [ENC_HIDDEN] * (ENC_LAYERS - 1)
    ki = 2
    for l, in_l in enumerate(in_sizes):
        p[f"Wih{l}"] = u(ks[ki], (in_l, 4 * ENC_HIDDEN), ENC_HIDDEN); ki += 1
        p[f"Whh{l}"] = u(ks[ki], (ENC_HIDDEN, 4 * ENC_HIDDEN), ENC_HIDDEN); ki += 1
        p[f"bih{l}"] = u(ks[ki], (4 * ENC_HIDDEN,), ENC_HIDDEN); ki += 1
        p[f"bhh{l}"] = u(ks[ki], (4 * ENC_HIDDEN,), ENC_HIDDEN); ki += 1

    gin = OUTPUT_HORIZON * (ENC_HIDDEN + INPUT_SIZE)
    gout = (OUTPUT_HORIZON + 1) * DEC_HIDDEN
    p["Wg"] = u(ks[ki], (gin, gout), gin); ki += 1
    p["bg"] = u(ks[ki], (gout,), gin); ki += 1
    lin = 2 * DEC_HIDDEN + INPUT_SIZE
    p["Wl"] = u(ks[ki], (lin, NUM_QUANTILES), lin); ki += 1
    p["bl"] = u(ks[ki], (NUM_QUANTILES,), lin); ki += 1
    return p


# -----------------------------------------------------------------------------
# One-time parameter packing (hoisted out of the per-call wrapper)
# -----------------------------------------------------------------------------
def prepare_packed_params(p):
    f32 = jnp.float32

    # layer-0: fold the embedding Linear into the input projection
    Wih0x = p["Wih0"][:F, :]                                   # (F, 4H)
    Wih0e = p["Wih0"][F:, :]                                   # (E, 4H)
    Wy = p["We"] @ Wih0e                                       # (1, 4H)
    b0p = p["be"][None, :] @ Wih0e + (p["bih0"] + p["bhh0"])[None, :]
    b1 = (p["bih1"] + p["bhh1"])[None, :]
    b2 = (p["bih2"] + p["bhh2"])[None, :]

    # global_mlp rows split per-horizon [xf | ht] block
    FH = F + H
    Wg_blocks = p["Wg"].reshape(HZ, FH, GOUT)
    Wgx = Wg_blocks[:, :F, :].reshape(HZ * F, GOUT)
    Wgh = Wg_blocks[:, F:, :].sum(axis=0)                      # ht reused per block
    bg = p["bg"][None, :]

    # local_mlp rows [xfi | ci | ca] -> block-diagonal / replicated, col-padded
    Wlx = p["Wl"][:F, :]
    Wlc = p["Wl"][F:F + HD, :]
    Wla = p["Wl"][F + HD:, :]
    eye_h = jnp.eye(HZ, dtype=f32)
    Wlx_bd = jnp.kron(eye_h, Wlx)                              # (HZ*F, HZ*Q)
    Wlc_bd = jnp.kron(eye_h, Wlc)                              # (HZ*HD, HZ*Q)
    Wla_rep = jnp.tile(Wla, (1, HZ))                           # (HD, HZ*Q)
    bl_rep = jnp.tile(p["bl"], HZ)[None, :]                    # (1, HZ*Q)

    def pad_cols(a):
        return jnp.pad(a, ((0, 0), (0, OUT_PAD - a.shape[1])))

    slab_w = jnp.concatenate([
        Wih0x, Wy, b0p, b1, b2,
        p["Whh0"], p["Wih1"], p["Whh1"], p["Wih2"], p["Whh2"],
        pad_cols(Wlx_bd), pad_cols(Wlc_bd), pad_cols(Wla_rep), pad_cols(bl_rep),
    ], axis=0).astype(f32)
    assert slab_w.shape == (N_ROWS_W, H4)

    slab_g = jnp.concatenate([Wgx, Wgh, bg], axis=0).astype(f32)
    assert slab_g.shape == (N_ROWS_G, GOUT)
    return {"w": slab_w, "g": slab_g}


# -----------------------------------------------------------------------------
# Wrapper: minimal input shaping + pallas_call
# -----------------------------------------------------------------------------
def mqrnn_forward(X, y, Xf, packed):
    B, T, _ = X.shape
    assert B <= BP

    # time-major, batch padded to BP sublanes (aligned per-step slices)
    X_tm = jnp.transpose(X, (1, 0, 2)).astype(jnp.float32)        # (T, B, F)
    y_tm = jnp.transpose(y, (1, 0))[:, :, None].astype(jnp.float32)
    X_flat = jnp.pad(X_tm, ((0, 0), (0, BP - B), (0, 0))).reshape(T * BP, F)
    y_flat = jnp.pad(y_tm, ((0, 0), (0, BP - B), (0, 0))).reshape(T * BP, 1)
    xf_flat = jnp.pad(Xf.reshape(B, HZ * F).astype(jnp.float32),
                      ((0, BP - B), (0, 0)))                      # (BP, HZ*F)

    vmem = pl.BlockSpec(memory_space=pltpu.MemorySpace.VMEM)
    out = pl.pallas_call(
        mqrnn_kernel,
        out_shape=jax.ShapeDtypeStruct((BP, OUT_PAD), jnp.float32),
        in_specs=[vmem] * 5,
        out_specs=vmem,
    )(X_flat, y_flat, xf_flat, packed["w"], packed["g"])
    return out[:B, :HZ * Q].reshape(B, HZ, Q)


# -----------------------------------------------------------------------------
# Pure-JAX reference (mirrors the PyTorch forward exactly)
# -----------------------------------------------------------------------------
def reference_forward(X, y, Xf, p):
    B, T, Fin = X.shape
    horizon = Xf.shape[1]

    emb = y[:, :, None] * p["We"][0][None, None, :] + p["be"]     # (B, T, E)
    x = jnp.concatenate([X, emb], axis=2)                         # (B, T, F+E)

    def lstm_layer(x_seq, Wih, Whh, bih, bhh):
        def step(carry, x_t):
            h, c = carry
            g = x_t @ Wih + h @ Whh + bih + bhh
            i = jax.nn.sigmoid(g[:, :H])
            f = jax.nn.sigmoid(g[:, H:2 * H])
            gg = jnp.tanh(g[:, 2 * H:3 * H])
            o = jax.nn.sigmoid(g[:, 3 * H:4 * H])
            c = f * c + i * gg
            h = o * jnp.tanh(c)
            return (h, c), h
        z = jnp.zeros((B, H), jnp.float32)
        (h, c), hs = lax.scan(step, (z, z), jnp.swapaxes(x_seq, 0, 1))
        return jnp.swapaxes(hs, 0, 1), h

    seq = x
    h_last = None
    for l in range(ENC_LAYERS):
        seq, h_last = lstm_layer(seq, p[f"Wih{l}"], p[f"Whh{l}"],
                                 p[f"bih{l}"], p[f"bhh{l}"])
    ht = jnp.maximum(h_last, 0.0)

    ht_b = jnp.broadcast_to(ht[:, None, :], (B, horizon, H))
    inp = jnp.concatenate([Xf, ht_b], axis=2).reshape(B, -1)
    contexts = (inp @ p["Wg"] + p["bg"]).reshape(B, horizon + 1, HD)
    ca = contexts[:, -1, :]
    C = jnp.maximum(contexts[:, :-1, :], 0.0)
    ys = []
    for i in range(horizon):
        inp_i = jnp.concatenate([Xf[:, i, :], C[:, i, :], ca], axis=1)
        ys.append(inp_i @ p["Wl"] + p["bl"])
    return jnp.stack(ys, axis=1)                                  # (B, horizon, Q)


# -----------------------------------------------------------------------------
if __name__ == "__main__":
    key = jax.random.PRNGKey(0)
    kX, ky, kXf, kp = jax.random.split(key, 4)

    X = jax.random.normal(kX, (BATCH, SEQ, INPUT_SIZE), jnp.float32)
    y = jax.random.normal(ky, (BATCH, SEQ), jnp.float32)
    Xf = jax.random.normal(kXf, (BATCH, OUTPUT_HORIZON, INPUT_SIZE), jnp.float32)
    params = init_params(kp)

    packed = jax.block_until_ready(prepare_packed_params(params))  # one-time prep

    ypred = mqrnn_forward(X, y, Xf, packed)
    ypred = jax.block_until_ready(ypred)

    yref = jax.block_until_ready(reference_forward(X, y, Xf, params))
    np.testing.assert_allclose(np.asarray(ypred), np.asarray(yref),
                               rtol=1e-4, atol=1e-4)
    assert ypred.shape == (BATCH, OUTPUT_HORIZON, NUM_QUANTILES)
    print("KERNEL_OK")
</pallas_src>

<mosaic_0001>
module attributes {stable_mosaic.version = 11 : i64} {
  func.func @mqrnn_kernel(%arg0: memref<64x4xf32, #tpu.memory_space<vmem>>, %arg1: memref<64x1xf32, #tpu.memory_space<vmem>>, %arg2: memref<8x16xf32, #tpu.memory_space<vmem>>, %arg3: memref<345x128xf32, #tpu.memory_space<vmem>>, %arg4: memref<49x160xf32, #tpu.memory_space<vmem>>, %arg5: memref<8x128xf32, #tpu.memory_space<vmem>>) attributes {dimension_semantics = [], scalar_prefetch = 0 : i64, scratch_operands = 0 : i64, tpu.core_type = #tpu.core_type<tc>} {
    %c0 = arith.constant 0 : index
    %c0_0 = arith.constant 0 : index
    %0 = vector.load %arg3[%c0, %c0_0] : memref<345x128xf32, #tpu.memory_space<vmem>>, vector<4x128xf32>
    %c4 = arith.constant 4 : index
    %c0_1 = arith.constant 0 : index
    %1 = vector.load %arg3[%c4, %c0_1] : memref<345x128xf32, #tpu.memory_space<vmem>>, vector<1x128xf32>
    %c5 = arith.constant 5 : index
    %c0_2 = arith.constant 0 : index
    %2 = vector.load %arg3[%c5, %c0_2] : memref<345x128xf32, #tpu.memory_space<vmem>>, vector<1x128xf32>
    %c0_3 = arith.constant 0 : index
    %c0_4 = arith.constant 0 : index
    %3 = vector.load %arg0[%c0_3, %c0_4] : memref<64x4xf32, #tpu.memory_space<vmem>>, vector<64x4xf32>
    %cst = arith.constant dense<0.000000e+00> : vector<64x128xf32>
    %4 = tpu.matmul %3, %0, %cst {dimension_numbers = #tpu.dot_dimension_numbers<[1], [0], [0], [1], [0, 0, 1, 1], [], []>} : vector<64x4xf32>, vector<4x128xf32>, vector<64x128xf32> -> vector<64x128xf32>
    %c0_5 = arith.constant 0 : index
    %c0_6 = arith.constant 0 : index
    %5 = vector.load %arg1[%c0_5, %c0_6] : memref<64x1xf32, #tpu.memory_space<vmem>>, vector<64x1xf32>
    %6 = vector.broadcast %5 : vector<64x1xf32> to vector<64x128xf32>
    %7 = vector.broadcast %1 : vector<1x128xf32> to vector<64x128xf32>
    %8 = arith.mulf %6, %7 : vector<64x128xf32>
    %9 = arith.addf %4, %8 : vector<64x128xf32>
    %10 = vector.broadcast %2 : vector<1x128xf32> to vector<64x128xf32>
    %11 = arith.addf %9, %10 : vector<64x128xf32>
    %c8 = arith.constant 8 : index
    %c0_7 = arith.constant 0 : index
    %12 = vector.load %arg3[%c8, %c0_7] : memref<345x128xf32, #tpu.memory_space<vmem>>, vector<32x128xf32>
    %c40 = arith.constant 40 : index
    %c0_8 = arith.constant 0 : index
    %13 = vector.load %arg3[%c40, %c0_8] : memref<345x128xf32, #tpu.memory_space<vmem>>, vector<32x128xf32>
    %c72 = arith.constant 72 : index
    %c0_9 = arith.constant 0 : index
    %14 = vector.load %arg3[%c72, %c0_9] : memref<345x128xf32, #tpu.memory_space<vmem>>, vector<32x128xf32>
    %c104 = arith.constant 104 : index
    %c0_10 = arith.constant 0 : index
    %15 = vector.load %arg3[%c104, %c0_10] : memref<345x128xf32, #tpu.memory_space<vmem>>, vector<32x128xf32>
    %c136 = arith.constant 136 : index
    %c0_11 = arith.constant 0 : index
    %16 = vector.load %arg3[%c136, %c0_11] : memref<345x128xf32, #tpu.memory_space<vmem>>, vector<32x128xf32>
    %c6 = arith.constant 6 : index
    %c0_12 = arith.constant 0 : index
    %17 = vector.load %arg3[%c6, %c0_12] : memref<345x128xf32, #tpu.memory_space<vmem>>, vector<1x128xf32>
    %18 = vector.shape_cast %17 : vector<1x128xf32> to vector<1x128xf32>
    %19 = vector.broadcast %18 : vector<1x128xf32> to vector<8x128xf32>
    %c7 = arith.constant 7 : index
    %c0_13 = arith.constant 0 : index
    %20 = vector.load %arg3[%c7, %c0_13] : memref<345x128xf32, #tpu.memory_space<vmem>>, vector<1x128xf32>
    %21 = vector.shape_cast %20 : vector<1x128xf32> to vector<1x128xf32>
    %22 = vector.broadcast %21 : vector<1x128xf32> to vector<8x128xf32>
    %cst_14 = arith.constant 0.000000e+00 : f32
    %23 = vector.broadcast %cst_14 : f32 to vector<8x32xf32>
    %24 = vector.extract_strided_slice %11 {offsets = [0, 0], sizes = [8, 128], strides = [1, 1]} : vector<64x128xf32> to vector<8x128xf32>
    %cst_15 = arith.constant dense<0.000000e+00> : vector<8x128xf32>
    %25 = tpu.matmul %23, %12, %cst_15 {dimension_numbers = #tpu.dot_dimension_numbers<[1], [0], [0], [1], [0, 0, 1, 1], [], []>} : vector<8x32xf32>, vector<32x128xf32>, vector<8x128xf32> -> vector<8x128xf32>
    %26 = arith.addf %24, %25 : vector<8x128xf32>
    %cst_16 = arith.constant 5.000000e-01 : f32
    %27 = vector.broadcast %cst_16 : f32 to vector<8x128xf32>
    %28 = arith.mulf %27, %26 : vector<8x128xf32>
    %29 = math.tanh %28 : vector<8x128xf32>
    %cst_17 = arith.constant 5.000000e-01 : f32
    %30 = vector.broadcast %cst_17 : f32 to vector<8x128xf32>
    %31 = arith.mulf %30, %29 : vector<8x128xf32>
    %cst_18 = arith.constant 5.000000e-01 : f32
    %32 = vector.broadcast %cst_18 : f32 to vector<8x128xf32>
    %33 = arith.addf %31, %32 : vector<8x128xf32>
    %34 = math.tanh %26 : vector<8x128xf32>
    %35 = vector.extract_strided_slice %33 {offsets = [0, 0], sizes = [8, 32], strides = [1, 1]} : vector<8x128xf32> to vector<8x32xf32>
    %36 = vector.extract_strided_slice %33 {offsets = [0, 32], sizes = [8, 32], strides = [1, 1]} : vector<8x128xf32> to vector<8x32xf32>
    %37 = vector.extract_strided_slice %34 {offsets = [0, 64], sizes = [8, 32], strides = [1, 1]} : vector<8x128xf32> to vector<8x32xf32>
    %38 = vector.extract_strided_slice %33 {offsets = [0, 96], sizes = [8, 32], strides = [1, 1]} : vector<8x128xf32> to vector<8x32xf32>
    %39 = arith.mulf %36, %23 : vector<8x32xf32>
    %40 = arith.mulf %35, %37 : vector<8x32xf32>
    %41 = arith.addf %39, %40 : vector<8x32xf32>
    %42 = math.tanh %41 : vector<8x32xf32>
    %43 = arith.mulf %38, %42 : vector<8x32xf32>
    %cst_19 = arith.constant dense<0.000000e+00> : vector<8x128xf32>
    %44 = tpu.matmul %43, %13, %cst_19 {dimension_numbers = #tpu.dot_dimension_numbers<[1], [0], [0], [1], [0, 0, 1, 1], [], []>} : vector<8x32xf32>, vector<32x128xf32>, vector<8x128xf32> -> vector<8x128xf32>
    %cst_20 = arith.constant dense<0.000000e+00> : vector<8x128xf32>
    %45 = tpu.matmul %23, %14, %cst_20 {dimension_numbers = #tpu.dot_dimension_numbers<[1], [0], [0], [1], [0, 0, 1, 1], [], []>} : vector<8x32xf32>, vector<32x128xf32>, vector<8x128xf32> -> vector<8x128xf32>
    %46 = arith.addf %44, %45 : vector<8x128xf32>
    %47 = arith.addf %46, %19 : vector<8x128xf32>
    %cst_21 = arith.constant 5.000000e-01 : f32
    %48 = vector.broadcast %cst_21 : f32 to vector<8x128xf32>
    %49 = arith.mulf %48, %47 : vector<8x128xf32>
    %50 = math.tanh %49 : vector<8x128xf32>
    %cst_22 = arith.constant 5.000000e-01 : f32
    %51 = vector.broadcast %cst_22 : f32 to vector<8x128xf32>
    %52 = arith.mulf %51, %50 : vector<8x128xf32>
    %cst_23 = arith.constant 5.000000e-01 : f32
    %53 = vector.broadcast %cst_23 : f32 to vector<8x128xf32>
    %54 = arith.addf %52, %53 : vector<8x128xf32>
    %55 = math.tanh %47 : vector<8x128xf32>
    %56 = vector.extract_strided_slice %54 {offsets = [0, 0], sizes = [8, 32], strides = [1, 1]} : vector<8x128xf32> to vector<8x32xf32>
    %57 = vector.extract_strided_slice %54 {offsets = [0, 32], sizes = [8, 32], strides = [1, 1]} : vector<8x128xf32> to vector<8x32xf32>
    %58 = vector.extract_strided_slice %55 {offsets = [0, 64], sizes = [8, 32], strides = [1, 1]} : vector<8x128xf32> to vector<8x32xf32>
    %59 = vector.extract_strided_slice %54 {offsets = [0, 96], sizes = [8, 32], strides = [1, 1]} : vector<8x128xf32> to vector<8x32xf32>
    %60 = arith.mulf %57, %23 : vector<8x32xf32>
    %61 = arith.mulf %56, %58 : vector<8x32xf32>
    %62 = arith.addf %60, %61 : vector<8x32xf32>
    %63 = math.tanh %62 : vector<8x32xf32>
    %64 = arith.mulf %59, %63 : vector<8x32xf32>
    %cst_24 = arith.constant dense<0.000000e+00> : vector<8x128xf32>
    %65 = tpu.matmul %64, %15, %cst_24 {dimension_numbers = #tpu.dot_dimension_numbers<[1], [0], [0], [1], [0, 0, 1, 1], [], []>} : vector<8x32xf32>, vector<32x128xf32>, vector<8x128xf32> -> vector<8x128xf32>
    %cst_25 = arith.constant dense<0.000000e+00> : vector<8x128xf32>
    %66 = tpu.matmul %23, %16, %cst_25 {dimension_numbers = #tpu.dot_dimension_numbers<[1], [0], [0], [1], [0, 0, 1, 1], [], []>} : vector<8x32xf32>, vector<32x128xf32>, vector<8x128xf32> -> vector<8x128xf32>
    %67 = arith.addf %65, %66 : vector<8x128xf32>
    %68 = arith.addf %67, %22 : vector<8x128xf32>
    %cst_26 = arith.constant 5.000000e-01 : f32
    %69 = vector.broadcast %cst_26 : f32 to vector<8x128xf32>
    %70 = arith.mulf %69, %68 : vector<8x128xf32>
    %71 = math.tanh %70 : vector<8x128xf32>
    %cst_27 = arith.constant 5.000000e-01 : f32
    %72 = vector.broadcast %cst_27 : f32 to vector<8x128xf32>
    %73 = arith.mulf %72, %71 : vector<8x128xf32>
    %cst_28 = arith.constant 5.000000e-01 : f32
    %74 = vector.broadcast %cst_28 : f32 to vector<8x128xf32>
    %75 = arith.addf %73, %74 : vector<8x128xf32>
    %76 = math.tanh %68 : vector<8x128xf32>
    %77 = vector.extract_strided_slice %75 {offsets = [0, 0], sizes = [8, 32], strides = [1, 1]} : vector<8x128xf32> to vector<8x32xf32>
    %78 = vector.extract_strided_slice %75 {offsets = [0, 32], sizes = [8, 32], strides = [1, 1]} : vector<8x128xf32> to vector<8x32xf32>
    %79 = vector.extract_strided_slice %76 {offsets = [0, 64], sizes = [8, 32], strides = [1, 1]} : vector<8x128xf32> to vector<8x32xf32>
    %80 = vector.extract_strided_slice %75 {offsets = [0, 96], sizes = [8, 32], strides = [1, 1]} : vector<8x128xf32> to vector<8x32xf32>
    %81 = arith.mulf %78, %23 : vector<8x32xf32>
    %82 = arith.mulf %77, %79 : vector<8x32xf32>
    %83 = arith.addf %81, %82 : vector<8x32xf32>
    %84 = math.tanh %83 : vector<8x32xf32>
    %85 = arith.mulf %80, %84 : vector<8x32xf32>
    %86 = vector.extract_strided_slice %11 {offsets = [8, 0], sizes = [8, 128], strides = [1, 1]} : vector<64x128xf32> to vector<8x128xf32>
    %cst_29 = arith.constant dense<0.000000e+00> : vector<8x128xf32>
    %87 = tpu.matmul %43, %12, %cst_29 {dimension_numbers = #tpu.dot_dimension_numbers<[1], [0], [0], [1], [0, 0, 1, 1], [], []>} : vector<8x32xf32>, vector<32x128xf32>, vector<8x128xf32> -> vector<8x128xf32>
    %88 = arith.addf %86, %87 : vector<8x128xf32>
    %cst_30 = arith.constant 5.000000e-01 : f32
    %89 = vector.broadcast %cst_30 : f32 to vector<8x128xf32>
    %90 = arith.mulf %89, %88 : vector<8x128xf32>
    %91 = math.tanh %90 : vector<8x128xf32>
    %cst_31 = arith.constant 5.000000e-01 : f32
    %92 = vector.broadcast %cst_31 : f32 to vector<8x128xf32>
    %93 = arith.mulf %92, %91 : vector<8x128xf32>
    %cst_32 = arith.constant 5.000000e-01 : f32
    %94 = vector.broadcast %cst_32 : f32 to vector<8x128xf32>
    %95 = arith.addf %93, %94 : vector<8x128xf32>
    %96 = math.tanh %88 : vector<8x128xf32>
    %97 = vector.extract_strided_slice %95 {offsets = [0, 0], sizes = [8, 32], strides = [1, 1]} : vector<8x128xf32> to vector<8x32xf32>
    %98 = vector.extract_strided_slice %95 {offsets = [0, 32], sizes = [8, 32], strides = [1, 1]} : vector<8x128xf32> to vector<8x32xf32>
    %99 = vector.extract_strided_slice %96 {offsets = [0, 64], sizes = [8, 32], strides = [1, 1]} : vector<8x128xf32> to vector<8x32xf32>
    %100 = vector.extract_strided_slice %95 {offsets = [0, 96], sizes = [8, 32], strides = [1, 1]} : vector<8x128xf32> to vector<8x32xf32>
    %101 = arith.mulf %98, %41 : vector<8x32xf32>
    %102 = arith.mulf %97, %99 : vector<8x32xf32>
    %103 = arith.addf %101, %102 : vector<8x32xf32>
    %104 = math.tanh %103 : vector<8x32xf32>
    %105 = arith.mulf %100, %104 : vector<8x32xf32>
    %cst_33 = arith.constant dense<0.000000e+00> : vector<8x128xf32>
    %106 = tpu.matmul %105, %13, %cst_33 {dimension_numbers = #tpu.dot_dimension_numbers<[1], [0], [0], [1], [0, 0, 1, 1], [], []>} : vector<8x32xf32>, vector<32x128xf32>, vector<8x128xf32> -> vector<8x128xf32>
    %cst_34 = arith.constant dense<0.000000e+00> : vector<8x128xf32>
    %107 = tpu.matmul %64, %14, %cst_34 {dimension_numbers = #tpu.dot_dimension_numbers<[1], [0], [0], [1], [0, 0, 1, 1], [], []>} : vector<8x32xf32>, vector<32x128xf32>, vector<8x128xf32> -> vector<8x128xf32>
    %108 = arith.addf %106, %107 : vector<8x128xf32>
    %109 = arith.addf %108, %19 : vector<8x128xf32>
    %cst_35 = arith.constant 5.000000e-01 : f32
    %110 = vector.broadcast %cst_35 : f32 to vector<8x128xf32>
    %111 = arith.mulf %110, %109 : vector<8x128xf32>
    %112 = math.tanh %111 : vector<8x128xf32>
    %cst_36 = arith.constant 5.000000e-01 : f32
    %113 = vector.broadcast %cst_36 : f32 to vector<8x128xf32>
    %114 = arith.mulf %113, %112 : vector<8x128xf32>
    %cst_37 = arith.constant 5.000000e-01 : f32
    %115 = vector.broadcast %cst_37 : f32 to vector<8x128xf32>
    %116 = arith.addf %114, %115 : vector<8x128xf32>
    %117 = math.tanh %109 : vector<8x128xf32>
    %118 = vector.extract_strided_slice %116 {offsets = [0, 0], sizes = [8, 32], strides = [1, 1]} : vector<8x128xf32> to vector<8x32xf32>
    %119 = vector.extract_strided_slice %116 {offsets = [0, 32], sizes = [8, 32], strides = [1, 1]} : vector<8x128xf32> to vector<8x32xf32>
    %120 = vector.extract_strided_slice %117 {offsets = [0, 64], sizes = [8, 32], strides = [1, 1]} : vector<8x128xf32> to vector<8x32xf32>
    %121 = vector.extract_strided_slice %116 {offsets = [0, 96], sizes = [8, 32], strides = [1, 1]} : vector<8x128xf32> to vector<8x32xf32>
    %122 = arith.mulf %119, %62 : vector<8x32xf32>
    %123 = arith.mulf %118, %120 : vector<8x32xf32>
    %124 = arith.addf %122, %123 : vector<8x32xf32>
    %125 = math.tanh %124 : vector<8x32xf32>
    %126 = arith.mulf %121, %125 : vector<8x32xf32>
    %cst_38 = arith.constant dense<0.000000e+00> : vector<8x128xf32>
    %127 = tpu.matmul %126, %15, %cst_38 {dimension_numbers = #tpu.dot_dimension_numbers<[1], [0], [0], [1], [0, 0, 1, 1], [], []>} : vector<8x32xf32>, vector<32x128xf32>, vector<8x128xf32> -> vector<8x128xf32>
    %cst_39 = arith.constant dense<0.000000e+00> : vector<8x128xf32>
    %128 = tpu.matmul %85, %16, %cst_39 {dimension_numbers = #tpu.dot_dimension_numbers<[1], [0], [0], [1], [0, 0, 1, 1], [], []>} : vector<8x32xf32>, vector<32x128xf32>, vector<8x128xf32> -> vector<8x128xf32>
    %129 = arith.addf %127, %128 : vector<8x128xf32>
    %130 = arith.addf %129, %22 : vector<8x128xf32>
    %cst_40 = arith.constant 5.000000e-01 : f32
    %131 = vector.broadcast %cst_40 : f32 to vector<8x128xf32>
    %132 = arith.mulf %131, %130 : vector<8x128xf32>
    %133 = math.tanh %132 : vector<8x128xf32>
    %cst_41 = arith.constant 5.000000e-01 : f32
    %134 = vector.broadcast %cst_41 : f32 to vector<8x128xf32>
    %135 = arith.mulf %134, %133 : vector<8x128xf32>
    %cst_42 = arith.constant 5.000000e-01 : f32
    %136 = vector.broadcast %cst_42 : f32 to vector<8x128xf32>
    %137 = arith.addf %135, %136 : vector<8x128xf32>
    %138 = math.tanh %130 : vector<8x128xf32>
    %139 = vector.extract_strided_slice %137 {offsets = [0, 0], sizes = [8, 32], strides = [1, 1]} : vector<8x128xf32> to vector<8x32xf32>
    %140 = vector.extract_strided_slice %137 {offsets = [0, 32], sizes = [8, 32], strides = [1, 1]} : vector<8x128xf32> to vector<8x32xf32>
    %141 = vector.extract_strided_slice %138 {offsets = [0, 64], sizes = [8, 32], strides = [1, 1]} : vector<8x128xf32> to vector<8x32xf32>
    %142 = vector.extract_strided_slice %137 {offsets = [0, 96], sizes = [8, 32], strides = [1, 1]} : vector<8x128xf32> to vector<8x32xf32>
    %143 = arith.mulf %140, %83 : vector<8x32xf32>
    %144 = arith.mulf %139, %141 : vector<8x32xf32>
    %145 = arith.addf %143, %144 : vector<8x32xf32>
    %146 = math.tanh %145 : vector<8x32xf32>
    %147 = arith.mulf %142, %146 : vector<8x32xf32>
    %148 = vector.extract_strided_slice %11 {offsets = [16, 0], sizes = [8, 128], strides = [1, 1]} : vector<64x128xf32> to vector<8x128xf32>
    %cst_43 = arith.constant dense<0.000000e+00> : vector<8x128xf32>
    %149 = tpu.matmul %105, %12, %cst_43 {dimension_numbers = #tpu.dot_dimension_numbers<[1], [0], [0], [1], [0, 0, 1, 1], [], []>} : vector<8x32xf32>, vector<32x128xf32>, vector<8x128xf32> -> vector<8x128xf32>
    %150 = arith.addf %148, %149 : vector<8x128xf32>
    %cst_44 = arith.constant 5.000000e-01 : f32
    %151 = vector.broadcast %cst_44 : f32 to vector<8x128xf32>
    %152 = arith.mulf %151, %150 : vector<8x128xf32>
    %153 = math.tanh %152 : vector<8x128xf32>
    %cst_45 = arith.constant 5.000000e-01 : f32
    %154 = vector.broadcast %cst_45 : f32 to vector<8x128xf32>
    %155 = arith.mulf %154, %153 : vector<8x128xf32>
    %cst_46 = arith.constant 5.000000e-01 : f32
    %156 = vector.broadcast %cst_46 : f32 to vector<8x128xf32>
    %157 = arith.addf %155, %156 : vector<8x128xf32>
    %158 = math.tanh %150 : vector<8x128xf32>
    %159 = vector.extract_strided_slice %157 {offsets = [0, 0], sizes = [8, 32], strides = [1, 1]} : vector<8x128xf32> to vector<8x32xf32>
    %160 = vector.extract_strided_slice %157 {offsets = [0, 32], sizes = [8, 32], strides = [1, 1]} : vector<8x128xf32> to vector<8x32xf32>
    %161 = vector.extract_strided_slice %158 {offsets = [0, 64], sizes = [8, 32], strides = [1, 1]} : vector<8x128xf32> to vector<8x32xf32>
    %162 = vector.extract_strided_slice %157 {offsets = [0, 96], sizes = [8, 32], strides = [1, 1]} : vector<8x128xf32> to vector<8x32xf32>
    %163 = arith.mulf %160, %103 : vector<8x32xf32>
    %164 = arith.mulf %159, %161 : vector<8x32xf32>
    %165 = arith.addf %163, %164 : vector<8x32xf32>
    %166 = math.tanh %165 : vector<8x32xf32>
    %167 = arith.mulf %162, %166 : vector<8x32xf32>
    %cst_47 = arith.constant dense<0.000000e+00> : vector<8x128xf32>
    %168 = tpu.matmul %167, %13, %cst_47 {dimension_numbers = #tpu.dot_dimension_numbers<[1], [0], [0], [1], [0, 0, 1, 1], [], []>} : vector<8x32xf32>, vector<32x128xf32>, vector<8x128xf32> -> vector<8x128xf32>
    %cst_48 = arith.constant dense<0.000000e+00> : vector<8x128xf32>
    %169 = tpu.matmul %126, %14, %cst_48 {dimension_numbers = #tpu.dot_dimension_numbers<[1], [0], [0], [1], [0, 0, 1, 1], [], []>} : vector<8x32xf32>, vector<32x128xf32>, vector<8x128xf32> -> vector<8x128xf32>
    %170 = arith.addf %168, %169 : vector<8x128xf32>
    %171 = arith.addf %170, %19 : vector<8x128xf32>
    %cst_49 = arith.constant 5.000000e-01 : f32
    %172 = vector.broadcast %cst_49 : f32 to vector<8x128xf32>
    %173 = arith.mulf %172, %171 : vector<8x128xf32>
    %174 = math.tanh %173 : vector<8x128xf32>
    %cst_50 = arith.constant 5.000000e-01 : f32
    %175 = vector.broadcast %cst_50 : f32 to vector<8x128xf32>
    %176 = arith.mulf %175, %174 : vector<8x128xf32>
    %cst_51 = arith.constant 5.000000e-01 : f32
    %177 = vector.broadcast %cst_51 : f32 to vector<8x128xf32>
    %178 = arith.addf %176, %177 : vector<8x128xf32>
    %179 = math.tanh %171 : vector<8x128xf32>
    %180 = vector.extract_strided_slice %178 {offsets = [0, 0], sizes = [8, 32], strides = [1, 1]} : vector<8x128xf32> to vector<8x32xf32>
    %181 = vector.extract_strided_slice %178 {offsets = [0, 32], sizes = [8, 32], strides = [1, 1]} : vector<8x128xf32> to vector<8x32xf32>
    %182 = vector.extract_strided_slice %179 {offsets = [0, 64], sizes = [8, 32], strides = [1, 1]} : vector<8x128xf32> to vector<8x32xf32>
    %183 = vector.extract_strided_slice %178 {offsets = [0, 96], sizes = [8, 32], strides = [1, 1]} : vector<8x128xf32> to vector<8x32xf32>
    %184 = arith.mulf %181, %124 : vector<8x32xf32>
    %185 = arith.mulf %180, %182 : vector<8x32xf32>
    %186 = arith.addf %184, %185 : vector<8x32xf32>
    %187 = math.tanh %186 : vector<8x32xf32>
    %188 = arith.mulf %183, %187 : vector<8x32xf32>
    %cst_52 = arith.constant dense<0.000000e+00> : vector<8x128xf32>
    %189 = tpu.matmul %188, %15, %cst_52 {dimension_numbers = #tpu.dot_dimension_numbers<[1], [0], [0], [1], [0, 0, 1, 1], [], []>} : vector<8x32xf32>, vector<32x128xf32>, vector<8x128xf32> -> vector<8x128xf32>
    %cst_53 = arith.constant dense<0.000000e+00> : vector<8x128xf32>
    %190 = tpu.matmul %147, %16, %cst_53 {dimension_numbers = #tpu.dot_dimension_numbers<[1], [0], [0], [1], [0, 0, 1, 1], [], []>} : vector<8x32xf32>, vector<32x128xf32>, vector<8x128xf32> -> vector<8x128xf32>
    %191 = arith.addf %189, %190 : vector<8x128xf32>
    %192 = arith.addf %191, %22 : vector<8x128xf32>
    %cst_54 = arith.constant 5.000000e-01 : f32
    %193 = vector.broadcast %cst_54 : f32 to vector<8x128xf32>
    %194 = arith.mulf %193, %192 : vector<8x128xf32>
    %195 = math.tanh %194 : vector<8x128xf32>
    %cst_55 = arith.constant 5.000000e-01 : f32
    %196 = vector.broadcast %cst_55 : f32 to vector<8x128xf32>
    %197 = arith.mulf %196, %195 : vector<8x128xf32>
    %cst_56 = arith.constant 5.000000e-01 : f32
    %198 = vector.broadcast %cst_56 : f32 to vector<8x128xf32>
    %199 = arith.addf %197, %198 : vector<8x128xf32>
    %200 = math.tanh %192 : vector<8x128xf32>
    %201 = vector.extract_strided_slice %199 {offsets = [0, 0], sizes = [8, 32], strides = [1, 1]} : vector<8x128xf32> to vector<8x32xf32>
    %202 = vector.extract_strided_slice %199 {offsets = [0, 32], sizes = [8, 32], strides = [1, 1]} : vector<8x128xf32> to vector<8x32xf32>
    %203 = vector.extract_strided_slice %200 {offsets = [0, 64], sizes = [8, 32], strides = [1, 1]} : vector<8x128xf32> to vector<8x32xf32>
    %204 = vector.extract_strided_slice %199 {offsets = [0, 96], sizes = [8, 32], strides = [1, 1]} : vector<8x128xf32> to vector<8x32xf32>
    %205 = arith.mulf %202, %145 : vector<8x32xf32>
    %206 = arith.mulf %201, %203 : vector<8x32xf32>
    %207 = arith.addf %205, %206 : vector<8x32xf32>
    %208 = math.tanh %207 : vector<8x32xf32>
    %209 = arith.mulf %204, %208 : vector<8x32xf32>
    %210 = vector.extract_strided_slice %11 {offsets = [24, 0], sizes = [8, 128], strides = [1, 1]} : vector<64x128xf32> to vector<8x128xf32>
    %cst_57 = arith.constant dense<0.000000e+00> : vector<8x128xf32>
    %211 = tpu.matmul %167, %12, %cst_57 {dimension_numbers = #tpu.dot_dimension_numbers<[1], [0], [0], [1], [0, 0, 1, 1], [], []>} : vector<8x32xf32>, vector<32x128xf32>, vector<8x128xf32> -> vector<8x128xf32>
    %212 = arith.addf %210, %211 : vector<8x128xf32>
    %cst_58 = arith.constant 5.000000e-01 : f32
    %213 = vector.broadcast %cst_58 : f32 to vector<8x128xf32>
    %214 = arith.mulf %213, %212 : vector<8x128xf32>
    %215 = math.tanh %214 : vector<8x128xf32>
    %cst_59 = arith.constant 5.000000e-01 : f32
    %216 = vector.broadcast %cst_59 : f32 to vector<8x128xf32>
    %217 = arith.mulf %216, %215 : vector<8x128xf32>
    %cst_60 = arith.constant 5.000000e-01 : f32
    %218 = vector.broadcast %cst_60 : f32 to vector<8x128xf32>
    %219 = arith.addf %217, %218 : vector<8x128xf32>
    %220 = math.tanh %212 : vector<8x128xf32>
    %221 = vector.extract_strided_slice %219 {offsets = [0, 0], sizes = [8, 32], strides = [1, 1]} : vector<8x128xf32> to vector<8x32xf32>
    %222 = vector.extract_strided_slice %219 {offsets = [0, 32], sizes = [8, 32], strides = [1, 1]} : vector<8x128xf32> to vector<8x32xf32>
    %223 = vector.extract_strided_slice %220 {offsets = [0, 64], sizes = [8, 32], strides = [1, 1]} : vector<8x128xf32> to vector<8x32xf32>
    %224 = vector.extract_strided_slice %219 {offsets = [0, 96], sizes = [8, 32], strides = [1, 1]} : vector<8x128xf32> to vector<8x32xf32>
    %225 = arith.mulf %222, %165 : vector<8x32xf32>
    %226 = arith.mulf %221, %223 : vector<8x32xf32>
    %227 = arith.addf %225, %226 : vector<8x32xf32>
    %228 = math.tanh %227 : vector<8x32xf32>
    %229 = arith.mulf %224, %228 : vector<8x32xf32>
    %cst_61 = arith.constant dense<0.000000e+00> : vector<8x128xf32>
    %230 = tpu.matmul %229, %13, %cst_61 {dimension_numbers = #tpu.dot_dimension_numbers<[1], [0], [0], [1], [0, 0, 1, 1], [], []>} : vector<8x32xf32>, vector<32x128xf32>, vector<8x128xf32> -> vector<8x128xf32>
    %cst_62 = arith.constant dense<0.000000e+00> : vector<8x128xf32>
    %231 = tpu.matmul %188, %14, %cst_62 {dimension_numbers = #tpu.dot_dimension_numbers<[1], [0], [0], [1], [0, 0, 1, 1], [], []>} : vector<8x32xf32>, vector<32x128xf32>, vector<8x128xf32> -> vector<8x128xf32>
    %232 = arith.addf %230, %231 : vector<8x128xf32>
    %233 = arith.addf %232, %19 : vector<8x128xf32>
    %cst_63 = arith.constant 5.000000e-01 : f32
    %234 = vector.broadcast %cst_63 : f32 to vector<8x128xf32>
    %235 = arith.mulf %234, %233 : vector<8x128xf32>
    %236 = math.tanh %235 : vector<8x128xf32>
    %cst_64 = arith.constant 5.000000e-01 : f32
    %237 = vector.broadcast %cst_64 : f32 to vector<8x128xf32>
    %238 = arith.mulf %237, %236 : vector<8x128xf32>
    %cst_65 = arith.constant 5.000000e-01 : f32
    %239 = vector.broadcast %cst_65 : f32 to vector<8x128xf32>
    %240 = arith.addf %238, %239 : vector<8x128xf32>
    %241 = math.tanh %233 : vector<8x128xf32>
    %242 = vector.extract_strided_slice %240 {offsets = [0, 0], sizes = [8, 32], strides = [1, 1]} : vector<8x128xf32> to vector<8x32xf32>
    %243 = vector.extract_strided_slice %240 {offsets = [0, 32], sizes = [8, 32], strides = [1, 1]} : vector<8x128xf32> to vector<8x32xf32>
    %244 = vector.extract_strided_slice %241 {offsets = [0, 64], sizes = [8, 32], strides = [1, 1]} : vector<8x128xf32> to vector<8x32xf32>
    %245 = vector.extract_strided_slice %240 {offsets = [0, 96], sizes = [8, 32], strides = [1, 1]} : vector<8x128xf32> to vector<8x32xf32>
    %246 = arith.mulf %243, %186 : vector<8x32xf32>
    %247 = arith.mulf %242, %244 : vector<8x32xf32>
    %248 = arith.addf %246, %247 : vector<8x32xf32>
    %249 = math.tanh %248 : vector<8x32xf32>
    %250 = arith.mulf %245, %249 : vector<8x32xf32>
    %cst_66 = arith.constant dense<0.000000e+00> : vector<8x128xf32>
    %251 = tpu.matmul %250, %15, %cst_66 {dimension_numbers = #tpu.dot_dimension_numbers<[1], [0], [0], [1], [0, 0, 1, 1], [], []>} : vector<8x32xf32>, vector<32x128xf32>, vector<8x128xf32> -> vector<8x128xf32>
    %cst_67 = arith.constant dense<0.000000e+00> : vector<8x128xf32>
    %252 = tpu.matmul %209, %16, %cst_67 {dimension_numbers = #tpu.dot_dimension_numbers<[1], [0], [0], [1], [0, 0, 1, 1], [], []>} : vector<8x32xf32>, vector<32x128xf32>, vector<8x128xf32> -> vector<8x128xf32>
    %253 = arith.addf %251, %252 : vector<8x128xf32>
    %254 = arith.addf %253, %22 : vector<8x128xf32>
    %cst_68 = arith.constant 5.000000e-01 : f32
    %255 = vector.broadcast %cst_68 : f32 to vector<8x128xf32>
    %256 = arith.mulf %255, %254 : vector<8x128xf32>
    %257 = math.tanh %256 : vector<8x128xf32>
    %cst_69 = arith.constant 5.000000e-01 : f32
    %258 = vector.broadcast %cst_69 : f32 to vector<8x128xf32>
    %259 = arith.mulf %258, %257 : vector<8x128xf32>
    %cst_70 = arith.constant 5.000000e-01 : f32
    %260 = vector.broadcast %cst_70 : f32 to vector<8x128xf32>
    %261 = arith.addf %259, %260 : vector<8x128xf32>
    %262 = math.tanh %254 : vector<8x128xf32>
    %263 = vector.extract_strided_slice %261 {offsets = [0, 0], sizes = [8, 32], strides = [1, 1]} : vector<8x128xf32> to vector<8x32xf32>
    %264 = vector.extract_strided_slice %261 {offsets = [0, 32], sizes = [8, 32], strides = [1, 1]} : vector<8x128xf32> to vector<8x32xf32>
    %265 = vector.extract_strided_slice %262 {offsets = [0, 64], sizes = [8, 32], strides = [1, 1]} : vector<8x128xf32> to vector<8x32xf32>
    %266 = vector.extract_strided_slice %261 {offsets = [0, 96], sizes = [8, 32], strides = [1, 1]} : vector<8x128xf32> to vector<8x32xf32>
    %267 = arith.mulf %264, %207 : vector<8x32xf32>
    %268 = arith.mulf %263, %265 : vector<8x32xf32>
    %269 = arith.addf %267, %268 : vector<8x32xf32>
    %270 = math.tanh %269 : vector<8x32xf32>
    %271 = arith.mulf %266, %270 : vector<8x32xf32>
    %272 = vector.extract_strided_slice %11 {offsets = [32, 0], sizes = [8, 128], strides = [1, 1]} : vector<64x128xf32> to vector<8x128xf32>
    %cst_71 = arith.constant dense<0.000000e+00> : vector<8x128xf32>
    %273 = tpu.matmul %229, %12, %cst_71 {dimension_numbers = #tpu.dot_dimension_numbers<[1], [0], [0], [1], [0, 0, 1, 1], [], []>} : vector<8x32xf32>, vector<32x128xf32>, vector<8x128xf32> -> vector<8x128xf32>
    %274 = arith.addf %272, %273 : vector<8x128xf32>
    %cst_72 = arith.constant 5.000000e-01 : f32
    %275 = vector.broadcast %cst_72 : f32 to vector<8x128xf32>
    %276 = arith.mulf %275, %274 : vector<8x128xf32>
    %277 = math.tanh %276 : vector<8x128xf32>
    %cst_73 = arith.constant 5.000000e-01 : f32
    %278 = vector.broadcast %cst_73 : f32 to vector<8x128xf32>
    %279 = arith.mulf %278, %277 : vector<8x128xf32>
    %cst_74 = arith.constant 5.000000e-01 : f32
    %280 = vector.broadcast %cst_74 : f32 to vector<8x128xf32>
    %281 = arith.addf %279, %280 : vector<8x128xf32>
    %282 = math.tanh %274 : vector<8x128xf32>
    %283 = vector.extract_strided_slice %281 {offsets = [0, 0], sizes = [8, 32], strides = [1, 1]} : vector<8x128xf32> to vector<8x32xf32>
    %284 = vector.extract_strided_slice %281 {offsets = [0, 32], sizes = [8, 32], strides = [1, 1]} : vector<8x128xf32> to vector<8x32xf32>
    %285 = vector.extract_strided_slice %282 {offsets = [0, 64], sizes = [8, 32], strides = [1, 1]} : vector<8x128xf32> to vector<8x32xf32>
    %286 = vector.extract_strided_slice %281 {offsets = [0, 96], sizes = [8, 32], strides = [1, 1]} : vector<8x128xf32> to vector<8x32xf32>
    %287 = arith.mulf %284, %227 : vector<8x32xf32>
    %288 = arith.mulf %283, %285 : vector<8x32xf32>
    %289 = arith.addf %287, %288 : vector<8x32xf32>
    %290 = math.tanh %289 : vector<8x32xf32>
    %291 = arith.mulf %286, %290 : vector<8x32xf32>
    %cst_75 = arith.constant dense<0.000000e+00> : vector<8x128xf32>
    %292 = tpu.matmul %291, %13, %cst_75 {dimension_numbers = #tpu.dot_dimension_numbers<[1], [0], [0], [1], [0, 0, 1, 1], [], []>} : vector<8x32xf32>, vector<32x128xf32>, vector<8x128xf32> -> vector<8x128xf32>
    %cst_76 = arith.constant dense<0.000000e+00> : vector<8x128xf32>
    %293 = tpu.matmul %250, %14, %cst_76 {dimension_numbers = #tpu.dot_dimension_numbers<[1], [0], [0], [1], [0, 0, 1, 1], [], []>} : vector<8x32xf32>, vector<32x128xf32>, vector<8x128xf32> -> vector<8x128xf32>
    %294 = arith.addf %292, %293 : vector<8x128xf32>
    %295 = arith.addf %294, %19 : vector<8x128xf32>
    %cst_77 = arith.constant 5.000000e-01 : f32
    %296 = vector.broadcast %cst_77 : f32 to vector<8x128xf32>
    %297 = arith.mulf %296, %295 : vector<8x128xf32>
    %298 = math.tanh %297 : vector<8x128xf32>
    %cst_78 = arith.constant 5.000000e-01 : f32
    %299 = vector.broadcast %cst_78 : f32 to vector<8x128xf32>
    %300 = arith.mulf %299, %298 : vector<8x128xf32>
    %cst_79 = arith.constant 5.000000e-01 : f32
    %301 = vector.broadcast %cst_79 : f32 to vector<8x128xf32>
    %302 = arith.addf %300, %301 : vector<8x128xf32>
    %303 = math.tanh %295 : vector<8x128xf32>
    %304 = vector.extract_strided_slice %302 {offsets = [0, 0], sizes = [8, 32], strides = [1, 1]} : vector<8x128xf32> to vector<8x32xf32>
    %305 = vector.extract_strided_slice %302 {offsets = [0, 32], sizes = [8, 32], strides = [1, 1]} : vector<8x128xf32> to vector<8x32xf32>
    %306 = vector.extract_strided_slice %303 {offsets = [0, 64], sizes = [8, 32], strides = [1, 1]} : vector<8x128xf32> to vector<8x32xf32>
    %307 = vector.extract_strided_slice %302 {offsets = [0, 96], sizes = [8, 32], strides = [1, 1]} : vector<8x128xf32> to vector<8x32xf32>
    %308 = arith.mulf %305, %248 : vector<8x32xf32>
    %309 = arith.mulf %304, %306 : vector<8x32xf32>
    %310 = arith.addf %308, %309 : vector<8x32xf32>
    %311 = math.tanh %310 : vector<8x32xf32>
    %312 = arith.mulf %307, %311 : vector<8x32xf32>
    %cst_80 = arith.constant dense<0.000000e+00> : vector<8x128xf32>
    %313 = tpu.matmul %312, %15, %cst_80 {dimension_numbers = #tpu.dot_dimension_numbers<[1], [0], [0], [1], [0, 0, 1, 1], [], []>} : vector<8x32xf32>, vector<32x128xf32>, vector<8x128xf32> -> vector<8x128xf32>
    %cst_81 = arith.constant dense<0.000000e+00> : vector<8x128xf32>
    %314 = tpu.matmul %271, %16, %cst_81 {dimension_numbers = #tpu.dot_dimension_numbers<[1], [0], [0], [1], [0, 0, 1, 1], [], []>} : vector<8x32xf32>, vector<32x128xf32>, vector<8x128xf32> -> vector<8x128xf32>
    %315 = arith.addf %313, %314 : vector<8x128xf32>
    %316 = arith.addf %315, %22 : vector<8x128xf32>
    %cst_82 = arith.constant 5.000000e-01 : f32
    %317 = vector.broadcast %cst_82 : f32 to vector<8x128xf32>
    %318 = arith.mulf %317, %316 : vector<8x128xf32>
    %319 = math.tanh %318 : vector<8x128xf32>
    %cst_83 = arith.constant 5.000000e-01 : f32
    %320 = vector.broadcast %cst_83 : f32 to vector<8x128xf32>
    %321 = arith.mulf %320, %319 : vector<8x128xf32>
    %cst_84 = arith.constant 5.000000e-01 : f32
    %322 = vector.broadcast %cst_84 : f32 to vector<8x128xf32>
    %323 = arith.addf %321, %322 : vector<8x128xf32>
    %324 = math.tanh %316 : vector<8x128xf32>
    %325 = vector.extract_strided_slice %323 {offsets = [0, 0], sizes = [8, 32], strides = [1, 1]} : vector<8x128xf32> to vector<8x32xf32>
    %326 = vector.extract_strided_slice %323 {offsets = [0, 32], sizes = [8, 32], strides = [1, 1]} : vector<8x128xf32> to vector<8x32xf32>
    %327 = vector.extract_strided_slice %324 {offsets = [0, 64], sizes = [8, 32], strides = [1, 1]} : vector<8x128xf32> to vector<8x32xf32>
    %328 = vector.extract_strided_slice %323 {offsets = [0, 96], sizes = [8, 32], strides = [1, 1]} : vector<8x128xf32> to vector<8x32xf32>
    %329 = arith.mulf %326, %269 : vector<8x32xf32>
    %330 = arith.mulf %325, %327 : vector<8x32xf32>
    %331 = arith.addf %329, %330 : vector<8x32xf32>
    %332 = math.tanh %331 : vector<8x32xf32>
    %333 = arith.mulf %328, %332 : vector<8x32xf32>
    %334 = vector.extract_strided_slice %11 {offsets = [40, 0], sizes = [8, 128], strides = [1, 1]} : vector<64x128xf32> to vector<8x128xf32>
    %cst_85 = arith.constant dense<0.000000e+00> : vector<8x128xf32>
    %335 = tpu.matmul %291, %12, %cst_85 {dimension_numbers = #tpu.dot_dimension_numbers<[1], [0], [0], [1], [0, 0, 1, 1], [], []>} : vector<8x32xf32>, vector<32x128xf32>, vector<8x128xf32> -> vector<8x128xf32>
    %336 = arith.addf %334, %335 : vector<8x128xf32>
    %cst_86 = arith.constant 5.000000e-01 : f32
    %337 = vector.broadcast %cst_86 : f32 to vector<8x128xf32>
    %338 = arith.mulf %337, %336 : vector<8x128xf32>
    %339 = math.tanh %338 : vector<8x128xf32>
    %cst_87 = arith.constant 5.000000e-01 : f32
    %340 = vector.broadcast %cst_87 : f32 to vector<8x128xf32>
    %341 = arith.mulf %340, %339 : vector<8x128xf32>
    %cst_88 = arith.constant 5.000000e-01 : f32
    %342 = vector.broadcast %cst_88 : f32 to vector<8x128xf32>
    %343 = arith.addf %341, %342 : vector<8x128xf32>
    %344 = math.tanh %336 : vector<8x128xf32>
    %345 = vector.extract_strided_slice %343 {offsets = [0, 0], sizes = [8, 32], strides = [1, 1]} : vector<8x128xf32> to vector<8x32xf32>
    %346 = vector.extract_strided_slice %343 {offsets = [0, 32], sizes = [8, 32], strides = [1, 1]} : vector<8x128xf32> to vector<8x32xf32>
    %347 = vector.extract_strided_slice %344 {offsets = [0, 64], sizes = [8, 32], strides = [1, 1]} : vector<8x128xf32> to vector<8x32xf32>
    %348 = vector.extract_strided_slice %343 {offsets = [0, 96], sizes = [8, 32], strides = [1, 1]} : vector<8x128xf32> to vector<8x32xf32>
    %349 = arith.mulf %346, %289 : vector<8x32xf32>
    %350 = arith.mulf %345, %347 : vector<8x32xf32>
    %351 = arith.addf %349, %350 : vector<8x32xf32>
    %352 = math.tanh %351 : vector<8x32xf32>
    %353 = arith.mulf %348, %352 : vector<8x32xf32>
    %cst_89 = arith.constant dense<0.000000e+00> : vector<8x128xf32>
    %354 = tpu.matmul %353, %13, %cst_89 {dimension_numbers = #tpu.dot_dimension_numbers<[1], [0], [0], [1], [0, 0, 1, 1], [], []>} : vector<8x32xf32>, vector<32x128xf32>, vector<8x128xf32> -> vector<8x128xf32>
    %cst_90 = arith.constant dense<0.000000e+00> : vector<8x128xf32>
    %355 = tpu.matmul %312, %14, %cst_90 {dimension_numbers = #tpu.dot_dimension_numbers<[1], [0], [0], [1], [0, 0, 1, 1], [], []>} : vector<8x32xf32>, vector<32x128xf32>, vector<8x128xf32> -> vector<8x128xf32>
    %356 = arith.addf %354, %355 : vector<8x128xf32>
    %357 = arith.addf %356, %19 : vector<8x128xf32>
    %cst_91 = arith.constant 5.000000e-01 : f32
    %358 = vector.broadcast %cst_91 : f32 to vector<8x128xf32>
    %359 = arith.mulf %358, %357 : vector<8x128xf32>
    %360 = math.tanh %359 : vector<8x128xf32>
    %cst_92 = arith.constant 5.000000e-01 : f32
    %361 = vector.broadcast %cst_92 : f32 to vector<8x128xf32>
    %362 = arith.mulf %361, %360 : vector<8x128xf32>
    %cst_93 = arith.constant 5.000000e-01 : f32
    %363 = vector.broadcast %cst_93 : f32 to vector<8x128xf32>
    %364 = arith.addf %362, %363 : vector<8x128xf32>
    %365 = math.tanh %357 : vector<8x128xf32>
    %366 = vector.extract_strided_slice %364 {offsets = [0, 0], sizes = [8, 32], strides = [1, 1]} : vector<8x128xf32> to vector<8x32xf32>
    %367 = vector.extract_strided_slice %364 {offsets = [0, 32], sizes = [8, 32], strides = [1, 1]} : vector<8x128xf32> to vector<8x32xf32>
    %368 = vector.extract_strided_slice %365 {offsets = [0, 64], sizes = [8, 32], strides = [1, 1]} : vector<8x128xf32> to vector<8x32xf32>
    %369 = vector.extract_strided_slice %364 {offsets = [0, 96], sizes = [8, 32], strides = [1, 1]} : vector<8x128xf32> to vector<8x32xf32>
    %370 = arith.mulf %367, %310 : vector<8x32xf32>
    %371 = arith.mulf %366, %368 : vector<8x32xf32>
    %372 = arith.addf %370, %371 : vector<8x32xf32>
    %373 = math.tanh %372 : vector<8x32xf32>
    %374 = arith.mulf %369, %373 : vector<8x32xf32>
    %cst_94 = arith.constant dense<0.000000e+00> : vector<8x128xf32>
    %375 = tpu.matmul %374, %15, %cst_94 {dimension_numbers = #tpu.dot_dimension_numbers<[1], [0], [0], [1], [0, 0, 1, 1], [], []>} : vector<8x32xf32>, vector<32x128xf32>, vector<8x128xf32> -> vector<8x128xf32>
    %cst_95 = arith.constant dense<0.000000e+00> : vector<8x128xf32>
    %376 = tpu.matmul %333, %16, %cst_95 {dimension_numbers = #tpu.dot_dimension_numbers<[1], [0], [0], [1], [0, 0, 1, 1], [], []>} : vector<8x32xf32>, vector<32x128xf32>, vector<8x128xf32> -> vector<8x128xf32>
    %377 = arith.addf %375, %376 : vector<8x128xf32>
    %378 = arith.addf %377, %22 : vector<8x128xf32>
    %cst_96 = arith.constant 5.000000e-01 : f32
    %379 = vector.broadcast %cst_96 : f32 to vector<8x128xf32>
    %380 = arith.mulf %379, %378 : vector<8x128xf32>
    %381 = math.tanh %380 : vector<8x128xf32>
    %cst_97 = arith.constant 5.000000e-01 : f32
    %382 = vector.broadcast %cst_97 : f32 to vector<8x128xf32>
    %383 = arith.mulf %382, %381 : vector<8x128xf32>
    %cst_98 = arith.constant 5.000000e-01 : f32
    %384 = vector.broadcast %cst_98 : f32 to vector<8x128xf32>
    %385 = arith.addf %383, %384 : vector<8x128xf32>
    %386 = math.tanh %378 : vector<8x128xf32>
    %387 = vector.extract_strided_slice %385 {offsets = [0, 0], sizes = [8, 32], strides = [1, 1]} : vector<8x128xf32> to vector<8x32xf32>
    %388 = vector.extract_strided_slice %385 {offsets = [0, 32], sizes = [8, 32], strides = [1, 1]} : vector<8x128xf32> to vector<8x32xf32>
    %389 = vector.extract_strided_slice %386 {offsets = [0, 64], sizes = [8, 32], strides = [1, 1]} : vector<8x128xf32> to vector<8x32xf32>
    %390 = vector.extract_strided_slice %385 {offsets = [0, 96], sizes = [8, 32], strides = [1, 1]} : vector<8x128xf32> to vector<8x32xf32>
    %391 = arith.mulf %388, %331 : vector<8x32xf32>
    %392 = arith.mulf %387, %389 : vector<8x32xf32>
    %393 = arith.addf %391, %392 : vector<8x32xf32>
    %394 = math.tanh %393 : vector<8x32xf32>
    %395 = arith.mulf %390, %394 : vector<8x32xf32>
    %396 = vector.extract_strided_slice %11 {offsets = [48, 0], sizes = [8, 128], strides = [1, 1]} : vector<64x128xf32> to vector<8x128xf32>
    %cst_99 = arith.constant dense<0.000000e+00> : vector<8x128xf32>
    %397 = tpu.matmul %353, %12, %cst_99 {dimension_numbers = #tpu.dot_dimension_numbers<[1], [0], [0], [1], [0, 0, 1, 1], [], []>} : vector<8x32xf32>, vector<32x128xf32>, vector<8x128xf32> -> vector<8x128xf32>
    %398 = arith.addf %396, %397 : vector<8x128xf32>
    %cst_100 = arith.constant 5.000000e-01 : f32
    %399 = vector.broadcast %cst_100 : f32 to vector<8x128xf32>
    %400 = arith.mulf %399, %398 : vector<8x128xf32>
    %401 = math.tanh %400 : vector<8x128xf32>
    %cst_101 = arith.constant 5.000000e-01 : f32
    %402 = vector.broadcast %cst_101 : f32 to vector<8x128xf32>
    %403 = arith.mulf %402, %401 : vector<8x128xf32>
    %cst_102 = arith.constant 5.000000e-01 : f32
    %404 = vector.broadcast %cst_102 : f32 to vector<8x128xf32>
    %405 = arith.addf %403, %404 : vector<8x128xf32>
    %406 = math.tanh %398 : vector<8x128xf32>
    %407 = vector.extract_strided_slice %405 {offsets = [0, 0], sizes = [8, 32], strides = [1, 1]} : vector<8x128xf32> to vector<8x32xf32>
    %408 = vector.extract_strided_slice %405 {offsets = [0, 32], sizes = [8, 32], strides = [1, 1]} : vector<8x128xf32> to vector<8x32xf32>
    %409 = vector.extract_strided_slice %406 {offsets = [0, 64], sizes = [8, 32], strides = [1, 1]} : vector<8x128xf32> to vector<8x32xf32>
    %410 = vector.extract_strided_slice %405 {offsets = [0, 96], sizes = [8, 32], strides = [1, 1]} : vector<8x128xf32> to vector<8x32xf32>
    %411 = arith.mulf %408, %351 : vector<8x32xf32>
    %412 = arith.mulf %407, %409 : vector<8x32xf32>
    %413 = arith.addf %411, %412 : vector<8x32xf32>
    %414 = math.tanh %413 : vector<8x32xf32>
    %415 = arith.mulf %410, %414 : vector<8x32xf32>
    %cst_103 = arith.constant dense<0.000000e+00> : vector<8x128xf32>
    %416 = tpu.matmul %415, %13, %cst_103 {dimension_numbers = #tpu.dot_dimension_numbers<[1], [0], [0], [1], [0, 0, 1, 1], [], []>} : vector<8x32xf32>, vector<32x128xf32>, vector<8x128xf32> -> vector<8x128xf32>
    %cst_104 = arith.constant dense<0.000000e+00> : vector<8x128xf32>
    %417 = tpu.matmul %374, %14, %cst_104 {dimension_numbers = #tpu.dot_dimension_numbers<[1], [0], [0], [1], [0, 0, 1, 1], [], []>} : vector<8x32xf32>, vector<32x128xf32>, vector<8x128xf32> -> vector<8x128xf32>
    %418 = arith.addf %416, %417 : vector<8x128xf32>
    %419 = arith.addf %418, %19 : vector<8x128xf32>
    %cst_105 = arith.constant 5.000000e-01 : f32
    %420 = vector.broadcast %cst_105 : f32 to vector<8x128xf32>
    %421 = arith.mulf %420, %419 : vector<8x128xf32>
    %422 = math.tanh %421 : vector<8x128xf32>
    %cst_106 = arith.constant 5.000000e-01 : f32
    %423 = vector.broadcast %cst_106 : f32 to vector<8x128xf32>
    %424 = arith.mulf %423, %422 : vector<8x128xf32>
    %cst_107 = arith.constant 5.000000e-01 : f32
    %425 = vector.broadcast %cst_107 : f32 to vector<8x128xf32>
    %426 = arith.addf %424, %425 : vector<8x128xf32>
    %427 = math.tanh %419 : vector<8x128xf32>
    %428 = vector.extract_strided_slice %426 {offsets = [0, 0], sizes = [8, 32], strides = [1, 1]} : vector<8x128xf32> to vector<8x32xf32>
    %429 = vector.extract_strided_slice %426 {offsets = [0, 32], sizes = [8, 32], strides = [1, 1]} : vector<8x128xf32> to vector<8x32xf32>
    %430 = vector.extract_strided_slice %427 {offsets = [0, 64], sizes = [8, 32], strides = [1, 1]} : vector<8x128xf32> to vector<8x32xf32>
    %431 = vector.extract_strided_slice %426 {offsets = [0, 96], sizes = [8, 32], strides = [1, 1]} : vector<8x128xf32> to vector<8x32xf32>
    %432 = arith.mulf %429, %372 : vector<8x32xf32>
    %433 = arith.mulf %428, %430 : vector<8x32xf32>
    %434 = arith.addf %432, %433 : vector<8x32xf32>
    %435 = math.tanh %434 : vector<8x32xf32>
    %436 = arith.mulf %431, %435 : vector<8x32xf32>
    %cst_108 = arith.constant dense<0.000000e+00> : vector<8x128xf32>
    %437 = tpu.matmul %436, %15, %cst_108 {dimension_numbers = #tpu.dot_dimension_numbers<[1], [0], [0], [1], [0, 0, 1, 1], [], []>} : vector<8x32xf32>, vector<32x128xf32>, vector<8x128xf32> -> vector<8x128xf32>
    %cst_109 = arith.constant dense<0.000000e+00> : vector<8x128xf32>
    %438 = tpu.matmul %395, %16, %cst_109 {dimension_numbers = #tpu.dot_dimension_numbers<[1], [0], [0], [1], [0, 0, 1, 1], [], []>} : vector<8x32xf32>, vector<32x128xf32>, vector<8x128xf32> -> vector<8x128xf32>
    %439 = arith.addf %437, %438 : vector<8x128xf32>
    %440 = arith.addf %439, %22 : vector<8x128xf32>
    %cst_110 = arith.constant 5.000000e-01 : f32
    %441 = vector.broadcast %cst_110 : f32 to vector<8x128xf32>
    %442 = arith.mulf %441, %440 : vector<8x128xf32>
    %443 = math.tanh %442 : vector<8x128xf32>
    %cst_111 = arith.constant 5.000000e-01 : f32
    %444 = vector.broadcast %cst_111 : f32 to vector<8x128xf32>
    %445 = arith.mulf %444, %443 : vector<8x128xf32>
    %cst_112 = arith.constant 5.000000e-01 : f32
    %446 = vector.broadcast %cst_112 : f32 to vector<8x128xf32>
    %447 = arith.addf %445, %446 : vector<8x128xf32>
    %448 = math.tanh %440 : vector<8x128xf32>
    %449 = vector.extract_strided_slice %447 {offsets = [0, 0], sizes = [8, 32], strides = [1, 1]} : vector<8x128xf32> to vector<8x32xf32>
    %450 = vector.extract_strided_slice %447 {offsets = [0, 32], sizes = [8, 32], strides = [1, 1]} : vector<8x128xf32> to vector<8x32xf32>
    %451 = vector.extract_strided_slice %448 {offsets = [0, 64], sizes = [8, 32], strides = [1, 1]} : vector<8x128xf32> to vector<8x32xf32>
    %452 = vector.extract_strided_slice %447 {offsets = [0, 96], sizes = [8, 32], strides = [1, 1]} : vector<8x128xf32> to vector<8x32xf32>
    %453 = arith.mulf %450, %393 : vector<8x32xf32>
    %454 = arith.mulf %449, %451 : vector<8x32xf32>
    %455 = arith.addf %453, %454 : vector<8x32xf32>
    %456 = math.tanh %455 : vector<8x32xf32>
    %457 = arith.mulf %452, %456 : vector<8x32xf32>
    %458 = vector.extract_strided_slice %11 {offsets = [56, 0], sizes = [8, 128], strides = [1, 1]} : vector<64x128xf32> to vector<8x128xf32>
    %cst_113 = arith.constant dense<0.000000e+00> : vector<8x128xf32>
    %459 = tpu.matmul %415, %12, %cst_113 {dimension_numbers = #tpu.dot_dimension_numbers<[1], [0], [0], [1], [0, 0, 1, 1], [], []>} : vector<8x32xf32>, vector<32x128xf32>, vector<8x128xf32> -> vector<8x128xf32>
    %460 = arith.addf %458, %459 : vector<8x128xf32>
    %cst_114 = arith.constant 5.000000e-01 : f32
    %461 = vector.broadcast %cst_114 : f32 to vector<8x128xf32>
    %462 = arith.mulf %461, %460 : vector<8x128xf32>
    %463 = math.tanh %462 : vector<8x128xf32>
    %cst_115 = arith.constant 5.000000e-01 : f32
    %464 = vector.broadcast %cst_115 : f32 to vector<8x128xf32>
    %465 = arith.mulf %464, %463 : vector<8x128xf32>
    %cst_116 = arith.constant 5.000000e-01 : f32
    %466 = vector.broadcast %cst_116 : f32 to vector<8x128xf32>
    %467 = arith.addf %465, %466 : vector<8x128xf32>
    %468 = math.tanh %460 : vector<8x128xf32>
    %469 = vector.extract_strided_slice %467 {offsets = [0, 0], sizes = [8, 32], strides = [1, 1]} : vector<8x128xf32> to vector<8x32xf32>
    %470 = vector.extract_strided_slice %467 {offsets = [0, 32], sizes = [8, 32], strides = [1, 1]} : vector<8x128xf32> to vector<8x32xf32>
    %471 = vector.extract_strided_slice %468 {offsets = [0, 64], sizes = [8, 32], strides = [1, 1]} : vector<8x128xf32> to vector<8x32xf32>
    %472 = vector.extract_strided_slice %467 {offsets = [0, 96], sizes = [8, 32], strides = [1, 1]} : vector<8x128xf32> to vector<8x32xf32>
    %473 = arith.mulf %470, %413 : vector<8x32xf32>
    %474 = arith.mulf %469, %471 : vector<8x32xf32>
    %475 = arith.addf %473, %474 : vector<8x32xf32>
    %476 = math.tanh %475 : vector<8x32xf32>
    %477 = arith.mulf %472, %476 : vector<8x32xf32>
    %cst_117 = arith.constant dense<0.000000e+00> : vector<8x128xf32>
    %478 = tpu.matmul %477, %13, %cst_117 {dimension_numbers = #tpu.dot_dimension_numbers<[1], [0], [0], [1], [0, 0, 1, 1], [], []>} : vector<8x32xf32>, vector<32x128xf32>, vector<8x128xf32> -> vector<8x128xf32>
    %cst_118 = arith.constant dense<0.000000e+00> : vector<8x128xf32>
    %479 = tpu.matmul %436, %14, %cst_118 {dimension_numbers = #tpu.dot_dimension_numbers<[1], [0], [0], [1], [0, 0, 1, 1], [], []>} : vector<8x32xf32>, vector<32x128xf32>, vector<8x128xf32> -> vector<8x128xf32>
    %480 = arith.addf %478, %479 : vector<8x128xf32>
    %481 = arith.addf %480, %19 : vector<8x128xf32>
    %cst_119 = arith.constant 5.000000e-01 : f32
    %482 = vector.broadcast %cst_119 : f32 to vector<8x128xf32>
    %483 = arith.mulf %482, %481 : vector<8x128xf32>
    %484 = math.tanh %483 : vector<8x128xf32>
    %cst_120 = arith.constant 5.000000e-01 : f32
    %485 = vector.broadcast %cst_120 : f32 to vector<8x128xf32>
    %486 = arith.mulf %485, %484 : vector<8x128xf32>
    %cst_121 = arith.constant 5.000000e-01 : f32
    %487 = vector.broadcast %cst_121 : f32 to vector<8x128xf32>
    %488 = arith.addf %486, %487 : vector<8x128xf32>
    %489 = math.tanh %481 : vector<8x128xf32>
    %490 = vector.extract_strided_slice %488 {offsets = [0, 0], sizes = [8, 32], strides = [1, 1]} : vector<8x128xf32> to vector<8x32xf32>
    %491 = vector.extract_strided_slice %488 {offsets = [0, 32], sizes = [8, 32], strides = [1, 1]} : vector<8x128xf32> to vector<8x32xf32>
    %492 = vector.extract_strided_slice %489 {offsets = [0, 64], sizes = [8, 32], strides = [1, 1]} : vector<8x128xf32> to vector<8x32xf32>
    %493 = vector.extract_strided_slice %488 {offsets = [0, 96], sizes = [8, 32], strides = [1, 1]} : vector<8x128xf32> to vector<8x32xf32>
    %494 = arith.mulf %491, %434 : vector<8x32xf32>
    %495 = arith.mulf %490, %492 : vector<8x32xf32>
    %496 = arith.addf %494, %495 : vector<8x32xf32>
    %497 = math.tanh %496 : vector<8x32xf32>
    %498 = arith.mulf %493, %497 : vector<8x32xf32>
    %cst_122 = arith.constant dense<0.000000e+00> : vector<8x128xf32>
    %499 = tpu.matmul %498, %15, %cst_122 {dimension_numbers = #tpu.dot_dimension_numbers<[1], [0], [0], [1], [0, 0, 1, 1], [], []>} : vector<8x32xf32>, vector<32x128xf32>, vector<8x128xf32> -> vector<8x128xf32>
    %cst_123 = arith.constant dense<0.000000e+00> : vector<8x128xf32>
    %500 = tpu.matmul %457, %16, %cst_123 {dimension_numbers = #tpu.dot_dimension_numbers<[1], [0], [0], [1], [0, 0, 1, 1], [], []>} : vector<8x32xf32>, vector<32x128xf32>, vector<8x128xf32> -> vector<8x128xf32>
    %501 = arith.addf %499, %500 : vector<8x128xf32>
    %502 = arith.addf %501, %22 : vector<8x128xf32>
    %cst_124 = arith.constant 5.000000e-01 : f32
    %503 = vector.broadcast %cst_124 : f32 to vector<8x128xf32>
    %504 = arith.mulf %503, %502 : vector<8x128xf32>
    %505 = math.tanh %504 : vector<8x128xf32>
    %cst_125 = arith.constant 5.000000e-01 : f32
    %506 = vector.broadcast %cst_125 : f32 to vector<8x128xf32>
    %507 = arith.mulf %506, %505 : vector<8x128xf32>
    %cst_126 = arith.constant 5.000000e-01 : f32
    %508 = vector.broadcast %cst_126 : f32 to vector<8x128xf32>
    %509 = arith.addf %507, %508 : vector<8x128xf32>
    %510 = math.tanh %502 : vector<8x128xf32>
    %511 = vector.extract_strided_slice %509 {offsets = [0, 0], sizes = [8, 32], strides = [1, 1]} : vector<8x128xf32> to vector<8x32xf32>
    %512 = vector.extract_strided_slice %509 {offsets = [0, 32], sizes = [8, 32], strides = [1, 1]} : vector<8x128xf32> to vector<8x32xf32>
    %513 = vector.extract_strided_slice %510 {offsets = [0, 64], sizes = [8, 32], strides = [1, 1]} : vector<8x128xf32> to vector<8x32xf32>
    %514 = vector.extract_strided_slice %509 {offsets = [0, 96], sizes = [8, 32], strides = [1, 1]} : vector<8x128xf32> to vector<8x32xf32>
    %515 = arith.mulf %512, %455 : vector<8x32xf32>
    %516 = arith.mulf %511, %513 : vector<8x32xf32>
    %517 = arith.addf %515, %516 : vector<8x32xf32>
    %518 = math.tanh %517 : vector<8x32xf32>
    %519 = arith.mulf %514, %518 : vector<8x32xf32>
    %cst_127 = arith.constant 0.000000e+00 : f32
    %520 = vector.broadcast %cst_127 : f32 to vector<8x32xf32>
    %521 = arith.maximumf %519, %520 : vector<8x32xf32>
    %c0_128 = arith.constant 0 : index
    %c0_129 = arith.constant 0 : index
    %522 = vector.load %arg2[%c0_128, %c0_129] : memref<8x16xf32, #tpu.memory_space<vmem>>, vector<8x16xf32>
    %c0_130 = arith.constant 0 : index
    %c0_131 = arith.constant 0 : index
    %523 = vector.load %arg4[%c0_130, %c0_131] : memref<49x160xf32, #tpu.memory_space<vmem>>, vector<16x160xf32>
    %c16 = arith.constant 16 : index
    %c0_132 = arith.constant 0 : index
    %524 = vector.load %arg4[%c16, %c0_132] : memref<49x160xf32, #tpu.memory_space<vmem>>, vector<32x160xf32>
    %c48 = arith.constant 48 : index
    %c0_133 = arith.constant 0 : index
    %525 = vector.load %arg4[%c48, %c0_133] : memref<49x160xf32, #tpu.memory_space<vmem>>, vector<1x160xf32>
    %cst_134 = arith.constant dense<0.000000e+00> : vector<8x160xf32>
    %526 = tpu.matmul %522, %523, %cst_134 {dimension_numbers = #tpu.dot_dimension_numbers<[1], [0], [0], [1], [0, 0, 1, 1], [], []>} : vector<8x16xf32>, vector<16x160xf32>, vector<8x160xf32> -> vector<8x160xf32>
    %cst_135 = arith.constant dense<0.000000e+00> : vector<8x160xf32>
    %527 = tpu.matmul %521, %524, %cst_135 {dimension_numbers = #tpu.dot_dimension_numbers<[1], [0], [0], [1], [0, 0, 1, 1], [], []>} : vector<8x32xf32>, vector<32x160xf32>, vector<8x160xf32> -> vector<8x160xf32>
    %528 = arith.addf %526, %527 : vector<8x160xf32>
    %529 = vector.broadcast %525 : vector<1x160xf32> to vector<8x160xf32>
    %530 = arith.addf %528, %529 : vector<8x160xf32>
    %531 = vector.extract_strided_slice %530 {offsets = [0, 128], sizes = [8, 32], strides = [1, 1]} : vector<8x160xf32> to vector<8x32xf32>
    %532 = vector.extract_strided_slice %530 {offsets = [0, 0], sizes = [8, 128], strides = [1, 1]} : vector<8x160xf32> to vector<8x128xf32>
    %cst_136 = arith.constant 0.000000e+00 : f32
    %533 = vector.broadcast %cst_136 : f32 to vector<8x128xf32>
    %534 = arith.maximumf %532, %533 : vector<8x128xf32>
    %c168 = arith.constant 168 : index
    %c0_137 = arith.constant 0 : index
    %535 = vector.load %arg3[%c168, %c0_137] : memref<345x128xf32, #tpu.memory_space<vmem>>, vector<16x128xf32>
    %c184 = arith.constant 184 : index
    %c0_138 = arith.constant 0 : index
    %536 = vector.load %arg3[%c184, %c0_138] : memref<345x128xf32, #tpu.memory_space<vmem>>, vector<128x128xf32>
    %c312 = arith.constant 312 : index
    %c0_139 = arith.constant 0 : index
    %537 = vector.load %arg3[%c312, %c0_139] : memref<345x128xf32, #tpu.memory_space<vmem>>, vector<32x128xf32>
    %c344 = arith.constant 344 : index
    %c0_140 = arith.constant 0 : index
    %538 = vector.load %arg3[%c344, %c0_140] : memref<345x128xf32, #tpu.memory_space<vmem>>, vector<1x128xf32>
    %cst_141 = arith.constant dense<0.000000e+00> : vector<8x128xf32>
    %539 = tpu.matmul %522, %535, %cst_141 {dimension_numbers = #tpu.dot_dimension_numbers<[1], [0], [0], [1], [0, 0, 1, 1], [], []>} : vector<8x16xf32>, vector<16x128xf32>, vector<8x128xf32> -> vector<8x128xf32>
    %cst_142 = arith.constant dense<0.000000e+00> : vector<8x128xf32>
    %540 = tpu.matmul %534, %536, %cst_142 {dimension_numbers = #tpu.dot_dimension_numbers<[1], [0], [0], [1], [0, 0, 1, 1], [], []>} : vector<8x128xf32>, vector<128x128xf32>, vector<8x128xf32> -> vector<8x128xf32>
    %541 = arith.addf %539, %540 : vector<8x128xf32>
    %cst_143 = arith.constant dense<0.000000e+00> : vector<8x128xf32>
    %542 = tpu.matmul %531, %537, %cst_143 {dimension_numbers = #tpu.dot_dimension_numbers<[1], [0], [0], [1], [0, 0, 1, 1], [], []>} : vector<8x32xf32>, vector<32x128xf32>, vector<8x128xf32> -> vector<8x128xf32>
    %543 = arith.addf %541, %542 : vector<8x128xf32>
    %544 = vector.broadcast %538 : vector<1x128xf32> to vector<8x128xf32>
    %545 = arith.addf %543, %544 : vector<8x128xf32>
    %c0_144 = arith.constant 0 : index
    %c0_145 = arith.constant 0 : index
    %546 = vector.load %arg5[%c0_144, %c0_145] : memref<8x128xf32, #tpu.memory_space<vmem>>, vector<8x128xf32>
    tpu.vector_store %arg5[%c0_144, %c0_145], %545 {strides = array<i32>} : memref<8x128xf32, #tpu.memory_space<vmem>>, vector<8x128xf32>,
    return
  }
}

</mosaic_0001>

<llo_original>
// kernel: tpu_custom_call.1
$region0: #{tpu_custom_call.1}
  #allocation0 [shape = 'u32[]', space=smem, size = 0x4, offset = 0x4, fixed_abs, tag = 'smem constant byte address 0x4 - core index']
  #allocation1 [shape = 'u32[144,128]{1,0:T(1,128)}', space=vmem, size = 0x12000, scoped, tag = 'internal scratch']
  %s0 = inlined_call_operand.vmem [shape: f32[64,4], index: 0, kind: input, shape index: {}]
  %s1 = inlined_call_operand.vmem [shape: f32[64,1], index: 1, kind: input, shape index: {}]
  %s2 = inlined_call_operand.vmem [shape: f32[8,16], index: 2, kind: input, shape index: {}]
  %s3 = inlined_call_operand.hbm [shape: f32[345,128], index: 3, kind: input, shape index: {}]
  %s4 = inlined_call_operand.vmem [shape: f32[49,160], index: 4, kind: input, shape index: {}]
  %s5 = inlined_call_operand.hbm [shape: f32[8,128], index: 5, kind: output, shape index: {}]
  %s6 = sld [smem:[#allocation0]]
  $region34: #{tpu_custom_call.1} parent=0
    _
  %s8 = ssub.s32 1, %s6
  %s9 = scalar_select 0, %s8, %s6
  $region1: #{tpu_custom_call.1} parent=0
    #allocation2 [shape = 'u8[180224]{0}', space=vmem, size = 0x2c000, scoped, tag = 'input window, operand 3, single buffered']
    #allocation3 [shape = 's32[1]{0}', space=sflag, size = 0x4, scoped, tag = 'scoped memory for tpu_custom_call.1']
    #allocation4 [shape = 's32[1]{0}', space=sflag, size = 0x4, scoped, tag = 'scoped memory for tpu_custom_call.1']
    #allocation5 [shape = 'u8[4096]{0}', space=vmem, size = 0x1000, scoped, tag = 'output window, operand 0, single buffered']
    %10 = vsyncpa [#allocation3], 0
    %11 = vsyncpa [#allocation4], 0
    // Predicated region
    $region2: #{tpu_custom_call.1} parent=1 // pred_check
      _
    $region3: #{tpu_custom_call.1} parent=1 // pred_check_branch
      %13 = sbr.rel (0) target = $region5
    $region4: #{tpu_custom_call.1} parent=1 // pred_region
      _
    $region5: #{tpu_custom_call.1} parent=1 // pred_fallthru
      _
    // Predicated region
    $region6: #{tpu_custom_call.1} parent=1 // pred_check
      _
    $region7: #{tpu_custom_call.1} parent=1 // pred_check_branch
      %15 = sbr.rel (0) target = $region9
    $region8: #{tpu_custom_call.1} parent=1 // pred_region
      _
    $region9: #{tpu_custom_call.1} parent=1 // pred_fallthru
      _
    // Predicated region
    $region10: #{tpu_custom_call.1} parent=1 // pred_check
      _
    $region11: #{tpu_custom_call.1} parent=1 // pred_check_branch
      %17 = sbr.rel (0) target = $region13
    $region12: #{tpu_custom_call.1} parent=1 // pred_region
      _
    $region13: #{tpu_custom_call.1} parent=1 // pred_fallthru
      _
    // Predicated region
    $region14: #{tpu_custom_call.1} parent=1 // pred_check
      _
    $region15: #{tpu_custom_call.1} parent=1 // pred_check_branch
      %19 = sbr.rel (0) target = $region17
    $region16: #{tpu_custom_call.1} parent=1 // pred_region
      %s21 = ssub.s32 5632, 5632
      %22 = vsyncadd [#allocation3], %s21
      %s23 = sshll.u32 [#allocation2], 4
      %s24 = int_to_ptr.vmem [resolvable:$true] %s23
      %29 = dma.hbm_to_vmem [thread:$0]  %s3, 5632, %s24, [#allocation3], 128, 128, 8
    $region17: #{tpu_custom_call.1} parent=1 // pred_fallthru
      _
    // Predicated region
    $region18: #{tpu_custom_call.1} parent=1 // pred_check
      _
    $region19: #{tpu_custom_call.1} parent=1 // pred_check_branch
      %31 = sbr.rel (0) target = $region21
    $region20: #{tpu_custom_call.1} parent=1 // pred_region
      _
    $region21: #{tpu_custom_call.1} parent=1 // pred_fallthru
      _
    // Predicated region
    $region22: #{tpu_custom_call.1} parent=1 // pred_check
      _
    $region23: #{tpu_custom_call.1} parent=1 // pred_check_branch
      %33 = sbr.rel (0) target = $region25
    $region24: #{tpu_custom_call.1} parent=1 // pred_region
      %34 = dma.done [#allocation3], 5632
    $region25: #{tpu_custom_call.1} parent=1 // pred_fallthru
      _
    %v35 = vld [vmem:[#allocation2] sm:$0xf]
    %v36 = vld [vmem:[#allocation2 + $0x4] sm:$0x1]
    %v37 = vld [vmem:[#allocation2 + $0x5] sm:$0x1]
    %v38 = vld [vmem:[%s0] sm:$0xff]
    %v39 = vld [vmem:[%s0 + $0x8] sm:$0xff]
    %v40 = vld [vmem:[%s0 + $0x10] sm:$0xff]
    %v41 = vld [vmem:[%s0 + $0x18] sm:$0xff]
    %v42 = vld [vmem:[%s0 + $0x20] sm:$0xff]
    %v43 = vld [vmem:[%s0 + $0x28] sm:$0xff]
    %v44 = vld [vmem:[%s0 + $0x30] sm:$0xff]
    %v45 = vld [vmem:[%s0 + $0x38] sm:$0xff]
    %v46 = vld [vmem:[%s1] sm:$0xff]
    %v47 = vld [vmem:[%s1 + $0x8] sm:$0xff]
    %v48 = vld [vmem:[%s1 + $0x10] sm:$0xff]
    %v49 = vld [vmem:[%s1 + $0x18] sm:$0xff]
    %v50 = vld [vmem:[%s1 + $0x20] sm:$0xff]
    %v51 = vld [vmem:[%s1 + $0x28] sm:$0xff]
    %v52 = vld [vmem:[%s1 + $0x30] sm:$0xff]
    %v53 = vld [vmem:[%s1 + $0x38] sm:$0xff]
    %55 = vset.pattern.permute.xlu0 0
    %56 = vperm.xlu0 %55, %v46
    %v57 = vpop.permute.xlu0 %56
    %60 = vset.pattern.permute.xlu0 0
    %61 = vperm.xlu0 %60, %v47
    %v62 = vpop.permute.xlu0 %61
    %65 = vset.pattern.permute.xlu0 0
    %66 = vperm.xlu0 %65, %v48
    %v67 = vpop.permute.xlu0 %66
    %70 = vset.pattern.permute.xlu0 0
    %71 = vperm.xlu0 %70, %v49
    %v72 = vpop.permute.xlu0 %71
    %75 = vset.pattern.permute.xlu0 0
    %76 = vperm.xlu0 %75, %v50
    %v77 = vpop.permute.xlu0 %76
    %80 = vset.pattern.permute.xlu0 0
    %81 = vperm.xlu0 %80, %v51
    %v82 = vpop.permute.xlu0 %81
    %85 = vset.pattern.permute.xlu0 0
    %86 = vperm.xlu0 %85, %v52
    %v87 = vpop.permute.xlu0 %86
    %90 = vset.pattern.permute.xlu0 0
    %91 = vperm.xlu0 %90, %v53
    %v92 = vpop.permute.xlu0 %91
    %v94 = vlaneseq
    %v95 = vshrl.u32 %v94, 7
    %v96 = vsub.s32 0, %v95
    %v97 = vrot.slane %v36, %v96
    %v98 = vmul.f32 %v57, %v97
    %v99 = vmul.f32 %v62, %v97
    %v100 = vmul.f32 %v67, %v97
    %v101 = vmul.f32 %v72, %v97
    %v102 = vmul.f32 %v77, %v97
    %v103 = vmul.f32 %v82, %v97
    %v104 = vmul.f32 %v87, %v97
    %v105 = vmul.f32 %v92, %v97
    %vm106 = vcmask 31744
    %v108 = vsel %vm106, %v38, 0
    %v111 = vsel %vm106, %v39, 0
    %v114 = vsel %vm106, %v40, 0
    %v117 = vsel %vm106, %v41, 0
    %v120 = vsel %vm106, %v42, 0
    %v123 = vsel %vm106, %v43, 0
    %v126 = vsel %vm106, %v44, 0
    %v129 = vsel %vm106, %v45, 0
    %vm131 = vcmask 1043456
    %v133 = vsel %vm131, %v35, 0
    %135 = vmatprep.subr.mxu0 0.0
    %136 = vmatpush1.msra.mxu0 %v133
    %137 = vmatprep.subr.mxu0 0.0
    %138 = vmatpush1.msra.mxu0 0.0
    %139 = vmatprep.subr.mxu0 0.0
    %140 = vmatpush1.msra.mxu0 0.0
    %141 = vmatprep.subr.mxu0 0.0
    %142 = vmatpush1.msra.mxu0 0.0
    %143 = vmatprep.subr.mxu0 0.0
    %144 = vmatpush1.msra.mxu0 0.0
    %145 = vmatprep.subr.mxu0 0.0
    %146 = vmatpush1.msra.mxu0 0.0
    %147 = vmatprep.subr.mxu0 0.0
    %148 = vmatpush1.msra.mxu0 0.0
    %149 = vmatprep.subr.mxu0 0.0
    %150 = vmatpush1.msra.mxu0 0.0
    %151 = vmatprep.subr.mxu0 0.0
    %152 = vmatpush1.msra.mxu0 0.0
    %153 = vmatprep.subr.mxu0 0.0
    %154 = vmatpush1.msra.mxu0 0.0
    %155 = vmatprep.subr.mxu0 0.0
    %156 = vmatpush1.msra.mxu0 0.0
    %157 = vmatprep.subr.mxu0 0.0
    %158 = vmatpush1.msra.mxu0 0.0
    %159 = vmatprep.subr.mxu0 0.0
    %160 = vmatpush1.msra.mxu0 0.0
    %161 = vmatprep.subr.mxu0 0.0
    %162 = vmatpush1.msra.mxu0 0.0
    %163 = vmatprep.subr.mxu0 0.0
    %164 = vmatpush1.msra.mxu0 0.0
    %165 = vmatprep.subr.mxu0 0.0
    %166 = vmatpush1.msra.mxu0 0.0
    %167 = vmatprep.subr.mxu0 0.0
    %168 = vmatpush1.msra.mxu0 0.0
    %169 = vmatprep.subr.mxu0 0.0
    %170 = vmatpush1.msra.mxu0 0.0
    %171 = vmatprep.subr.mxu0 0.0
    %172 = vmatpush1.msra.mxu0 0.0
    %173 = vmatprep.subr.mxu0 0.0
    %174 = vmatpush1.msra.mxu0 0.0
    %175 = vmatprep.subr.mxu0 0.0
    %176 = vmatpush1.msra.mxu0 0.0
    %177 = vmatprep.subr.mxu0 0.0
    %178 = vmatpush1.msra.mxu0 0.0
    %179 = vmatprep.subr.mxu0 0.0
    %180 = vmatpush1.msra.mxu0 0.0
    %181 = vmatprep.subr.mxu0 0.0
    %182 = vmatpush1.msra.mxu0 0.0
    %183 = vmatprep.subr.mxu0 0.0
    %184 = vmatpush1.msra.mxu0 0.0
    %185 = vmatprep.subr.mxu0 0.0
    %186 = vmatpush1.msra.mxu0 0.0
    %187 = vmatprep.subr.mxu0 0.0
    %188 = vmatpush1.msra.mxu0 0.0
    %189 = vmatprep.subr.mxu0 0.0
    %190 = vmatpush1.msra.mxu0 0.0
    %191 = vmatprep.subr.mxu0 0.0
    %192 = vmatpush1.msra.mxu0 0.0
    %193 = vmatprep.subr.mxu0 0.0
    %194 = vmatpush1.msra.mxu0 0.0
    %195 = vmatprep.subr.mxu0 0.0
    %196 = vmatpush1.msra.mxu0 0.0
    %197 = vmatprep.subr.mxu0 0.0
    %198 = vmatpush1.msra.mxu0 0.0
    %199 = vmatprep.mubr.f32.mxu0 0.0
    %200 = vmatmul.mubr.f32.gmra.mrb[0].mxu0 %v108
    %v201 = vpop.f32.mrb[0].mxu0
    %v202 = vadd.f32 %v98, %v201
    %v203 = vpop.f32.mrb[0].mxu0
    %204 = vmatprep.mubr.f32.mxu0 0.0
    %205 = vmatmul.mubr.f32.gmra.mrb[0].mxu0 %v111
    %v206 = vpop.f32.mrb[0].mxu0
    %v207 = vadd.f32 %v99, %v206
    %v208 = vpop.f32.mrb[0].mxu0
    %209 = vmatprep.mubr.f32.mxu0 0.0
    %210 = vmatmul.mubr.f32.gmra.mrb[0].mxu0 %v114
    %v211 = vpop.f32.mrb[0].mxu0
    %v212 = vadd.f32 %v100, %v211
    %v213 = vpop.f32.mrb[0].mxu0
    %214 = vmatprep.mubr.f32.mxu0 0.0
    %215 = vmatmul.mubr.f32.gmra.mrb[0].mxu0 %v117
    %v216 = vpop.f32.mrb[0].mxu0
    %v217 = vadd.f32 %v101, %v216
    %v218 = vpop.f32.mrb[0].mxu0
    %219 = vmatprep.mubr.f32.mxu0 0.0
    %220 = vmatmul.mubr.f32.gmra.mrb[0].mxu0 %v120
    %v221 = vpop.f32.mrb[0].mxu0
    %v222 = vadd.f32 %v102, %v221
    %v223 = vpop.f32.mrb[0].mxu0
    %224 = vmatprep.mubr.f32.mxu0 0.0
    %225 = vmatmul.mubr.f32.gmra.mrb[0].mxu0 %v123
    %v226 = vpop.f32.mrb[0].mxu0
    %v227 = vadd.f32 %v103, %v226
    %v228 = vpop.f32.mrb[0].mxu0
    %229 = vmatprep.mubr.f32.mxu0 0.0
    %230 = vmatmul.mubr.f32.gmra.mrb[0].mxu0 %v126
    %v231 = vpop.f32.mrb[0].mxu0
    %v232 = vadd.f32 %v104, %v231
    %v233 = vpop.f32.mrb[0].mxu0
    %234 = vmatprep.mubr.f32.mxu0 0.0
    %235 = vmatmul.mubr.f32.gmra.mrb[0].mxu0 %v129
    %v236 = vpop.f32.mrb[0].mxu0
    %v237 = vadd.f32 %v105, %v236
    %v238 = vpop.f32.mrb[0].mxu0
    %239 = vdwg.mxu0
    %v240 = vlaneseq
    %v241 = vshrl.u32 %v240, 7
    %v242 = vsub.s32 0, %v241
    %v243 = vrot.slane %v37, %v242
    %v244 = vadd.f32 %v202, %v243
    %v245 = vadd.f32 %v207, %v243
    %v246 = vadd.f32 %v212, %v243
    %v247 = vadd.f32 %v217, %v243
    %v248 = vadd.f32 %v222, %v243
    %v249 = vadd.f32 %v227, %v243
    %v250 = vadd.f32 %v232, %v243
    %v251 = vadd.f32 %v237, %v243
    %v252 = vld [vmem:[#allocation2 + $0x8] sm:$0xff]
    %v253 = vld [vmem:[#allocation2 + $0x10] sm:$0xff]
    %v254 = vld [vmem:[#allocation2 + $0x18] sm:$0xff]
    %v255 = vld [vmem:[#allocation2 + $0x20] sm:$0xff]
    %v256 = vld [vmem:[#allocation2 + $0x28] sm:$0xff]
    %v257 = vld [vmem:[#allocation2 + $0x30] sm:$0xff]
    %v258 = vld [vmem:[#allocation2 + $0x38] sm:$0xff]
    %v259 = vld [vmem:[#allocation2 + $0x40] sm:$0xff]
    %v260 = vld [vmem:[#allocation2 + $0x48] sm:$0xff]
    %v261 = vld [vmem:[#allocation2 + $0x50] sm:$0xff]
    %v262 = vld [vmem:[#allocation2 + $0x58] sm:$0xff]
    %v263 = vld [vmem:[#allocation2 + $0x60] sm:$0xff]
    %v264 = vld [vmem:[#allocation2 + $0x68] sm:$0xff]
    %v265 = vld [vmem:[#allocation2 + $0x70] sm:$0xff]
    %v266 = vld [vmem:[#allocation2 + $0x78] sm:$0xff]
    %v267 = vld [vmem:[#allocation2 + $0x80] sm:$0xff]
    %v268 = vld [vmem:[#allocation2 + $0x88] sm:$0xff]
    %v269 = vld [vmem:[#allocation2 + $0x90] sm:$0xff]
    %v270 = vld [vmem:[#allocation2 + $0x98] sm:$0xff]
    %v271 = vld [vmem:[#allocation2 + $0xa0] sm:$0xff]
    %v272 = vld [vmem:[#allocation2 + $0x6] sm:$0x1]
    %v273 = vlaneseq
    %v274 = vshrl.u32 %v273, 7
    %v275 = vsub.s32 0, %v274
    %v276 = vrot.slane %v272, %v275
    %v277 = vld [vmem:[#allocation2 + $0x7] sm:$0x1]
    %v278 = vlaneseq
    %v279 = vshrl.u32 %v278, 7
    %v280 = vsub.s32 0, %v279
    %v281 = vrot.slane %v277, %v280
    %vm282 = vcmask 261120
    %v284 = vsel %vm282, 0.0, 0
    %286 = vmatprep.subr.mxu0 0.0
    %287 = vmatpush1.msra.mxu0 %v252
    %288 = vmatprep.subr.mxu0 0.0
    %289 = vmatpush1.msra.mxu0 %v253
    %290 = vmatprep.subr.mxu0 0.0
    %291 = vmatpush1.msra.mxu0 %v254
    %292 = vmatprep.subr.mxu0 0.0
    %293 = vmatpush1.msra.mxu0 %v255
    %294 = vmatprep.subr.mxu0 0.0
    %295 = vmatpush1.msra.mxu0 0.0
    %296 = vmatprep.subr.mxu0 0.0
    %297 = vmatpush1.msra.mxu0 0.0
    %298 = vmatprep.subr.mxu0 0.0
    %299 = vmatpush1.msra.mxu0 0.0
    %300 = vmatprep.subr.mxu0 0.0
    %301 = vmatpush1.msra.mxu0 0.0
    %302 = vmatprep.subr.mxu0 0.0
    %303 = vmatpush1.msra.mxu0 0.0
    %304 = vmatprep.subr.mxu0 0.0
    %305 = vmatpush1.msra.mxu0 0.0
    %306 = vmatprep.subr.mxu0 0.0
    %307 = vmatpush1.msra.mxu0 0.0
    %308 = vmatprep.subr.mxu0 0.0
    %309 = vmatpush1.msra.mxu0 0.0
    %310 = vmatprep.subr.mxu0 0.0
    %311 = vmatpush1.msra.mxu0 0.0
    %312 = vmatprep.subr.mxu0 0.0
    %313 = vmatpush1.msra.mxu0 0.0
    %314 = vmatprep.subr.mxu0 0.0
    %315 = vmatpush1.msra.mxu0 0.0
    %316 = vmatprep.subr.mxu0 0.0
    %317 = vmatpush1.msra.mxu0 0.0
    %318 = vmatprep.subr.mxu0 0.0
    %319 = vmatpush1.msra.mxu0 0.0
    %320 = vmatprep.subr.mxu0 0.0
    %321 = vmatpush1.msra.mxu0 0.0
    %322 = vmatprep.subr.mxu0 0.0
    %323 = vmatpush1.msra.mxu0 0.0
    %324 = vmatprep.subr.mxu0 0.0
    %325 = vmatpush1.msra.mxu0 0.0
    %326 = vmatprep.subr.mxu0 0.0
    %327 = vmatpush1.msra.mxu0 0.0
    %328 = vmatprep.subr.mxu0 0.0
    %329 = vmatpush1.msra.mxu0 0.0
    %330 = vmatprep.subr.mxu0 0.0
    %331 = vmatpush1.msra.mxu0 0.0
    %332 = vmatprep.subr.mxu0 0.0
    %333 = vmatpush1.msra.mxu0 0.0
    %334 = vmatprep.subr.mxu0 0.0
    %335 = vmatpush1.msra.mxu0 0.0
    %336 = vmatprep.subr.mxu0 0.0
    %337 = vmatpush1.msra.mxu0 0.0
    %338 = vmatprep.subr.mxu0 0.0
    %339 = vmatpush1.msra.mxu0 0.0
    %340 = vmatprep.subr.mxu0 0.0
    %341 = vmatpush1.msra.mxu0 0.0
    %342 = vmatprep.subr.mxu0 0.0
    %343 = vmatpush1.msra.mxu0 0.0
    %344 = vmatprep.subr.mxu0 0.0
    %345 = vmatpush1.msra.mxu0 0.0
    %346 = vmatprep.subr.mxu0 0.0
    %347 = vmatpush1.msra.mxu0 0.0
    %348 = vmatprep.subr.mxu0 0.0
    %349 = vmatpush1.msra.mxu0 0.0
    %350 = vmatprep.mubr.f32.mxu0 0.0
    %351 = vmatmul.mubr.f32.gmra.mrb[0].mxu0 %v284
    %v352 = vpop.f32.mrb[0].mxu0
    %v353 = vadd.f32 0.0, %v352
    %v354 = vpop.f32.mrb[0].mxu0
    %355 = vdwg.mxu0
    %v356 = vadd.f32 %v244, %v353
    %v357 = vmul.f32 %v356, 0.5
    %v358 = vtanh.pop %v357
    %v359 = vmul.f32 %v358, 0.5
    %v360 = vadd.f32 %v359, 0.5
    %v361 = vtanh.pop %v356
    %v362 = vmul.f32 %v360, 0.0
    %364 = vrot.lane.b32.xlu0 %v361, 64
    %v365 = vpop.permute.xlu0 %364
    %v367 = vmul.f32 %v360, %v365
    %369 = vrot.lane.b32.xlu0 %v367, 32
    %v370 = vpop.permute.xlu0 %369
    %v372 = vadd.f32 %v362, %v370
    %v373 = vtanh.pop %v372
    %375 = vrot.lane.b32.xlu0 %v373, 64
    %v376 = vpop.permute.xlu0 %375
    %v378 = vmul.f32 %v360, %v376
    %379 = vmatprep.subr.mxu0 0.0
    %380 = vmatpush1.msra.mxu0 %v260
    %381 = vmatprep.subr.mxu0 0.0
    %382 = vmatpush1.msra.mxu0 %v261
    %383 = vmatprep.subr.mxu0 0.0
    %384 = vmatpush1.msra.mxu0 %v262
    %385 = vmatprep.subr.mxu0 0.0
    %386 = vmatpush1.msra.mxu0 %v263
    %387 = vmatprep.subr.mxu0 0.0
    %388 = vmatpush1.msra.mxu0 0.0
    %389 = vmatprep.subr.mxu0 0.0
    %390 = vmatpush1.msra.mxu0 0.0
    %391 = vmatprep.subr.mxu0 0.0
    %392 = vmatpush1.msra.mxu0 0.0
    %393 = vmatprep.subr.mxu0 0.0
    %394 = vmatpush1.msra.mxu0 0.0
    %395 = vmatprep.subr.mxu0 0.0
    %396 = vmatpush1.msra.mxu0 0.0
    %397 = vmatprep.subr.mxu0 0.0
    %398 = vmatpush1.msra.mxu0 0.0
    %399 = vmatprep.subr.mxu0 0.0
    %400 = vmatpush1.msra.mxu0 0.0
    %401 = vmatprep.subr.mxu0 0.0
    %402 = vmatpush1.msra.mxu0 0.0
    %403 = vmatprep.subr.mxu0 0.0
    %404 = vmatpush1.msra.mxu0 0.0
    %405 = vmatprep.subr.mxu0 0.0
    %406 = vmatpush1.msra.mxu0 0.0
    %407 = vmatprep.subr.mxu0 0.0
    %408 = vmatpush1.msra.mxu0 0.0
    %409 = vmatprep.subr.mxu0 0.0
    %410 = vmatpush1.msra.mxu0 0.0
    %411 = vmatprep.subr.mxu0 0.0
    %412 = vmatpush1.msra.mxu0 0.0
    %413 = vmatprep.subr.mxu0 0.0
    %414 = vmatpush1.msra.mxu0 0.0
    %415 = vmatprep.subr.mxu0 0.0
    %416 = vmatpush1.msra.mxu0 0.0
    %417 = vmatprep.subr.mxu0 0.0
    %418 = vmatpush1.msra.mxu0 0.0
    %419 = vmatprep.subr.mxu0 0.0
    %420 = vmatpush1.msra.mxu0 0.0
    %421 = vmatprep.subr.mxu0 0.0
    %422 = vmatpush1.msra.mxu0 0.0
    %423 = vmatprep.subr.mxu0 0.0
    %424 = vmatpush1.msra.mxu0 0.0
    %425 = vmatprep.subr.mxu0 0.0
    %426 = vmatpush1.msra.mxu0 0.0
    %427 = vmatprep.subr.mxu0 0.0
    %428 = vmatpush1.msra.mxu0 0.0
    %429 = vmatprep.subr.mxu0 0.0
    %430 = vmatpush1.msra.mxu0 0.0
    %431 = vmatprep.subr.mxu0 0.0
    %432 = vmatpush1.msra.mxu0 0.0
    %433 = vmatprep.subr.mxu0 0.0
    %434 = vmatpush1.msra.mxu0 0.0
    %435 = vmatprep.subr.mxu0 0.0
    %436 = vmatpush1.msra.mxu0 0.0
    %437 = vmatprep.subr.mxu0 0.0
    %438 = vmatpush1.msra.mxu0 0.0
    %439 = vmatprep.subr.mxu0 0.0
    %440 = vmatpush1.msra.mxu0 0.0
    %441 = vmatprep.subr.mxu0 0.0
    %442 = vmatpush1.msra.mxu0 0.0
    %443 = vmatprep.mubr.f32.mxu0 0.0
    %444 = vmatmul.mubr.f32.gmra.mrb[0].mxu0 %v284
    %v445 = vpop.f32.mrb[0].mxu0
    %v446 = vadd.f32 0.0, %v445
    %v447 = vpop.f32.mrb[0].mxu0
    %448 = vdwg.mxu0
    %450 = vrot.lane.b32.xlu0 %v378, 32
    %v451 = vpop.permute.xlu0 %450
    %v452 = vsel %vm282, %v451, 0
    %454 = vmatprep.subr.mxu0 0.0
    %455 = vmatpush1.msra.mxu0 %v256
    %456 = vmatprep.subr.mxu0 0.0
    %457 = vmatpush1.msra.mxu0 %v257
    %458 = vmatprep.subr.mxu0 0.0
    %459 = vmatpush1.msra.mxu0 %v258
    %460 = vmatprep.subr.mxu0 0.0
    %461 = vmatpush1.msra.mxu0 %v259
    %462 = vmatprep.subr.mxu0 0.0
    %463 = vmatpush1.msra.mxu0 0.0
    %464 = vmatprep.subr.mxu0 0.0
    %465 = vmatpush1.msra.mxu0 0.0
    %466 = vmatprep.subr.mxu0 0.0
    %467 = vmatpush1.msra.mxu0 0.0
    %468 = vmatprep.subr.mxu0 0.0
    %469 = vmatpush1.msra.mxu0 0.0
    %470 = vmatprep.subr.mxu0 0.0
    %471 = vmatpush1.msra.mxu0 0.0
    %472 = vmatprep.subr.mxu0 0.0
    %473 = vmatpush1.msra.mxu0 0.0
    %474 = vmatprep.subr.mxu0 0.0
    %475 = vmatpush1.msra.mxu0 0.0
    %476 = vmatprep.subr.mxu0 0.0
    %477 = vmatpush1.msra.mxu0 0.0
    %478 = vmatprep.subr.mxu0 0.0
    %479 = vmatpush1.msra.mxu0 0.0
    %480 = vmatprep.subr.mxu0 0.0
    %481 = vmatpush1.msra.mxu0 0.0
    %482 = vmatprep.subr.mxu0 0.0
    %483 = vmatpush1.msra.mxu0 0.0
    %484 = vmatprep.subr.mxu0 0.0
    %485 = vmatpush1.msra.mxu0 0.0
    %486 = vmatprep.subr.mxu0 0.0
    %487 = vmatpush1.msra.mxu0 0.0
    %488 = vmatprep.subr.mxu0 0.0
    %489 = vmatpush1.msra.mxu0 0.0
    %490 = vmatprep.subr.mxu0 0.0
    %491 = vmatpush1.msra.mxu0 0.0
    %492 = vmatprep.subr.mxu0 0.0
    %493 = vmatpush1.msra.mxu0 0.0
    %494 = vmatprep.subr.mxu0 0.0
    %495 = vmatpush1.msra.mxu0 0.0
    %496 = vmatprep.subr.mxu0 0.0
    %497 = vmatpush1.msra.mxu0 0.0
    %498 = vmatprep.subr.mxu0 0.0
    %499 = vmatpush1.msra.mxu0 0.0
    %500 = vmatprep.subr.mxu0 0.0
    %501 = vmatpush1.msra.mxu0 0.0
    %502 = vmatprep.subr.mxu0 0.0
    %503 = vmatpush1.msra.mxu0 0.0
    %504 = vmatprep.subr.mxu0 0.0
    %505 = vmatpush1.msra.mxu0 0.0
    %506 = vmatprep.subr.mxu0 0.0
    %507 = vmatpush1.msra.mxu0 0.0
    %508 = vmatprep.subr.mxu0 0.0
    %509 = vmatpush1.msra.mxu0 0.0
    %510 = vmatprep.subr.mxu0 0.0
    %511 = vmatpush1.msra.mxu0 0.0
    %512 = vmatprep.subr.mxu0 0.0
    %513 = vmatpush1.msra.mxu0 0.0
    %514 = vmatprep.subr.mxu0 0.0
    %515 = vmatpush1.msra.mxu0 0.0
    %516 = vmatprep.subr.mxu0 0.0
    %517 = vmatpush1.msra.mxu0 0.0
    %518 = vmatprep.mubr.f32.mxu0 0.0
    %519 = vmatmul.mubr.f32.gmra.mrb[0].mxu0 %v452
    %v520 = vpop.f32.mrb[0].mxu0
    %v521 = vadd.f32 %v446, %v520
    %v522 = vpop.f32.mrb[0].mxu0
    %523 = vdwg.mxu0
    %v524 = vadd.f32 %v521, %v276
    %v525 = vmul.f32 %v524, 0.5
    %v526 = vtanh.pop %v525
    %v527 = vmul.f32 %v526, 0.5
    %v528 = vadd.f32 %v527, 0.5
    %v529 = vtanh.pop %v524
    %v530 = vmul.f32 %v528, 0.0
    %532 = vrot.lane.b32.xlu0 %v529, 64
    %v533 = vpop.permute.xlu0 %532
    %v535 = vmul.f32 %v528, %v533
    %537 = vrot.lane.b32.xlu0 %v535, 32
    %v538 = vpop.permute.xlu0 %537
    %v540 = vadd.f32 %v530, %v538
    %v541 = vtanh.pop %v540
    %543 = vrot.lane.b32.xlu0 %v541, 64
    %v544 = vpop.permute.xlu0 %543
    %v546 = vmul.f32 %v528, %v544
    %547 = vmatprep.subr.mxu0 0.0
    %548 = vmatpush1.msra.mxu0 %v268
    %549 = vmatprep.subr.mxu0 0.0
    %550 = vmatpush1.msra.mxu0 %v269
    %551 = vmatprep.subr.mxu0 0.0
    %552 = vmatpush1.msra.mxu0 %v270
    %553 = vmatprep.subr.mxu0 0.0
    %554 = vmatpush1.msra.mxu0 %v271
    %555 = vmatprep.subr.mxu0 0.0
    %556 = vmatpush1.msra.mxu0 0.0
    %557 = vmatprep.subr.mxu0 0.0
    %558 = vmatpush1.msra.mxu0 0.0
    %559 = vmatprep.subr.mxu0 0.0
    %560 = vmatpush1.msra.mxu0 0.0
    %561 = vmatprep.subr.mxu0 0.0
    %562 = vmatpush1.msra.mxu0 0.0
    %563 = vmatprep.subr.mxu0 0.0
    %564 = vmatpush1.msra.mxu0 0.0
    %565 = vmatprep.subr.mxu0 0.0
    %566 = vmatpush1.msra.mxu0 0.0
    %567 = vmatprep.subr.mxu0 0.0
    %568 = vmatpush1.msra.mxu0 0.0
    %569 = vmatprep.subr.mxu0 0.0
    %570 = vmatpush1.msra.mxu0 0.0
    %571 = vmatprep.subr.mxu0 0.0
    %572 = vmatpush1.msra.mxu0 0.0
    %573 = vmatprep.subr.mxu0 0.0
    %574 = vmatpush1.msra.mxu0 0.0
    %575 = vmatprep.subr.mxu0 0.0
    %576 = vmatpush1.msra.mxu0 0.0
    %577 = vmatprep.subr.mxu0 0.0
    %578 = vmatpush1.msra.mxu0 0.0
    %579 = vmatprep.subr.mxu0 0.0
    %580 = vmatpush1.msra.mxu0 0.0
    %581 = vmatprep.subr.mxu0 0.0
    %582 = vmatpush1.msra.mxu0 0.0
    %583 = vmatprep.subr.mxu0 0.0
    %584 = vmatpush1.msra.mxu0 0.0
    %585 = vmatprep.subr.mxu0 0.0
    %586 = vmatpush1.msra.mxu0 0.0
    %587 = vmatprep.subr.mxu0 0.0
    %588 = vmatpush1.msra.mxu0 0.0
    %589 = vmatprep.subr.mxu0 0.0
    %590 = vmatpush1.msra.mxu0 0.0
    %591 = vmatprep.subr.mxu0 0.0
    %592 = vmatpush1.msra.mxu0 0.0
    %593 = vmatprep.subr.mxu0 0.0
    %594 = vmatpush1.msra.mxu0 0.0
    %595 = vmatprep.subr.mxu0 0.0
    %596 = vmatpush1.msra.mxu0 0.0
    %597 = vmatprep.subr.mxu0 0.0
    %598 = vmatpush1.msra.mxu0 0.0
    %599 = vmatprep.subr.mxu0 0.0
    %600 = vmatpush1.msra.mxu0 0.0
    %601 = vmatprep.subr.mxu0 0.0
    %602 = vmatpush1.msra.mxu0 0.0
    %603 = vmatprep.subr.mxu0 0.0
    %604 = vmatpush1.msra.mxu0 0.0
    %605 = vmatprep.subr.mxu0 0.0
    %606 = vmatpush1.msra.mxu0 0.0
    %607 = vmatprep.subr.mxu0 0.0
    %608 = vmatpush1.msra.mxu0 0.0
    %609 = vmatprep.subr.mxu0 0.0
    %610 = vmatpush1.msra.mxu0 0.0
    %611 = vmatprep.mubr.f32.mxu0 0.0
    %612 = vmatmul.mubr.f32.gmra.mrb[0].mxu0 %v284
    %v613 = vpop.f32.mrb[0].mxu0
    %v614 = vadd.f32 0.0, %v613
    %v615 = vpop.f32.mrb[0].mxu0
    %616 = vdwg.mxu0
    %618 = vrot.lane.b32.xlu0 %v546, 32
    %v619 = vpop.permute.xlu0 %618
    %v620 = vsel %vm282, %v619, 0
    %622 = vmatprep.subr.mxu0 0.0
    %623 = vmatpush1.msra.mxu0 %v264
    %624 = vmatprep.subr.mxu0 0.0
    %625 = vmatpush1.msra.mxu0 %v265
    %626 = vmatprep.subr.mxu0 0.0
    %627 = vmatpush1.msra.mxu0 %v266
    %628 = vmatprep.subr.mxu0 0.0
    %629 = vmatpush1.msra.mxu0 %v267
    %630 = vmatprep.subr.mxu0 0.0
    %631 = vmatpush1.msra.mxu0 0.0
    %632 = vmatprep.subr.mxu0 0.0
    %633 = vmatpush1.msra.mxu0 0.0
    %634 = vmatprep.subr.mxu0 0.0
    %635 = vmatpush1.msra.mxu0 0.0
    %636 = vmatprep.subr.mxu0 0.0
    %637 = vmatpush1.msra.mxu0 0.0
    %638 = vmatprep.subr.mxu0 0.0
    %639 = vmatpush1.msra.mxu0 0.0
    %640 = vmatprep.subr.mxu0 0.0
    %641 = vmatpush1.msra.mxu0 0.0
    %642 = vmatprep.subr.mxu0 0.0
    %643 = vmatpush1.msra.mxu0 0.0
    %644 = vmatprep.subr.mxu0 0.0
    %645 = vmatpush1.msra.mxu0 0.0
    %646 = vmatprep.subr.mxu0 0.0
    %647 = vmatpush1.msra.mxu0 0.0
    %648 = vmatprep.subr.mxu0 0.0
    %649 = vmatpush1.msra.mxu0 0.0
    %650 = vmatprep.subr.mxu0 0.0
    %651 = vmatpush1.msra.mxu0 0.0
    %652 = vmatprep.subr.mxu0 0.0
    %653 = vmatpush1.msra.mxu0 0.0
    %654 = vmatprep.subr.mxu0 0.0
    %655 = vmatpush1.msra.mxu0 0.0
    %656 = vmatprep.subr.mxu0 0.0
    %657 = vmatpush1.msra.mxu0 0.0
    %658 = vmatprep.subr.mxu0 0.0
    %659 = vmatpush1.msra.mxu0 0.0
    %660 = vmatprep.subr.mxu0 0.0
    %661 = vmatpush1.msra.mxu0 0.0
    %662 = vmatprep.subr.mxu0 0.0
    %663 = vmatpush1.msra.mxu0 0.0
    %664 = vmatprep.subr.mxu0 0.0
    %665 = vmatpush1.msra.mxu0 0.0
    %666 = vmatprep.subr.mxu0 0.0
    %667 = vmatpush1.msra.mxu0 0.0
    %668 = vmatprep.subr.mxu0 0.0
    %669 = vmatpush1.msra.mxu0 0.0
    %670 = vmatprep.subr.mxu0 0.0
    %671 = vmatpush1.msra.mxu0 0.0
    %672 = vmatprep.subr.mxu0 0.0
    %673 = vmatpush1.msra.mxu0 0.0
    %674 = vmatprep.subr.mxu0 0.0
    %675 = vmatpush1.msra.mxu0 0.0
    %676 = vmatprep.subr.mxu0 0.0
    %677 = vmatpush1.msra.mxu0 0.0
    %678 = vmatprep.subr.mxu0 0.0
    %679 = vmatpush1.msra.mxu0 0.0
    %680 = vmatprep.subr.mxu0 0.0
    %681 = vmatpush1.msra.mxu0 0.0
    %682 = vmatprep.subr.mxu0 0.0
    %683 = vmatpush1.msra.mxu0 0.0
    %684 = vmatprep.subr.mxu0 0.0
    %685 = vmatpush1.msra.mxu0 0.0
    %686 = vmatprep.mubr.f32.mxu0 0.0
    %687 = vmatmul.mubr.f32.gmra.mrb[0].mxu0 %v620
    %v688 = vpop.f32.mrb[0].mxu0
    %v689 = vadd.f32 %v614, %v688
    %v690 = vpop.f32.mrb[0].mxu0
    %691 = vdwg.mxu0
    %v692 = vadd.f32 %v689, %v281
    %v693 = vmul.f32 %v692, 0.5
    %v694 = vtanh.pop %v693
    %v695 = vmul.f32 %v694, 0.5
    %v696 = vadd.f32 %v695, 0.5
    %v697 = vtanh.pop %v692
    %v698 = vmul.f32 %v696, 0.0
    %700 = vrot.lane.b32.xlu0 %v697, 64
    %v701 = vpop.permute.xlu0 %700
    %v703 = vmul.f32 %v696, %v701
    %705 = vrot.lane.b32.xlu0 %v703, 32
    %v706 = vpop.permute.xlu0 %705
    %v708 = vadd.f32 %v698, %v706
    %v709 = vtanh.pop %v708
    %711 = vrot.lane.b32.xlu0 %v709, 64
    %v712 = vpop.permute.xlu0 %711
    %v714 = vmul.f32 %v696, %v712
    %715 = vmatprep.subr.mxu0 0.0
    %716 = vmatpush1.msra.mxu0 %v252
    %717 = vmatprep.subr.mxu0 0.0
    %718 = vmatpush1.msra.mxu0 %v253
    %719 = vmatprep.subr.mxu0 0.0
    %720 = vmatpush1.msra.mxu0 %v254
    %721 = vmatprep.subr.mxu0 0.0
    %722 = vmatpush1.msra.mxu0 %v255
    %723 = vmatprep.subr.mxu0 0.0
    %724 = vmatpush1.msra.mxu0 0.0
    %725 = vmatprep.subr.mxu0 0.0
    %726 = vmatpush1.msra.mxu0 0.0
    %727 = vmatprep.subr.mxu0 0.0
    %728 = vmatpush1.msra.mxu0 0.0
    %729 = vmatprep.subr.mxu0 0.0
    %730 = vmatpush1.msra.mxu0 0.0
    %731 = vmatprep.subr.mxu0 0.0
    %732 = vmatpush1.msra.mxu0 0.0
    %733 = vmatprep.subr.mxu0 0.0
    %734 = vmatpush1.msra.mxu0 0.0
    %735 = vmatprep.subr.mxu0 0.0
    %736 = vmatpush1.msra.mxu0 0.0
    %737 = vmatprep.subr.mxu0 0.0
    %738 = vmatpush1.msra.mxu0 0.0
    %739 = vmatprep.subr.mxu0 0.0
    %740 = vmatpush1.msra.mxu0 0.0
    %741 = vmatprep.subr.mxu0 0.0
    %742 = vmatpush1.msra.mxu0 0.0
    %743 = vmatprep.subr.mxu0 0.0
    %744 = vmatpush1.msra.mxu0 0.0
    %745 = vmatprep.subr.mxu0 0.0
    %746 = vmatpush1.msra.mxu0 0.0
    %747 = vmatprep.subr.mxu0 0.0
    %748 = vmatpush1.msra.mxu0 0.0
    %749 = vmatprep.subr.mxu0 0.0
    %750 = vmatpush1.msra.mxu0 0.0
    %751 = vmatprep.subr.mxu0 0.0
    %752 = vmatpush1.msra.mxu0 0.0
    %753 = vmatprep.subr.mxu0 0.0
    %754 = vmatpush1.msra.mxu0 0.0
    %755 = vmatprep.subr.mxu0 0.0
    %756 = vmatpush1.msra.mxu0 0.0
    %757 = vmatprep.subr.mxu0 0.0
    %758 = vmatpush1.msra.mxu0 0.0
    %759 = vmatprep.subr.mxu0 0.0
    %760 = vmatpush1.msra.mxu0 0.0
    %761 = vmatprep.subr.mxu0 0.0
    %762 = vmatpush1.msra.mxu0 0.0
    %763 = vmatprep.subr.mxu0 0.0
    %764 = vmatpush1.msra.mxu0 0.0
    %765 = vmatprep.subr.mxu0 0.0
    %766 = vmatpush1.msra.mxu0 0.0
    %767 = vmatprep.subr.mxu0 0.0
    %768 = vmatpush1.msra.mxu0 0.0
    %769 = vmatprep.subr.mxu0 0.0
    %770 = vmatpush1.msra.mxu0 0.0
    %771 = vmatprep.subr.mxu0 0.0
    %772 = vmatpush1.msra.mxu0 0.0
    %773 = vmatprep.subr.mxu0 0.0
    %774 = vmatpush1.msra.mxu0 0.0
    %775 = vmatprep.subr.mxu0 0.0
    %776 = vmatpush1.msra.mxu0 0.0
    %777 = vmatprep.subr.mxu0 0.0
    %778 = vmatpush1.msra.mxu0 0.0
    %779 = vmatprep.mubr.f32.mxu0 0.0
    %780 = vmatmul.mubr.f32.gmra.mrb[0].mxu0 %v452
    %v781 = vpop.f32.mrb[0].mxu0
    %v782 = vadd.f32 0.0, %v781
    %v783 = vpop.f32.mrb[0].mxu0
    %784 = vdwg.mxu0
    %v785 = vadd.f32 %v245, %v782
    %v786 = vmul.f32 %v785, 0.5
    %v787 = vtanh.pop %v786
    %v788 = vmul.f32 %v787, 0.5
    %v789 = vadd.f32 %v788, 0.5
    %v790 = vtanh.pop %v785
    %v791 = vmul.f32 %v789, %v372
    %793 = vrot.lane.b32.xlu0 %v790, 64
    %v794 = vpop.permute.xlu0 %793
    %v796 = vmul.f32 %v789, %v794
    %798 = vrot.lane.b32.xlu0 %v796, 32
    %v799 = vpop.permute.xlu0 %798
    %v801 = vadd.f32 %v791, %v799
    %v802 = vtanh.pop %v801
    %804 = vrot.lane.b32.xlu0 %v802, 64
    %v805 = vpop.permute.xlu0 %804
    %v807 = vmul.f32 %v789, %v805
    %808 = vmatprep.subr.mxu0 0.0
    %809 = vmatpush1.msra.mxu0 %v260
    %810 = vmatprep.subr.mxu0 0.0
    %811 = vmatpush1.msra.mxu0 %v261
    %812 = vmatprep.subr.mxu0 0.0
    %813 = vmatpush1.msra.mxu0 %v262
    %814 = vmatprep.subr.mxu0 0.0
    %815 = vmatpush1.msra.mxu0 %v263
    %816 = vmatprep.subr.mxu0 0.0
    %817 = vmatpush1.msra.mxu0 0.0
    %818 = vmatprep.subr.mxu0 0.0
    %819 = vmatpush1.msra.mxu0 0.0
    %820 = vmatprep.subr.mxu0 0.0
    %821 = vmatpush1.msra.mxu0 0.0
    %822 = vmatprep.subr.mxu0 0.0
    %823 = vmatpush1.msra.mxu0 0.0
    %824 = vmatprep.subr.mxu0 0.0
    %825 = vmatpush1.msra.mxu0 0.0
    %826 = vmatprep.subr.mxu0 0.0
    %827 = vmatpush1.msra.mxu0 0.0
    %828 = vmatprep.subr.mxu0 0.0
    %829 = vmatpush1.msra.mxu0 0.0
    %830 = vmatprep.subr.mxu0 0.0
    %831 = vmatpush1.msra.mxu0 0.0
    %832 = vmatprep.subr.mxu0 0.0
    %833 = vmatpush1.msra.mxu0 0.0
    %834 = vmatprep.subr.mxu0 0.0
    %835 = vmatpush1.msra.mxu0 0.0
    %836 = vmatprep.subr.mxu0 0.0
    %837 = vmatpush1.msra.mxu0 0.0
    %838 = vmatprep.subr.mxu0 0.0
    %839 = vmatpush1.msra.mxu0 0.0
    %840 = vmatprep.subr.mxu0 0.0
    %841 = vmatpush1.msra.mxu0 0.0
    %842 = vmatprep.subr.mxu0 0.0
    %843 = vmatpush1.msra.mxu0 0.0
    %844 = vmatprep.subr.mxu0 0.0
    %845 = vmatpush1.msra.mxu0 0.0
    %846 = vmatprep.subr.mxu0 0.0
    %847 = vmatpush1.msra.mxu0 0.0
    %848 = vmatprep.subr.mxu0 0.0
    %849 = vmatpush1.msra.mxu0 0.0
    %850 = vmatprep.subr.mxu0 0.0
    %851 = vmatpush1.msra.mxu0 0.0
    %852 = vmatprep.subr.mxu0 0.0
    %853 = vmatpush1.msra.mxu0 0.0
    %854 = vmatprep.subr.mxu0 0.0
    %855 = vmatpush1.msra.mxu0 0.0
    %856 = vmatprep.subr.mxu0 0.0
    %857 = vmatpush1.msra.mxu0 0.0
    %858 = vmatprep.subr.mxu0 0.0
    %859 = vmatpush1.msra.mxu0 0.0
    %860 = vmatprep.subr.mxu0 0.0
    %861 = vmatpush1.msra.mxu0 0.0
    %862 = vmatprep.subr.mxu0 0.0
    %863 = vmatpush1.msra.mxu0 0.0
    %864 = vmatprep.subr.mxu0 0.0
    %865 = vmatpush1.msra.mxu0 0.0
    %866 = vmatprep.subr.mxu0 0.0
    %867 = vmatpush1.msra.mxu0 0.0
    %868 = vmatprep.subr.mxu0 0.0
    %869 = vmatpush1.msra.mxu0 0.0
    %870 = vmatprep.subr.mxu0 0.0
    %871 = vmatpush1.msra.mxu0 0.0
    %872 = vmatprep.mubr.f32.mxu0 0.0
    %873 = vmatmul.mubr.f32.gmra.mrb[0].mxu0 %v620
    %v874 = vpop.f32.mrb[0].mxu0
    %v875 = vadd.f32 0.0, %v874
    %v876 = vpop.f32.mrb[0].mxu0
    %877 = vdwg.mxu0
    %879 = vrot.lane.b32.xlu0 %v807, 32
    %v880 = vpop.permute.xlu0 %879
    %v881 = vsel %vm282, %v880, 0
    %883 = vmatprep.subr.mxu0 0.0
    %884 = vmatpush1.msra.mxu0 %v256
    %885 = vmatprep.subr.mxu0 0.0
    %886 = vmatpush1.msra.mxu0 %v257
    %887 = vmatprep.subr.mxu0 0.0
    %888 = vmatpush1.msra.mxu0 %v258
    %889 = vmatprep.subr.mxu0 0.0
    %890 = vmatpush1.msra.mxu0 %v259
    %891 = vmatprep.subr.mxu0 0.0
    %892 = vmatpush1.msra.mxu0 0.0
    %893 = vmatprep.subr.mxu0 0.0
    %894 = vmatpush1.msra.mxu0 0.0
    %895 = vmatprep.subr.mxu0 0.0
    %896 = vmatpush1.msra.mxu0 0.0
    %897 = vmatprep.subr.mxu0 0.0
    %898 = vmatpush1.msra.mxu0 0.0
    %899 = vmatprep.subr.mxu0 0.0
    %900 = vmatpush1.msra.mxu0 0.0
    %901 = vmatprep.subr.mxu0 0.0
    %902 = vmatpush1.msra.mxu0 0.0
    %903 = vmatprep.subr.mxu0 0.0
    %904 = vmatpush1.msra.mxu0 0.0
    %905 = vmatprep.subr.mxu0 0.0
    %906 = vmatpush1.msra.mxu0 0.0
    %907 = vmatprep.subr.mxu0 0.0
    %908 = vmatpush1.msra.mxu0 0.0
    %909 = vmatprep.subr.mxu0 0.0
    %910 = vmatpush1.msra.mxu0 0.0
    %911 = vmatprep.subr.mxu0 0.0
    %912 = vmatpush1.msra.mxu0 0.0
    %913 = vmatprep.subr.mxu0 0.0
    %914 = vmatpush1.msra.mxu0 0.0
    %915 = vmatprep.subr.mxu0 0.0
    %916 = vmatpush1.msra.mxu0 0.0
    %917 = vmatprep.subr.mxu0 0.0
    %918 = vmatpush1.msra.mxu0 0.0
    %919 = vmatprep.subr.mxu0 0.0
    %920 = vmatpush1.msra.mxu0 0.0
    %921 = vmatprep.subr.mxu0 0.0
    %922 = vmatpush1.msra.mxu0 0.0
    %923 = vmatprep.subr.mxu0 0.0
    %924 = vmatpush1.msra.mxu0 0.0
    %925 = vmatprep.subr.mxu0 0.0
    %926 = vmatpush1.msra.mxu0 0.0
    %927 = vmatprep.subr.mxu0 0.0
    %928 = vmatpush1.msra.mxu0 0.0
    %929 = vmatprep.subr.mxu0 0.0
    %930 = vmatpush1.msra.mxu0 0.0
    %931 = vmatprep.subr.mxu0 0.0
    %932 = vmatpush1.msra.mxu0 0.0
    %933 = vmatprep.subr.mxu0 0.0
    %934 = vmatpush1.msra.mxu0 0.0
    %935 = vmatprep.subr.mxu0 0.0
    %936 = vmatpush1.msra.mxu0 0.0
    %937 = vmatprep.subr.mxu0 0.0
    %938 = vmatpush1.msra.mxu0 0.0
    %939 = vmatprep.subr.mxu0 0.0
    %940 = vmatpush1.msra.mxu0 0.0
    %941 = vmatprep.subr.mxu0 0.0
    %942 = vmatpush1.msra.mxu0 0.0
    %943 = vmatprep.subr.mxu0 0.0
    %944 = vmatpush1.msra.mxu0 0.0
    %945 = vmatprep.subr.mxu0 0.0
    %946 = vmatpush1.msra.mxu0 0.0
    %947 = vmatprep.mubr.f32.mxu0 0.0
    %948 = vmatmul.mubr.f32.gmra.mrb[0].mxu0 %v881
    %v949 = vpop.f32.mrb[0].mxu0
    %v950 = vadd.f32 %v875, %v949
    %v951 = vpop.f32.mrb[0].mxu0
    %952 = vdwg.mxu0
    %v953 = vadd.f32 %v950, %v276
    %v954 = vmul.f32 %v953, 0.5
    %v955 = vtanh.pop %v954
    %v956 = vmul.f32 %v955, 0.5
    %v957 = vadd.f32 %v956, 0.5
    %v958 = vtanh.pop %v953
    %v959 = vmul.f32 %v957, %v540
    %961 = vrot.lane.b32.xlu0 %v958, 64
    %v962 = vpop.permute.xlu0 %961
    %v964 = vmul.f32 %v957, %v962
    %966 = vrot.lane.b32.xlu0 %v964, 32
    %v967 = vpop.permute.xlu0 %966
    %v969 = vadd.f32 %v959, %v967
    %v970 = vtanh.pop %v969
    %972 = vrot.lane.b32.xlu0 %v970, 64
    %v973 = vpop.permute.xlu0 %972
    %v975 = vmul.f32 %v957, %v973
    %977 = vrot.lane.b32.xlu0 %v714, 32
    %v978 = vpop.permute.xlu0 %977
    %v979 = vsel %vm282, %v978, 0
    %981 = vmatprep.subr.mxu0 0.0
    %982 = vmatpush1.msra.mxu0 %v268
    %983 = vmatprep.subr.mxu0 0.0
    %984 = vmatpush1.msra.mxu0 %v269
    %985 = vmatprep.subr.mxu0 0.0
    %986 = vmatpush1.msra.mxu0 %v270
    %987 = vmatprep.subr.mxu0 0.0
    %988 = vmatpush1.msra.mxu0 %v271
    %989 = vmatprep.subr.mxu0 0.0
    %990 = vmatpush1.msra.mxu0 0.0
    %991 = vmatprep.subr.mxu0 0.0
    %992 = vmatpush1.msra.mxu0 0.0
    %993 = vmatprep.subr.mxu0 0.0
    %994 = vmatpush1.msra.mxu0 0.0
    %995 = vmatprep.subr.mxu0 0.0
    %996 = vmatpush1.msra.mxu0 0.0
    %997 = vmatprep.subr.mxu0 0.0
    %998 = vmatpush1.msra.mxu0 0.0
    %999 = vmatprep.subr.mxu0 0.0
    %1000 = vmatpush1.msra.mxu0 0.0
    %1001 = vmatprep.subr.mxu0 0.0
    %1002 = vmatpush1.msra.mxu0 0.0
    %1003 = vmatprep.subr.mxu0 0.0
    %1004 = vmatpush1.msra.mxu0 0.0
    %1005 = vmatprep.subr.mxu0 0.0
    %1006 = vmatpush1.msra.mxu0 0.0
    %1007 = vmatprep.subr.mxu0 0.0
    %1008 = vmatpush1.msra.mxu0 0.0
    %1009 = vmatprep.subr.mxu0 0.0
    %1010 = vmatpush1.msra.mxu0 0.0
    %1011 = vmatprep.subr.mxu0 0.0
    %1012 = vmatpush1.msra.mxu0 0.0
    %1013 = vmatprep.subr.mxu0 0.0
    %1014 = vmatpush1.msra.mxu0 0.0
    %1015 = vmatprep.subr.mxu0 0.0
    %1016 = vmatpush1.msra.mxu0 0.0
    %1017 = vmatprep.subr.mxu0 0.0
    %1018 = vmatpush1.msra.mxu0 0.0
    %1019 = vmatprep.subr.mxu0 0.0
    %1020 = vmatpush1.msra.mxu0 0.0
    %1021 = vmatprep.subr.mxu0 0.0
    %1022 = vmatpush1.msra.mxu0 0.0
    %1023 = vmatprep.subr.mxu0 0.0
    %1024 = vmatpush1.msra.mxu0 0.0
    %1025 = vmatprep.subr.mxu0 0.0
    %1026 = vmatpush1.msra.mxu0 0.0
    %1027 = vmatprep.subr.mxu0 0.0
    %1028 = vmatpush1.msra.mxu0 0.0
    %1029 = vmatprep.subr.mxu0 0.0
    %1030 = vmatpush1.msra.mxu0 0.0
    %1031 = vmatprep.subr.mxu0 0.0
    %1032 = vmatpush1.msra.mxu0 0.0
    %1033 = vmatprep.subr.mxu0 0.0
    %1034 = vmatpush1.msra.mxu0 0.0
    %1035 = vmatprep.subr.mxu0 0.0
    %1036 = vmatpush1.msra.mxu0 0.0
    %1037 = vmatprep.subr.mxu0 0.0
    %1038 = vmatpush1.msra.mxu0 0.0
    %1039 = vmatprep.subr.mxu0 0.0
    %1040 = vmatpush1.msra.mxu0 0.0
    %1041 = vmatprep.subr.mxu0 0.0
    %1042 = vmatpush1.msra.mxu0 0.0
    %1043 = vmatprep.subr.mxu0 0.0
    %1044 = vmatpush1.msra.mxu0 0.0
    %1045 = vmatprep.mubr.f32.mxu0 0.0
    %1046 = vmatmul.mubr.f32.gmra.mrb[0].mxu0 %v979
    %v1047 = vpop.f32.mrb[0].mxu0
    %v1048 = vadd.f32 0.0, %v1047
    %v1049 = vpop.f32.mrb[0].mxu0
    %1050 = vdwg.mxu0
    %1052 = vrot.lane.b32.xlu0 %v975, 32
    %v1053 = vpop.permute.xlu0 %1052
    %v1054 = vsel %vm282, %v1053, 0
    %1056 = vmatprep.subr.mxu0 0.0
    %1057 = vmatpush1.msra.mxu0 %v264
    %1058 = vmatprep.subr.mxu0 0.0
    %1059 = vmatpush1.msra.mxu0 %v265
    %1060 = vmatprep.subr.mxu0 0.0
    %1061 = vmatpush1.msra.mxu0 %v266
    %1062 = vmatprep.subr.mxu0 0.0
    %1063 = vmatpush1.msra.mxu0 %v267
    %1064 = vmatprep.subr.mxu0 0.0
    %1065 = vmatpush1.msra.mxu0 0.0
    %1066 = vmatprep.subr.mxu0 0.0
    %1067 = vmatpush1.msra.mxu0 0.0
    %1068 = vmatprep.subr.mxu0 0.0
    %1069 = vmatpush1.msra.mxu0 0.0
    %1070 = vmatprep.subr.mxu0 0.0
    %1071 = vmatpush1.msra.mxu0 0.0
    %1072 = vmatprep.subr.mxu0 0.0
    %1073 = vmatpush1.msra.mxu0 0.0
    %1074 = vmatprep.subr.mxu0 0.0
    %1075 = vmatpush1.msra.mxu0 0.0
    %1076 = vmatprep.subr.mxu0 0.0
    %1077 = vmatpush1.msra.mxu0 0.0
    %1078 = vmatprep.subr.mxu0 0.0
    %1079 = vmatpush1.msra.mxu0 0.0
    %1080 = vmatprep.subr.mxu0 0.0
    %1081 = vmatpush1.msra.mxu0 0.0
    %1082 = vmatprep.subr.mxu0 0.0
    %1083 = vmatpush1.msra.mxu0 0.0
    %1084 = vmatprep.subr.mxu0 0.0
    %1085 = vmatpush1.msra.mxu0 0.0
    %1086 = vmatprep.subr.mxu0 0.0
    %1087 = vmatpush1.msra.mxu0 0.0
    %1088 = vmatprep.subr.mxu0 0.0
    %1089 = vmatpush1.msra.mxu0 0.0
    %1090 = vmatprep.subr.mxu0 0.0
    %1091 = vmatpush1.msra.mxu0 0.0
    %1092 = vmatprep.subr.mxu0 0.0
    %1093 = vmatpush1.msra.mxu0 0.0
    %1094 = vmatprep.subr.mxu0 0.0
    %1095 = vmatpush1.msra.mxu0 0.0
    %1096 = vmatprep.subr.mxu0 0.0
    %1097 = vmatpush1.msra.mxu0 0.0
    %1098 = vmatprep.subr.mxu0 0.0
    %1099 = vmatpush1.msra.mxu0 0.0
    %1100 = vmatprep.subr.mxu0 0.0
    %1101 = vmatpush1.msra.mxu0 0.0
    %1102 = vmatprep.subr.mxu0 0.0
    %1103 = vmatpush1.msra.mxu0 0.0
    %1104 = vmatprep.subr.mxu0 0.0
    %1105 = vmatpush1.msra.mxu0 0.0
    %1106 = vmatprep.subr.mxu0 0.0
    %1107 = vmatpush1.msra.mxu0 0.0
    %1108 = vmatprep.subr.mxu0 0.0
    %1109 = vmatpush1.msra.mxu0 0.0
    %1110 = vmatprep.subr.mxu0 0.0
    %1111 = vmatpush1.msra.mxu0 0.0
    %1112 = vmatprep.subr.mxu0 0.0
    %1113 = vmatpush1.msra.mxu0 0.0
    %1114 = vmatprep.subr.mxu0 0.0
    %1115 = vmatpush1.msra.mxu0 0.0
    %1116 = vmatprep.subr.mxu0 0.0
    %1117 = vmatpush1.msra.mxu0 0.0
    %1118 = vmatprep.subr.mxu0 0.0
    %1119 = vmatpush1.msra.mxu0 0.0
    %1120 = vmatprep.mubr.f32.mxu0 0.0
    %1121 = vmatmul.mubr.f32.gmra.mrb[0].mxu0 %v1054
    %v1122 = vpop.f32.mrb[0].mxu0
    %v1123 = vadd.f32 %v1048, %v1122
    %v1124 = vpop.f32.mrb[0].mxu0
    %1125 = vdwg.mxu0
    %v1126 = vadd.f32 %v1123, %v281
    %v1127 = vmul.f32 %v1126, 0.5
    %v1128 = vtanh.pop %v1127
    %v1129 = vmul.f32 %v1128, 0.5
    %v1130 = vadd.f32 %v1129, 0.5
    %v1131 = vtanh.pop %v1126
    %v1132 = vmul.f32 %v1130, %v708
    %1134 = vrot.lane.b32.xlu0 %v1131, 64
    %v1135 = vpop.permute.xlu0 %1134
    %v1137 = vmul.f32 %v1130, %v1135
    %1139 = vrot.lane.b32.xlu0 %v1137, 32
    %v1140 = vpop.permute.xlu0 %1139
    %v1142 = vadd.f32 %v1132, %v1140
    %v1143 = vtanh.pop %v1142
    %1145 = vrot.lane.b32.xlu0 %v1143, 64
    %v1146 = vpop.permute.xlu0 %1145
    %v1148 = vmul.f32 %v1130, %v1146
    %1149 = vmatprep.subr.mxu0 0.0
    %1150 = vmatpush1.msra.mxu0 %v252
    %1151 = vmatprep.subr.mxu0 0.0
    %1152 = vmatpush1.msra.mxu0 %v253
    %1153 = vmatprep.subr.mxu0 0.0
    %1154 = vmatpush1.msra.mxu0 %v254
    %1155 = vmatprep.subr.mxu0 0.0
    %1156 = vmatpush1.msra.mxu0 %v255
    %1157 = vmatprep.subr.mxu0 0.0
    %1158 = vmatpush1.msra.mxu0 0.0
    %1159 = vmatprep.subr.mxu0 0.0
    %1160 = vmatpush1.msra.mxu0 0.0
    %1161 = vmatprep.subr.mxu0 0.0
    %1162 = vmatpush1.msra.mxu0 0.0
    %1163 = vmatprep.subr.mxu0 0.0
    %1164 = vmatpush1.msra.mxu0 0.0
    %1165 = vmatprep.subr.mxu0 0.0
    %1166 = vmatpush1.msra.mxu0 0.0
    %1167 = vmatprep.subr.mxu0 0.0
    %1168 = vmatpush1.msra.mxu0 0.0
    %1169 = vmatprep.subr.mxu0 0.0
    %1170 = vmatpush1.msra.mxu0 0.0
    %1171 = vmatprep.subr.mxu0 0.0
    %1172 = vmatpush1.msra.mxu0 0.0
    %1173 = vmatprep.subr.mxu0 0.0
    %1174 = vmatpush1.msra.mxu0 0.0
    %1175 = vmatprep.subr.mxu0 0.0
    %1176 = vmatpush1.msra.mxu0 0.0
    %1177 = vmatprep.subr.mxu0 0.0
    %1178 = vmatpush1.msra.mxu0 0.0
    %1179 = vmatprep.subr.mxu0 0.0
    %1180 = vmatpush1.msra.mxu0 0.0
    %1181 = vmatprep.subr.mxu0 0.0
    %1182 = vmatpush1.msra.mxu0 0.0
    %1183 = vmatprep.subr.mxu0 0.0
    %1184 = vmatpush1.msra.mxu0 0.0
    %1185 = vmatprep.subr.mxu0 0.0
    %1186 = vmatpush1.msra.mxu0 0.0
    %1187 = vmatprep.subr.mxu0 0.0
    %1188 = vmatpush1.msra.mxu0 0.0
    %1189 = vmatprep.subr.mxu0 0.0
    %1190 = vmatpush1.msra.mxu0 0.0
    %1191 = vmatprep.subr.mxu0 0.0
    %1192 = vmatpush1.msra.mxu0 0.0
    %1193 = vmatprep.subr.mxu0 0.0
    %1194 = vmatpush1.msra.mxu0 0.0
    %1195 = vmatprep.subr.mxu0 0.0
    %1196 = vmatpush1.msra.mxu0 0.0
    %1197 = vmatprep.subr.mxu0 0.0
    %1198 = vmatpush1.msra.mxu0 0.0
    %1199 = vmatprep.subr.mxu0 0.0
    %1200 = vmatpush1.msra.mxu0 0.0
    %1201 = vmatprep.subr.mxu0 0.0
    %1202 = vmatpush1.msra.mxu0 0.0
    %1203 = vmatprep.subr.mxu0 0.0
    %1204 = vmatpush1.msra.mxu0 0.0
    %1205 = vmatprep.subr.mxu0 0.0
    %1206 = vmatpush1.msra.mxu0 0.0
    %1207 = vmatprep.subr.mxu0 0.0
    %1208 = vmatpush1.msra.mxu0 0.0
    %1209 = vmatprep.subr.mxu0 0.0
    %1210 = vmatpush1.msra.mxu0 0.0
    %1211 = vmatprep.subr.mxu0 0.0
    %1212 = vmatpush1.msra.mxu0 0.0
    %1213 = vmatprep.mubr.f32.mxu0 0.0
    %1214 = vmatmul.mubr.f32.gmra.mrb[0].mxu0 %v881
    %v1215 = vpop.f32.mrb[0].mxu0
    %v1216 = vadd.f32 0.0, %v1215
    %v1217 = vpop.f32.mrb[0].mxu0
    %1218 = vdwg.mxu0
    %v1219 = vadd.f32 %v246, %v1216
    %v1220 = vmul.f32 %v1219, 0.5
    %v1221 = vtanh.pop %v1220
    %v1222 = vmul.f32 %v1221, 0.5
    %v1223 = vadd.f32 %v1222, 0.5
    %v1224 = vtanh.pop %v1219
    %v1225 = vmul.f32 %v1223, %v801
    %1227 = vrot.lane.b32.xlu0 %v1224, 64
    %v1228 = vpop.permute.xlu0 %1227
    %v1230 = vmul.f32 %v1223, %v1228
    %1232 = vrot.lane.b32.xlu0 %v1230, 32
    %v1233 = vpop.permute.xlu0 %1232
    %v1235 = vadd.f32 %v1225, %v1233
    %v1236 = vtanh.pop %v1235
    %1238 = vrot.lane.b32.xlu0 %v1236, 64
    %v1239 = vpop.permute.xlu0 %1238
    %v1241 = vmul.f32 %v1223, %v1239
    %1242 = vmatprep.subr.mxu0 0.0
    %1243 = vmatpush1.msra.mxu0 %v260
    %1244 = vmatprep.subr.mxu0 0.0
    %1245 = vmatpush1.msra.mxu0 %v261
    %1246 = vmatprep.subr.mxu0 0.0
    %1247 = vmatpush1.msra.mxu0 %v262
    %1248 = vmatprep.subr.mxu0 0.0
    %1249 = vmatpush1.msra.mxu0 %v263
    %1250 = vmatprep.subr.mxu0 0.0
    %1251 = vmatpush1.msra.mxu0 0.0
    %1252 = vmatprep.subr.mxu0 0.0
    %1253 = vmatpush1.msra.mxu0 0.0
    %1254 = vmatprep.subr.mxu0 0.0
    %1255 = vmatpush1.msra.mxu0 0.0
    %1256 = vmatprep.subr.mxu0 0.0
    %1257 = vmatpush1.msra.mxu0 0.0
    %1258 = vmatprep.subr.mxu0 0.0
    %1259 = vmatpush1.msra.mxu0 0.0
    %1260 = vmatprep.subr.mxu0 0.0
    %1261 = vmatpush1.msra.mxu0 0.0
    %1262 = vmatprep.subr.mxu0 0.0
    %1263 = vmatpush1.msra.mxu0 0.0
    %1264 = vmatprep.subr.mxu0 0.0
    %1265 = vmatpush1.msra.mxu0 0.0
    %1266 = vmatprep.subr.mxu0 0.0
    %1267 = vmatpush1.msra.mxu0 0.0
    %1268 = vmatprep.subr.mxu0 0.0
    %1269 = vmatpush1.msra.mxu0 0.0
    %1270 = vmatprep.subr.mxu0 0.0
    %1271 = vmatpush1.msra.mxu0 0.0
    %1272 = vmatprep.subr.mxu0 0.0
    %1273 = vmatpush1.msra.mxu0 0.0
    %1274 = vmatprep.subr.mxu0 0.0
    %1275 = vmatpush1.msra.mxu0 0.0
    %1276 = vmatprep.subr.mxu0 0.0
    %1277 = vmatpush1.msra.mxu0 0.0
    %1278 = vmatprep.subr.mxu0 0.0
    %1279 = vmatpush1.msra.mxu0 0.0
    %1280 = vmatprep.subr.mxu0 0.0
    %1281 = vmatpush1.msra.mxu0 0.0
    %1282 = vmatprep.subr.mxu0 0.0
    %1283 = vmatpush1.msra.mxu0 0.0
    %1284 = vmatprep.subr.mxu0 0.0
    %1285 = vmatpush1.msra.mxu0 0.0
    %1286 = vmatprep.subr.mxu0 0.0
    %1287 = vmatpush1.msra.mxu0 0.0
    %1288 = vmatprep.subr.mxu0 0.0
    %1289 = vmatpush1.msra.mxu0 0.0
    %1290 = vmatprep.subr.mxu0 0.0
    %1291 = vmatpush1.msra.mxu0 0.0
    %1292 = vmatprep.subr.mxu0 0.0
    %1293 = vmatpush1.msra.mxu0 0.0
    %1294 = vmatprep.subr.mxu0 0.0
    %1295 = vmatpush1.msra.mxu0 0.0
    %1296 = vmatprep.subr.mxu0 0.0
    %1297 = vmatpush1.msra.mxu0 0.0
    %1298 = vmatprep.subr.mxu0 0.0
    %1299 = vmatpush1.msra.mxu0 0.0
    %1300 = vmatprep.subr.mxu0 0.0
    %1301 = vmatpush1.msra.mxu0 0.0
    %1302 = vmatprep.subr.mxu0 0.0
    %1303 = vmatpush1.msra.mxu0 0.0
    %1304 = vmatprep.subr.mxu0 0.0
    %1305 = vmatpush1.msra.mxu0 0.0
    %1306 = vmatprep.mubr.f32.mxu0 0.0
    %1307 = vmatmul.mubr.f32.gmra.mrb[0].mxu0 %v1054
    %v1308 = vpop.f32.mrb[0].mxu0
    %v1309 = vadd.f32 0.0, %v1308
    %v1310 = vpop.f32.mrb[0].mxu0
    %1311 = vdwg.mxu0
    %1313 = vrot.lane.b32.xlu0 %v1241, 32
    %v1314 = vpop.permute.xlu0 %1313
    %v1315 = vsel %vm282, %v1314, 0
    %1317 = vmatprep.subr.mxu0 0.0
    %1318 = vmatpush1.msra.mxu0 %v256
    %1319 = vmatprep.subr.mxu0 0.0
    %1320 = vmatpush1.msra.mxu0 %v257
    %1321 = vmatprep.subr.mxu0 0.0
    %1322 = vmatpush1.msra.mxu0 %v258
    %1323 = vmatprep.subr.mxu0 0.0
    %1324 = vmatpush1.msra.mxu0 %v259
    %1325 = vmatprep.subr.mxu0 0.0
    %1326 = vmatpush1.msra.mxu0 0.0
    %1327 = vmatprep.subr.mxu0 0.0
    %1328 = vmatpush1.msra.mxu0 0.0
    %1329 = vmatprep.subr.mxu0 0.0
    %1330 = vmatpush1.msra.mxu0 0.0
    %1331 = vmatprep.subr.mxu0 0.0
    %1332 = vmatpush1.msra.mxu0 0.0
    %1333 = vmatprep.subr.mxu0 0.0
    %1334 = vmatpush1.msra.mxu0 0.0
    %1335 = vmatprep.subr.mxu0 0.0
    %1336 = vmatpush1.msra.mxu0 0.0
    %1337 = vmatprep.subr.mxu0 0.0
    %1338 = vmatpush1.msra.mxu0 0.0
    %1339 = vmatprep.subr.mxu0 0.0
    %1340 = vmatpush1.msra.mxu0 0.0
    %1341 = vmatprep.subr.mxu0 0.0
    %1342 = vmatpush1.msra.mxu0 0.0
    %1343 = vmatprep.subr.mxu0 0.0
    %1344 = vmatpush1.msra.mxu0 0.0
    %1345 = vmatprep.subr.mxu0 0.0
    %1346 = vmatpush1.msra.mxu0 0.0
    %1347 = vmatprep.subr.mxu0 0.0
    %1348 = vmatpush1.msra.mxu0 0.0
    %1349 = vmatprep.subr.mxu0 0.0
    %1350 = vmatpush1.msra.mxu0 0.0
    %1351 = vmatprep.subr.mxu0 0.0
    %1352 = vmatpush1.msra.mxu0 0.0
    %1353 = vmatprep.subr.mxu0 0.0
    %1354 = vmatpush1.msra.mxu0 0.0
    %1355 = vmatprep.subr.mxu0 0.0
    %1356 = vmatpush1.msra.mxu0 0.0
    %1357 = vmatprep.subr.mxu0 0.0
    %1358 = vmatpush1.msra.mxu0 0.0
    %1359 = vmatprep.subr.mxu0 0.0
    %1360 = vmatpush1.msra.mxu0 0.0
    %1361 = vmatprep.subr.mxu0 0.0
    %1362 = vmatpush1.msra.mxu0 0.0
    %1363 = vmatprep.subr.mxu0 0.0
    %1364 = vmatpush1.msra.mxu0 0.0
    %1365 = vmatprep.subr.mxu0 0.0
    %1366 = vmatpush1.msra.mxu0 0.0
    %1367 = vmatprep.subr.mxu0 0.0
    %1368 = vmatpush1.msra.mxu0 0.0
    %1369 = vmatprep.subr.mxu0 0.0
    %1370 = vmatpush1.msra.mxu0 0.0
    %1371 = vmatprep.subr.mxu0 0.0
    %1372 = vmatpush1.msra.mxu0 0.0
    %1373 = vmatprep.subr.mxu0 0.0
    %1374 = vmatpush1.msra.mxu0 0.0
    %1375 = vmatprep.subr.mxu0 0.0
    %1376 = vmatpush1.msra.mxu0 0.0
    %1377 = vmatprep.subr.mxu0 0.0
    %1378 = vmatpush1.msra.mxu0 0.0
    %1379 = vmatprep.subr.mxu0 0.0
    %1380 = vmatpush1.msra.mxu0 0.0
    %1381 = vmatprep.mubr.f32.mxu0 0.0
    %1382 = vmatmul.mubr.f32.gmra.mrb[0].mxu0 %v1315
    %v1383 = vpop.f32.mrb[0].mxu0
    %v1384 = vadd.f32 %v1309, %v1383
    %v1385 = vpop.f32.mrb[0].mxu0
    %1386 = vdwg.mxu0
    %v1387 = vadd.f32 %v1384, %v276
    %v1388 = vmul.f32 %v1387, 0.5
    %v1389 = vtanh.pop %v1388
    %v1390 = vmul.f32 %v1389, 0.5
    %v1391 = vadd.f32 %v1390, 0.5
    %v1392 = vtanh.pop %v1387
    %v1393 = vmul.f32 %v1391, %v969
    %1395 = vrot.lane.b32.xlu0 %v1392, 64
    %v1396 = vpop.permute.xlu0 %1395
    %v1398 = vmul.f32 %v1391, %v1396
    %1400 = vrot.lane.b32.xlu0 %v1398, 32
    %v1401 = vpop.permute.xlu0 %1400
    %v1403 = vadd.f32 %v1393, %v1401
    %v1404 = vtanh.pop %v1403
    %1406 = vrot.lane.b32.xlu0 %v1404, 64
    %v1407 = vpop.permute.xlu0 %1406
    %v1409 = vmul.f32 %v1391, %v1407
    %1411 = vrot.lane.b32.xlu0 %v1148, 32
    %v1412 = vpop.permute.xlu0 %1411
    %v1413 = vsel %vm282, %v1412, 0
    %1415 = vmatprep.subr.mxu0 0.0
    %1416 = vmatpush1.msra.mxu0 %v268
    %1417 = vmatprep.subr.mxu0 0.0
    %1418 = vmatpush1.msra.mxu0 %v269
    %1419 = vmatprep.subr.mxu0 0.0
    %1420 = vmatpush1.msra.mxu0 %v270
    %1421 = vmatprep.subr.mxu0 0.0
    %1422 = vmatpush1.msra.mxu0 %v271
    %1423 = vmatprep.subr.mxu0 0.0
    %1424 = vmatpush1.msra.mxu0 0.0
    %1425 = vmatprep.subr.mxu0 0.0
    %1426 = vmatpush1.msra.mxu0 0.0
    %1427 = vmatprep.subr.mxu0 0.0
    %1428 = vmatpush1.msra.mxu0 0.0
    %1429 = vmatprep.subr.mxu0 0.0
    %1430 = vmatpush1.msra.mxu0 0.0
    %1431 = vmatprep.subr.mxu0 0.0
    %1432 = vmatpush1.msra.mxu0 0.0
    %1433 = vmatprep.subr.mxu0 0.0
    %1434 = vmatpush1.msra.mxu0 0.0
    %1435 = vmatprep.subr.mxu0 0.0
    %1436 = vmatpush1.msra.mxu0 0.0
    %1437 = vmatprep.subr.mxu0 0.0
    %1438 = vmatpush1.msra.mxu0 0.0
    %1439 = vmatprep.subr.mxu0 0.0
    %1440 = vmatpush1.msra.mxu0 0.0
    %1441 = vmatprep.subr.mxu0 0.0
    %1442 = vmatpush1.msra.mxu0 0.0
    %1443 = vmatprep.subr.mxu0 0.0
    %1444 = vmatpush1.msra.mxu0 0.0
    %1445 = vmatprep.subr.mxu0 0.0
    %1446 = vmatpush1.msra.mxu0 0.0
    %1447 = vmatprep.subr.mxu0 0.0
    %1448 = vmatpush1.msra.mxu0 0.0
    %1449 = vmatprep.subr.mxu0 0.0
    %1450 = vmatpush1.msra.mxu0 0.0
    %1451 = vmatprep.subr.mxu0 0.0
    %1452 = vmatpush1.msra.mxu0 0.0
    %1453 = vmatprep.subr.mxu0 0.0
    %1454 = vmatpush1.msra.mxu0 0.0
    %1455 = vmatprep.subr.mxu0 0.0
    %1456 = vmatpush1.msra.mxu0 0.0
    %1457 = vmatprep.subr.mxu0 0.0
    %1458 = vmatpush1.msra.mxu0 0.0
    %1459 = vmatprep.subr.mxu0 0.0
    %1460 = vmatpush1.msra.mxu0 0.0
    %1461 = vmatprep.subr.mxu0 0.0
    %1462 = vmatpush1.msra.mxu0 0.0
    %1463 = vmatprep.subr.mxu0 0.0
    %1464 = vmatpush1.msra.mxu0 0.0
    %1465 = vmatprep.subr.mxu0 0.0
    %1466 = vmatpush1.msra.mxu0 0.0
    %1467 = vmatprep.subr.mxu0 0.0
    %1468 = vmatpush1.msra.mxu0 0.0
    %1469 = vmatprep.subr.mxu0 0.0
    %1470 = vmatpush1.msra.mxu0 0.0
    %1471 = vmatprep.subr.mxu0 0.0
    %1472 = vmatpush1.msra.mxu0 0.0
    %1473 = vmatprep.subr.mxu0 0.0
    %1474 = vmatpush1.msra.mxu0 0.0
    %1475 = vmatprep.subr.mxu0 0.0
    %1476 = vmatpush1.msra.mxu0 0.0
    %1477 = vmatprep.subr.mxu0 0.0
    %1478 = vmatpush1.msra.mxu0 0.0
    %1479 = vmatprep.mubr.f32.mxu0 0.0
    %1480 = vmatmul.mubr.f32.gmra.mrb[0].mxu0 %v1413
    %v1481 = vpop.f32.mrb[0].mxu0
    %v1482 = vadd.f32 0.0, %v1481
    %v1483 = vpop.f32.mrb[0].mxu0
    %1484 = vdwg.mxu0
    %1486 = vrot.lane.b32.xlu0 %v1409, 32
    %v1487 = vpop.permute.xlu0 %1486
    %v1488 = vsel %vm282, %v1487, 0
    %1490 = vmatprep.subr.mxu0 0.0
    %1491 = vmatpush1.msra.mxu0 %v264
    %1492 = vmatprep.subr.mxu0 0.0
    %1493 = vmatpush1.msra.mxu0 %v265
    %1494 = vmatprep.subr.mxu0 0.0
    %1495 = vmatpush1.msra.mxu0 %v266
    %1496 = vmatprep.subr.mxu0 0.0
    %1497 = vmatpush1.msra.mxu0 %v267
    %1498 = vmatprep.subr.mxu0 0.0
    %1499 = vmatpush1.msra.mxu0 0.0
    %1500 = vmatprep.subr.mxu0 0.0
    %1501 = vmatpush1.msra.mxu0 0.0
    %1502 = vmatprep.subr.mxu0 0.0
    %1503 = vmatpush1.msra.mxu0 0.0
    %1504 = vmatprep.subr.mxu0 0.0
    %1505 = vmatpush1.msra.mxu0 0.0
    %1506 = vmatprep.subr.mxu0 0.0
    %1507 = vmatpush1.msra.mxu0 0.0
    %1508 = vmatprep.subr.mxu0 0.0
    %1509 = vmatpush1.msra.mxu0 0.0
    %1510 = vmatprep.subr.mxu0 0.0
    %1511 = vmatpush1.msra.mxu0 0.0
    %1512 = vmatprep.subr.mxu0 0.0
    %1513 = vmatpush1.msra.mxu0 0.0
    %1514 = vmatprep.subr.mxu0 0.0
    %1515 = vmatpush1.msra.mxu0 0.0
    %1516 = vmatprep.subr.mxu0 0.0
    %1517 = vmatpush1.msra.mxu0 0.0
    %1518 = vmatprep.subr.mxu0 0.0
    %1519 = vmatpush1.msra.mxu0 0.0
    %1520 = vmatprep.subr.mxu0 0.0
    %1521 = vmatpush1.msra.mxu0 0.0
    %1522 = vmatprep.subr.mxu0 0.0
    %1523 = vmatpush1.msra.mxu0 0.0
    %1524 = vmatprep.subr.mxu0 0.0
    %1525 = vmatpush1.msra.mxu0 0.0
    %1526 = vmatprep.subr.mxu0 0.0
    %1527 = vmatpush1.msra.mxu0 0.0
    %1528 = vmatprep.subr.mxu0 0.0
    %1529 = vmatpush1.msra.mxu0 0.0
    %1530 = vmatprep.subr.mxu0 0.0
    %1531 = vmatpush1.msra.mxu0 0.0
    %1532 = vmatprep.subr.mxu0 0.0
    %1533 = vmatpush1.msra.mxu0 0.0
    %1534 = vmatprep.subr.mxu0 0.0
    %1535 = vmatpush1.msra.mxu0 0.0
    %1536 = vmatprep.subr.mxu0 0.0
    %1537 = vmatpush1.msra.mxu0 0.0
    %1538 = vmatprep.subr.mxu0 0.0
    %1539 = vmatpush1.msra.mxu0 0.0
    %1540 = vmatprep.subr.mxu0 0.0
    %1541 = vmatpush1.msra.mxu0 0.0
    %1542 = vmatprep.subr.mxu0 0.0
    %1543 = vmatpush1.msra.mxu0 0.0
    %1544 = vmatprep.subr.mxu0 0.0
    %1545 = vmatpush1.msra.mxu0 0.0
    %1546 = vmatprep.subr.mxu0 0.0
    %1547 = vmatpush1.msra.mxu0 0.0
    %1548 = vmatprep.subr.mxu0 0.0
    %1549 = vmatpush1.msra.mxu0 0.0
    %1550 = vmatprep.subr.mxu0 0.0
    %1551 = vmatpush1.msra.mxu0 0.0
    %1552 = vmatprep.subr.mxu0 0.0
    %1553 = vmatpush1.msra.mxu0 0.0
    %1554 = vmatprep.mubr.f32.mxu0 0.0
    %1555 = vmatmul.mubr.f32.gmra.mrb[0].mxu0 %v1488
    %v1556 = vpop.f32.mrb[0].mxu0
    %v1557 = vadd.f32 %v1482, %v1556
    %v1558 = vpop.f32.mrb[0].mxu0
    %1559 = vdwg.mxu0
    %v1560 = vadd.f32 %v1557, %v281
    %v1561 = vmul.f32 %v1560, 0.5
    %v1562 = vtanh.pop %v1561
    %v1563 = vmul.f32 %v1562, 0.5
    %v1564 = vadd.f32 %v1563, 0.5
    %v1565 = vtanh.pop %v1560
    %v1566 = vmul.f32 %v1564, %v1142
    %1568 = vrot.lane.b32.xlu0 %v1565, 64
    %v1569 = vpop.permute.xlu0 %1568
    %v1571 = vmul.f32 %v1564, %v1569
    %1573 = vrot.lane.b32.xlu0 %v1571, 32
    %v1574 = vpop.permute.xlu0 %1573
    %v1576 = vadd.f32 %v1566, %v1574
    %v1577 = vtanh.pop %v1576
    %1579 = vrot.lane.b32.xlu0 %v1577, 64
    %v1580 = vpop.permute.xlu0 %1579
    %v1582 = vmul.f32 %v1564, %v1580
    %1583 = vmatprep.subr.mxu0 0.0
    %1584 = vmatpush1.msra.mxu0 %v252
    %1585 = vmatprep.subr.mxu0 0.0
    %1586 = vmatpush1.msra.mxu0 %v253
    %1587 = vmatprep.subr.mxu0 0.0
    %1588 = vmatpush1.msra.mxu0 %v254
    %1589 = vmatprep.subr.mxu0 0.0
    %1590 = vmatpush1.msra.mxu0 %v255
    %1591 = vmatprep.subr.mxu0 0.0
    %1592 = vmatpush1.msra.mxu0 0.0
    %1593 = vmatprep.subr.mxu0 0.0
    %1594 = vmatpush1.msra.mxu0 0.0
    %1595 = vmatprep.subr.mxu0 0.0
    %1596 = vmatpush1.msra.mxu0 0.0
    %1597 = vmatprep.subr.mxu0 0.0
    %1598 = vmatpush1.msra.mxu0 0.0
    %1599 = vmatprep.subr.mxu0 0.0
    %1600 = vmatpush1.msra.mxu0 0.0
    %1601 = vmatprep.subr.mxu0 0.0
    %1602 = vmatpush1.msra.mxu0 0.0
    %1603 = vmatprep.subr.mxu0 0.0
    %1604 = vmatpush1.msra.mxu0 0.0
    %1605 = vmatprep.subr.mxu0 0.0
    %1606 = vmatpush1.msra.mxu0 0.0
    %1607 = vmatprep.subr.mxu0 0.0
    %1608 = vmatpush1.msra.mxu0 0.0
    %1609 = vmatprep.subr.mxu0 0.0
    %1610 = vmatpush1.msra.mxu0 0.0
    %1611 = vmatprep.subr.mxu0 0.0
    %1612 = vmatpush1.msra.mxu0 0.0
    %1613 = vmatprep.subr.mxu0 0.0
    %1614 = vmatpush1.msra.mxu0 0.0
    %1615 = vmatprep.subr.mxu0 0.0
    %1616 = vmatpush1.msra.mxu0 0.0
    %1617 = vmatprep.subr.mxu0 0.0
    %1618 = vmatpush1.msra.mxu0 0.0
    %1619 = vmatprep.subr.mxu0 0.0
    %1620 = vmatpush1.msra.mxu0 0.0
    %1621 = vmatprep.subr.mxu0 0.0
    %1622 = vmatpush1.msra.mxu0 0.0
    %1623 = vmatprep.subr.mxu0 0.0
    %1624 = vmatpush1.msra.mxu0 0.0
    %1625 = vmatprep.subr.mxu0 0.0
    %1626 = vmatpush1.msra.mxu0 0.0
    %1627 = vmatprep.subr.mxu0 0.0
    %1628 = vmatpush1.msra.mxu0 0.0
    %1629 = vmatprep.subr.mxu0 0.0
    %1630 = vmatpush1.msra.mxu0 0.0
    %1631 = vmatprep.subr.mxu0 0.0
    %1632 = vmatpush1.msra.mxu0 0.0
    %1633 = vmatprep.subr.mxu0 0.0
    %1634 = vmatpush1.msra.mxu0 0.0
    %1635 = vmatprep.subr.mxu0 0.0
    %1636 = vmatpush1.msra.mxu0 0.0
    %1637 = vmatprep.subr.mxu0 0.0
    %1638 = vmatpush1.msra.mxu0 0.0
    %1639 = vmatprep.subr.mxu0 0.0
    %1640 = vmatpush1.msra.mxu0 0.0
    %1641 = vmatprep.subr.mxu0 0.0
    %1642 = vmatpush1.msra.mxu0 0.0
    %1643 = vmatprep.subr.mxu0 0.0
    %1644 = vmatpush1.msra.mxu0 0.0
    %1645 = vmatprep.subr.mxu0 0.0
    %1646 = vmatpush1.msra.mxu0 0.0
    %1647 = vmatprep.mubr.f32.mxu0 0.0
    %1648 = vmatmul.mubr.f32.gmra.mrb[0].mxu0 %v1315
    %v1649 = vpop.f32.mrb[0].mxu0
    %v1650 = vadd.f32 0.0, %v1649
    %v1651 = vpop.f32.mrb[0].mxu0
    %1652 = vdwg.mxu0
    %v1653 = vadd.f32 %v247, %v1650
    %v1654 = vmul.f32 %v1653, 0.5
    %v1655 = vtanh.pop %v1654
    %v1656 = vmul.f32 %v1655, 0.5
    %v1657 = vadd.f32 %v1656, 0.5
    %v1658 = vtanh.pop %v1653
    %v1659 = vmul.f32 %v1657, %v1235
    %1661 = vrot.lane.b32.xlu0 %v1658, 64
    %v1662 = vpop.permute.xlu0 %1661
    %v1664 = vmul.f32 %v1657, %v1662
    %1666 = vrot.lane.b32.xlu0 %v1664, 32
    %v1667 = vpop.permute.xlu0 %1666
    %v1669 = vadd.f32 %v1659, %v1667
    %v1670 = vtanh.pop %v1669
    %1672 = vrot.lane.b32.xlu0 %v1670, 64
    %v1673 = vpop.permute.xlu0 %1672
    %v1675 = vmul.f32 %v1657, %v1673
    %1676 = vmatprep.subr.mxu0 0.0
    %1677 = vmatpush1.msra.mxu0 %v260
    %1678 = vmatprep.subr.mxu0 0.0
    %1679 = vmatpush1.msra.mxu0 %v261
    %1680 = vmatprep.subr.mxu0 0.0
    %1681 = vmatpush1.msra.mxu0 %v262
    %1682 = vmatprep.subr.mxu0 0.0
    %1683 = vmatpush1.msra.mxu0 %v263
    %1684 = vmatprep.subr.mxu0 0.0
    %1685 = vmatpush1.msra.mxu0 0.0
    %1686 = vmatprep.subr.mxu0 0.0
    %1687 = vmatpush1.msra.mxu0 0.0
    %1688 = vmatprep.subr.mxu0 0.0
    %1689 = vmatpush1.msra.mxu0 0.0
    %1690 = vmatprep.subr.mxu0 0.0
    %1691 = vmatpush1.msra.mxu0 0.0
    %1692 = vmatprep.subr.mxu0 0.0
    %1693 = vmatpush1.msra.mxu0 0.0
    %1694 = vmatprep.subr.mxu0 0.0
    %1695 = vmatpush1.msra.mxu0 0.0
    %1696 = vmatprep.subr.mxu0 0.0
    %1697 = vmatpush1.msra.mxu0 0.0
    %1698 = vmatprep.subr.mxu0 0.0
    %1699 = vmatpush1.msra.mxu0 0.0
    %1700 = vmatprep.subr.mxu0 0.0
    %1701 = vmatpush1.msra.mxu0 0.0
    %1702 = vmatprep.subr.mxu0 0.0
    %1703 = vmatpush1.msra.mxu0 0.0
    %1704 = vmatprep.subr.mxu0 0.0
    %1705 = vmatpush1.msra.mxu0 0.0
    %1706 = vmatprep.subr.mxu0 0.0
    %1707 = vmatpush1.msra.mxu0 0.0
    %1708 = vmatprep.subr.mxu0 0.0
    %1709 = vmatpush1.msra.mxu0 0.0
    %1710 = vmatprep.subr.mxu0 0.0
    %1711 = vmatpush1.msra.mxu0 0.0
    %1712 = vmatprep.subr.mxu0 0.0
    %1713 = vmatpush1.msra.mxu0 0.0
    %1714 = vmatprep.subr.mxu0 0.0
    %1715 = vmatpush1.msra.mxu0 0.0
    %1716 = vmatprep.subr.mxu0 0.0
    %1717 = vmatpush1.msra.mxu0 0.0
    %1718 = vmatprep.subr.mxu0 0.0
    %1719 = vmatpush1.msra.mxu0 0.0
    %1720 = vmatprep.subr.mxu0 0.0
    %1721 = vmatpush1.msra.mxu0 0.0
    %1722 = vmatprep.subr.mxu0 0.0
    %1723 = vmatpush1.msra.mxu0 0.0
    %1724 = vmatprep.subr.mxu0 0.0
    %1725 = vmatpush1.msra.mxu0 0.0
    %1726 = vmatprep.subr.mxu0 0.0
    %1727 = vmatpush1.msra.mxu0 0.0
    %1728 = vmatprep.subr.mxu0 0.0
    %1729 = vmatpush1.msra.mxu0 0.0
    %1730 = vmatprep.subr.mxu0 0.0
    %1731 = vmatpush1.msra.mxu0 0.0
    %1732 = vmatprep.subr.mxu0 0.0
    %1733 = vmatpush1.msra.mxu0 0.0
    %1734 = vmatprep.subr.mxu0 0.0
    %1735 = vmatpush1.msra.mxu0 0.0
    %1736 = vmatprep.subr.mxu0 0.0
    %1737 = vmatpush1.msra.mxu0 0.0
    %1738 = vmatprep.subr.mxu0 0.0
    %1739 = vmatpush1.msra.mxu0 0.0
    %1740 = vmatprep.mubr.f32.mxu0 0.0
    %1741 = vmatmul.mubr.f32.gmra.mrb[0].mxu0 %v1488
    %v1742 = vpop.f32.mrb[0].mxu0
    %v1743 = vadd.f32 0.0, %v1742
    %v1744 = vpop.f32.mrb[0].mxu0
    %1745 = vdwg.mxu0
    %1747 = vrot.lane.b32.xlu0 %v1675, 32
    %v1748 = vpop.permute.xlu0 %1747
    %v1749 = vsel %vm282, %v1748, 0
    %1751 = vmatprep.subr.mxu0 0.0
    %1752 = vmatpush1.msra.mxu0 %v256
    %1753 = vmatprep.subr.mxu0 0.0
    %1754 = vmatpush1.msra.mxu0 %v257
    %1755 = vmatprep.subr.mxu0 0.0
    %1756 = vmatpush1.msra.mxu0 %v258
    %1757 = vmatprep.subr.mxu0 0.0
    %1758 = vmatpush1.msra.mxu0 %v259
    %1759 = vmatprep.subr.mxu0 0.0
    %1760 = vmatpush1.msra.mxu0 0.0
    %1761 = vmatprep.subr.mxu0 0.0
    %1762 = vmatpush1.msra.mxu0 0.0
    %1763 = vmatprep.subr.mxu0 0.0
    %1764 = vmatpush1.msra.mxu0 0.0
    %1765 = vmatprep.subr.mxu0 0.0
    %1766 = vmatpush1.msra.mxu0 0.0
    %1767 = vmatprep.subr.mxu0 0.0
    %1768 = vmatpush1.msra.mxu0 0.0
    %1769 = vmatprep.subr.mxu0 0.0
    %1770 = vmatpush1.msra.mxu0 0.0
    %1771 = vmatprep.subr.mxu0 0.0
    %1772 = vmatpush1.msra.mxu0 0.0
    %1773 = vmatprep.subr.mxu0 0.0
    %1774 = vmatpush1.msra.mxu0 0.0
    %1775 = vmatprep.subr.mxu0 0.0
    %1776 = vmatpush1.msra.mxu0 0.0
    %1777 = vmatprep.subr.mxu0 0.0
    %1778 = vmatpush1.msra.mxu0 0.0
    %1779 = vmatprep.subr.mxu0 0.0
    %1780 = vmatpush1.msra.mxu0 0.0
    %1781 = vmatprep.subr.mxu0 0.0
    %1782 = vmatpush1.msra.mxu0 0.0
    %1783 = vmatprep.subr.mxu0 0.0
    %1784 = vmatpush1.msra.mxu0 0.0
    %1785 = vmatprep.subr.mxu0 0.0
    %1786 = vmatpush1.msra.mxu0 0.0
    %1787 = vmatprep.subr.mxu0 0.0
    %1788 = vmatpush1.msra.mxu0 0.0
    %1789 = vmatprep.subr.mxu0 0.0
    %1790 = vmatpush1.msra.mxu0 0.0
    %1791 = vmatprep.subr.mxu0 0.0
    %1792 = vmatpush1.msra.mxu0 0.0
    %1793 = vmatprep.subr.mxu0 0.0
    %1794 = vmatpush1.msra.mxu0 0.0
    %1795 = vmatprep.subr.mxu0 0.0
    %1796 = vmatpush1.msra.mxu0 0.0
    %1797 = vmatprep.subr.mxu0 0.0
    %1798 = vmatpush1.msra.mxu0 0.0
    %1799 = vmatprep.subr.mxu0 0.0
    %1800 = vmatpush1.msra.mxu0 0.0
    %1801 = vmatprep.subr.mxu0 0.0
    %1802 = vmatpush1.msra.mxu0 0.0
    %1803 = vmatprep.subr.mxu0 0.0
    %1804 = vmatpush1.msra.mxu0 0.0
    %1805 = vmatprep.subr.mxu0 0.0
    %1806 = vmatpush1.msra.mxu0 0.0
    %1807 = vmatprep.subr.mxu0 0.0
    %1808 = vmatpush1.msra.mxu0 0.0
    %1809 = vmatprep.subr.mxu0 0.0
    %1810 = vmatpush1.msra.mxu0 0.0
    %1811 = vmatprep.subr.mxu0 0.0
    %1812 = vmatpush1.msra.mxu0 0.0
    %1813 = vmatprep.subr.mxu0 0.0
    %1814 = vmatpush1.msra.mxu0 0.0
    %1815 = vmatprep.mubr.f32.mxu0 0.0
    %1816 = vmatmul.mubr.f32.gmra.mrb[0].mxu0 %v1749
    %v1817 = vpop.f32.mrb[0].mxu0
    %v1818 = vadd.f32 %v1743, %v1817
    %v1819 = vpop.f32.mrb[0].mxu0
    %1820 = vdwg.mxu0
    %v1821 = vadd.f32 %v1818, %v276
    %v1822 = vmul.f32 %v1821, 0.5
    %v1823 = vtanh.pop %v1822
    %v1824 = vmul.f32 %v1823, 0.5
    %v1825 = vadd.f32 %v1824, 0.5
    %v1826 = vtanh.pop %v1821
    %v1827 = vmul.f32 %v1825, %v1403
    %1829 = vrot.lane.b32.xlu0 %v1826, 64
    %v1830 = vpop.permute.xlu0 %1829
    %v1832 = vmul.f32 %v1825, %v1830
    %1834 = vrot.lane.b32.xlu0 %v1832, 32
    %v1835 = vpop.permute.xlu0 %1834
    %v1837 = vadd.f32 %v1827, %v1835
    %v1838 = vtanh.pop %v1837
    %1840 = vrot.lane.b32.xlu0 %v1838, 64
    %v1841 = vpop.permute.xlu0 %1840
    %v1843 = vmul.f32 %v1825, %v1841
    %1845 = vrot.lane.b32.xlu0 %v1582, 32
    %v1846 = vpop.permute.xlu0 %1845
    %v1847 = vsel %vm282, %v1846, 0
    %1849 = vmatprep.subr.mxu0 0.0
    %1850 = vmatpush1.msra.mxu0 %v268
    %1851 = vmatprep.subr.mxu0 0.0
    %1852 = vmatpush1.msra.mxu0 %v269
    %1853 = vmatprep.subr.mxu0 0.0
    %1854 = vmatpush1.msra.mxu0 %v270
    %1855 = vmatprep.subr.mxu0 0.0
    %1856 = vmatpush1.msra.mxu0 %v271
    %1857 = vmatprep.subr.mxu0 0.0
    %1858 = vmatpush1.msra.mxu0 0.0
    %1859 = vmatprep.subr.mxu0 0.0
    %1860 = vmatpush1.msra.mxu0 0.0
    %1861 = vmatprep.subr.mxu0 0.0
    %1862 = vmatpush1.msra.mxu0 0.0
    %1863 = vmatprep.subr.mxu0 0.0
    %1864 = vmatpush1.msra.mxu0 0.0
    %1865 = vmatprep.subr.mxu0 0.0
    %1866 = vmatpush1.msra.mxu0 0.0
    %1867 = vmatprep.subr.mxu0 0.0
    %1868 = vmatpush1.msra.mxu0 0.0
    %1869 = vmatprep.subr.mxu0 0.0
    %1870 = vmatpush1.msra.mxu0 0.0
    %1871 = vmatprep.subr.mxu0 0.0
    %1872 = vmatpush1.msra.mxu0 0.0
    %1873 = vmatprep.subr.mxu0 0.0
    %1874 = vmatpush1.msra.mxu0 0.0
    %1875 = vmatprep.subr.mxu0 0.0
    %1876 = vmatpush1.msra.mxu0 0.0
    %1877 = vmatprep.subr.mxu0 0.0
    %1878 = vmatpush1.msra.mxu0 0.0
    %1879 = vmatprep.subr.mxu0 0.0
    %1880 = vmatpush1.msra.mxu0 0.0
    %1881 = vmatprep.subr.mxu0 0.0
    %1882 = vmatpush1.msra.mxu0 0.0
    %1883 = vmatprep.subr.mxu0 0.0
    %1884 = vmatpush1.msra.mxu0 0.0
    %1885 = vmatprep.subr.mxu0 0.0
    %1886 = vmatpush1.msra.mxu0 0.0
    %1887 = vmatprep.subr.mxu0 0.0
    %1888 = vmatpush1.msra.mxu0 0.0
    %1889 = vmatprep.subr.mxu0 0.0
    %1890 = vmatpush1.msra.mxu0 0.0
    %1891 = vmatprep.subr.mxu0 0.0
    %1892 = vmatpush1.msra.mxu0 0.0
    %1893 = vmatprep.subr.mxu0 0.0
    %1894 = vmatpush1.msra.mxu0 0.0
    %1895 = vmatprep.subr.mxu0 0.0
    %1896 = vmatpush1.msra.mxu0 0.0
    %1897 = vmatprep.subr.mxu0 0.0
    %1898 = vmatpush1.msra.mxu0 0.0
    %1899 = vmatprep.subr.mxu0 0.0
    %1900 = vmatpush1.msra.mxu0 0.0
    %1901 = vmatprep.subr.mxu0 0.0
    %1902 = vmatpush1.msra.mxu0 0.0
    %1903 = vmatprep.subr.mxu0 0.0
    %1904 = vmatpush1.msra.mxu0 0.0
    %1905 = vmatprep.subr.mxu0 0.0
    %1906 = vmatpush1.msra.mxu0 0.0
    %1907 = vmatprep.subr.mxu0 0.0
    %1908 = vmatpush1.msra.mxu0 0.0
    %1909 = vmatprep.subr.mxu0 0.0
    %1910 = vmatpush1.msra.mxu0 0.0
    %1911 = vmatprep.subr.mxu0 0.0
    %1912 = vmatpush1.msra.mxu0 0.0
    %1913 = vmatprep.mubr.f32.mxu0 0.0
    %1914 = vmatmul.mubr.f32.gmra.mrb[0].mxu0 %v1847
    %v1915 = vpop.f32.mrb[0].mxu0
    %v1916 = vadd.f32 0.0, %v1915
    %v1917 = vpop.f32.mrb[0].mxu0
    %1918 = vdwg.mxu0
    %1920 = vrot.lane.b32.xlu0 %v1843, 32
    %v1921 = vpop.permute.xlu0 %1920
    %v1922 = vsel %vm282, %v1921, 0
    %1924 = vmatprep.subr.mxu0 0.0
    %1925 = vmatpush1.msra.mxu0 %v264
    %1926 = vmatprep.subr.mxu0 0.0
    %1927 = vmatpush1.msra.mxu0 %v265
    %1928 = vmatprep.subr.mxu0 0.0
    %1929 = vmatpush1.msra.mxu0 %v266
    %1930 = vmatprep.subr.mxu0 0.0
    %1931 = vmatpush1.msra.mxu0 %v267
    %1932 = vmatprep.subr.mxu0 0.0
    %1933 = vmatpush1.msra.mxu0 0.0
    %1934 = vmatprep.subr.mxu0 0.0
    %1935 = vmatpush1.msra.mxu0 0.0
    %1936 = vmatprep.subr.mxu0 0.0
    %1937 = vmatpush1.msra.mxu0 0.0
    %1938 = vmatprep.subr.mxu0 0.0
    %1939 = vmatpush1.msra.mxu0 0.0
    %1940 = vmatprep.subr.mxu0 0.0
    %1941 = vmatpush1.msra.mxu0 0.0
    %1942 = vmatprep.subr.mxu0 0.0
    %1943 = vmatpush1.msra.mxu0 0.0
    %1944 = vmatprep.subr.mxu0 0.0
    %1945 = vmatpush1.msra.mxu0 0.0
    %1946 = vmatprep.subr.mxu0 0.0
    %1947 = vmatpush1.msra.mxu0 0.0
    %1948 = vmatprep.subr.mxu0 0.0
    %1949 = vmatpush1.msra.mxu0 0.0
    %1950 = vmatprep.subr.mxu0 0.0
    %1951 = vmatpush1.msra.mxu0 0.0
    %1952 = vmatprep.subr.mxu0 0.0
    %1953 = vmatpush1.msra.mxu0 0.0
    %1954 = vmatprep.subr.mxu0 0.0
    %1955 = vmatpush1.msra.mxu0 0.0
    %1956 = vmatprep.subr.mxu0 0.0
    %1957 = vmatpush1.msra.mxu0 0.0
    %1958 = vmatprep.subr.mxu0 0.0
    %1959 = vmatpush1.msra.mxu0 0.0
    %1960 = vmatprep.subr.mxu0 0.0
    %1961 = vmatpush1.msra.mxu0 0.0
    %1962 = vmatprep.subr.mxu0 0.0
    %1963 = vmatpush1.msra.mxu0 0.0
    %1964 = vmatprep.subr.mxu0 0.0
    %1965 = vmatpush1.msra.mxu0 0.0
    %1966 = vmatprep.subr.mxu0 0.0
    %1967 = vmatpush1.msra.mxu0 0.0
    %1968 = vmatprep.subr.mxu0 0.0
    %1969 = vmatpush1.msra.mxu0 0.0
    %1970 = vmatprep.subr.mxu0 0.0
    %1971 = vmatpush1.msra.mxu0 0.0
    %1972 = vmatprep.subr.mxu0 0.0
    %1973 = vmatpush1.msra.mxu0 0.0
    %1974 = vmatprep.subr.mxu0 0.0
    %1975 = vmatpush1.msra.mxu0 0.0
    %1976 = vmatprep.subr.mxu0 0.0
    %1977 = vmatpush1.msra.mxu0 0.0
    %1978 = vmatprep.subr.mxu0 0.0
    %1979 = vmatpush1.msra.mxu0 0.0
    %1980 = vmatprep.subr.mxu0 0.0
    %1981 = vmatpush1.msra.mxu0 0.0
    %1982 = vmatprep.subr.mxu0 0.0
    %1983 = vmatpush1.msra.mxu0 0.0
    %1984 = vmatprep.subr.mxu0 0.0
    %1985 = vmatpush1.msra.mxu0 0.0
    %1986 = vmatprep.subr.mxu0 0.0
    %1987 = vmatpush1.msra.mxu0 0.0
    %1988 = vmatprep.mubr.f32.mxu0 0.0
    %1989 = vmatmul.mubr.f32.gmra.mrb[0].mxu0 %v1922
    %v1990 = vpop.f32.mrb[0].mxu0
    %v1991 = vadd.f32 %v1916, %v1990
    %v1992 = vpop.f32.mrb[0].mxu0
    %1993 = vdwg.mxu0
    %v1994 = vadd.f32 %v1991, %v281
    %v1995 = vmul.f32 %v1994, 0.5
    %v1996 = vtanh.pop %v1995
    %v1997 = vmul.f32 %v1996, 0.5
    %v1998 = vadd.f32 %v1997, 0.5
    %v1999 = vtanh.pop %v1994
    %v2000 = vmul.f32 %v1998, %v1576
    %2002 = vrot.lane.b32.xlu0 %v1999, 64
    %v2003 = vpop.permute.xlu0 %2002
    %v2005 = vmul.f32 %v1998, %v2003
    %2007 = vrot.lane.b32.xlu0 %v2005, 32
    %v2008 = vpop.permute.xlu0 %2007
    %v2010 = vadd.f32 %v2000, %v2008
    %v2011 = vtanh.pop %v2010
    %2013 = vrot.lane.b32.xlu0 %v2011, 64
    %v2014 = vpop.permute.xlu0 %2013
    %v2016 = vmul.f32 %v1998, %v2014
    %2017 = vmatprep.subr.mxu0 0.0
    %2018 = vmatpush1.msra.mxu0 %v252
    %2019 = vmatprep.subr.mxu0 0.0
    %2020 = vmatpush1.msra.mxu0 %v253
    %2021 = vmatprep.subr.mxu0 0.0
    %2022 = vmatpush1.msra.mxu0 %v254
    %2023 = vmatprep.subr.mxu0 0.0
    %2024 = vmatpush1.msra.mxu0 %v255
    %2025 = vmatprep.subr.mxu0 0.0
    %2026 = vmatpush1.msra.mxu0 0.0
    %2027 = vmatprep.subr.mxu0 0.0
    %2028 = vmatpush1.msra.mxu0 0.0
    %2029 = vmatprep.subr.mxu0 0.0
    %2030 = vmatpush1.msra.mxu0 0.0
    %2031 = vmatprep.subr.mxu0 0.0
    %2032 = vmatpush1.msra.mxu0 0.0
    %2033 = vmatprep.subr.mxu0 0.0
    %2034 = vmatpush1.msra.mxu0 0.0
    %2035 = vmatprep.subr.mxu0 0.0
    %2036 = vmatpush1.msra.mxu0 0.0
    %2037 = vmatprep.subr.mxu0 0.0
    %2038 = vmatpush1.msra.mxu0 0.0
    %2039 = vmatprep.subr.mxu0 0.0
    %2040 = vmatpush1.msra.mxu0 0.0
    %2041 = vmatprep.subr.mxu0 0.0
    %2042 = vmatpush1.msra.mxu0 0.0
    %2043 = vmatprep.subr.mxu0 0.0
    %2044 = vmatpush1.msra.mxu0 0.0
    %2045 = vmatprep.subr.mxu0 0.0
    %2046 = vmatpush1.msra.mxu0 0.0
    %2047 = vmatprep.subr.mxu0 0.0
    %2048 = vmatpush1.msra.mxu0 0.0
    %2049 = vmatprep.subr.mxu0 0.0
    %2050 = vmatpush1.msra.mxu0 0.0
    %2051 = vmatprep.subr.mxu0 0.0
    %2052 = vmatpush1.msra.mxu0 0.0
    %2053 = vmatprep.subr.mxu0 0.0
    %2054 = vmatpush1.msra.mxu0 0.0
    %2055 = vmatprep.subr.mxu0 0.0
    %2056 = vmatpush1.msra.mxu0 0.0
    %2057 = vmatprep.subr.mxu0 0.0
    %2058 = vmatpush1.msra.mxu0 0.0
    %2059 = vmatprep.subr.mxu0 0.0
    %2060 = vmatpush1.msra.mxu0 0.0
    %2061 = vmatprep.subr.mxu0 0.0
    %2062 = vmatpush1.msra.mxu0 0.0
    %2063 = vmatprep.subr.mxu0 0.0
    %2064 = vmatpush1.msra.mxu0 0.0
    %2065 = vmatprep.subr.mxu0 0.0
    %2066 = vmatpush1.msra.mxu0 0.0
    %2067 = vmatprep.subr.mxu0 0.0
    %2068 = vmatpush1.msra.mxu0 0.0
    %2069 = vmatprep.subr.mxu0 0.0
    %2070 = vmatpush1.msra.mxu0 0.0
    %2071 = vmatprep.subr.mxu0 0.0
    %2072 = vmatpush1.msra.mxu0 0.0
    %2073 = vmatprep.subr.mxu0 0.0
    %2074 = vmatpush1.msra.mxu0 0.0
    %2075 = vmatprep.subr.mxu0 0.0
    %2076 = vmatpush1.msra.mxu0 0.0
    %2077 = vmatprep.subr.mxu0 0.0
    %2078 = vmatpush1.msra.mxu0 0.0
    %2079 = vmatprep.subr.mxu0 0.0
    %2080 = vmatpush1.msra.mxu0 0.0
    %2081 = vmatprep.mubr.f32.mxu0 0.0
    %2082 = vmatmul.mubr.f32.gmra.mrb[0].mxu0 %v1749
    %v2083 = vpop.f32.mrb[0].mxu0
    %v2084 = vadd.f32 0.0, %v2083
    %v2085 = vpop.f32.mrb[0].mxu0
    %2086 = vdwg.mxu0
    %v2087 = vadd.f32 %v248, %v2084
    %v2088 = vmul.f32 %v2087, 0.5
    %v2089 = vtanh.pop %v2088
    %v2090 = vmul.f32 %v2089, 0.5
    %v2091 = vadd.f32 %v2090, 0.5
    %v2092 = vtanh.pop %v2087
    %v2093 = vmul.f32 %v2091, %v1669
    %2095 = vrot.lane.b32.xlu0 %v2092, 64
    %v2096 = vpop.permute.xlu0 %2095
    %v2098 = vmul.f32 %v2091, %v2096
    %2100 = vrot.lane.b32.xlu0 %v2098, 32
    %v2101 = vpop.permute.xlu0 %2100
    %v2103 = vadd.f32 %v2093, %v2101
    %v2104 = vtanh.pop %v2103
    %2106 = vrot.lane.b32.xlu0 %v2104, 64
    %v2107 = vpop.permute.xlu0 %2106
    %v2109 = vmul.f32 %v2091, %v2107
    %2110 = vmatprep.subr.mxu0 0.0
    %2111 = vmatpush1.msra.mxu0 %v260
    %2112 = vmatprep.subr.mxu0 0.0
    %2113 = vmatpush1.msra.mxu0 %v261
    %2114 = vmatprep.subr.mxu0 0.0
    %2115 = vmatpush1.msra.mxu0 %v262
    %2116 = vmatprep.subr.mxu0 0.0
    %2117 = vmatpush1.msra.mxu0 %v263
    %2118 = vmatprep.subr.mxu0 0.0
    %2119 = vmatpush1.msra.mxu0 0.0
    %2120 = vmatprep.subr.mxu0 0.0
    %2121 = vmatpush1.msra.mxu0 0.0
    %2122 = vmatprep.subr.mxu0 0.0
    %2123 = vmatpush1.msra.mxu0 0.0
    %2124 = vmatprep.subr.mxu0 0.0
    %2125 = vmatpush1.msra.mxu0 0.0
    %2126 = vmatprep.subr.mxu0 0.0
    %2127 = vmatpush1.msra.mxu0 0.0
    %2128 = vmatprep.subr.mxu0 0.0
    %2129 = vmatpush1.msra.mxu0 0.0
    %2130 = vmatprep.subr.mxu0 0.0
    %2131 = vmatpush1.msra.mxu0 0.0
    %2132 = vmatprep.subr.mxu0 0.0
    %2133 = vmatpush1.msra.mxu0 0.0
    %2134 = vmatprep.subr.mxu0 0.0
    %2135 = vmatpush1.msra.mxu0 0.0
    %2136 = vmatprep.subr.mxu0 0.0
    %2137 = vmatpush1.msra.mxu0 0.0
    %2138 = vmatprep.subr.mxu0 0.0
    %2139 = vmatpush1.msra.mxu0 0.0
    %2140 = vmatprep.subr.mxu0 0.0
    %2141 = vmatpush1.msra.mxu0 0.0
    %2142 = vmatprep.subr.mxu0 0.0
    %2143 = vmatpush1.msra.mxu0 0.0
    %2144 = vmatprep.subr.mxu0 0.0
    %2145 = vmatpush1.msra.mxu0 0.0
    %2146 = vmatprep.subr.mxu0 0.0
    %2147 = vmatpush1.msra.mxu0 0.0
    %2148 = vmatprep.subr.mxu0 0.0
    %2149 = vmatpush1.msra.mxu0 0.0
    %2150 = vmatprep.subr.mxu0 0.0
    %2151 = vmatpush1.msra.mxu0 0.0
    %2152 = vmatprep.subr.mxu0 0.0
    %2153 = vmatpush1.msra.mxu0 0.0
    %2154 = vmatprep.subr.mxu0 0.0
    %2155 = vmatpush1.msra.mxu0 0.0
    %2156 = vmatprep.subr.mxu0 0.0
    %2157 = vmatpush1.msra.mxu0 0.0
    %2158 = vmatprep.subr.mxu0 0.0
    %2159 = vmatpush1.msra.mxu0 0.0
    %2160 = vmatprep.subr.mxu0 0.0
    %2161 = vmatpush1.msra.mxu0 0.0
    %2162 = vmatprep.subr.mxu0 0.0
    %2163 = vmatpush1.msra.mxu0 0.0
    %2164 = vmatprep.subr.mxu0 0.0
    %2165 = vmatpush1.msra.mxu0 0.0
    %2166 = vmatprep.subr.mxu0 0.0
    %2167 = vmatpush1.msra.mxu0 0.0
    %2168 = vmatprep.subr.mxu0 0.0
    %2169 = vmatpush1.msra.mxu0 0.0
    %2170 = vmatprep.subr.mxu0 0.0
    %2171 = vmatpush1.msra.mxu0 0.0
    %2172 = vmatprep.subr.mxu0 0.0
    %2173 = vmatpush1.msra.mxu0 0.0
    %2174 = vmatprep.mubr.f32.mxu0 0.0
    %2175 = vmatmul.mubr.f32.gmra.mrb[0].mxu0 %v1922
    %v2176 = vpop.f32.mrb[0].mxu0
    %v2177 = vadd.f32 0.0, %v2176
    %v2178 = vpop.f32.mrb[0].mxu0
    %2179 = vdwg.mxu0
    %2181 = vrot.lane.b32.xlu0 %v2109, 32
    %v2182 = vpop.permute.xlu0 %2181
    %v2183 = vsel %vm282, %v2182, 0
    %2185 = vmatprep.subr.mxu0 0.0
    %2186 = vmatpush1.msra.mxu0 %v256
    %2187 = vmatprep.subr.mxu0 0.0
    %2188 = vmatpush1.msra.mxu0 %v257
    %2189 = vmatprep.subr.mxu0 0.0
    %2190 = vmatpush1.msra.mxu0 %v258
    %2191 = vmatprep.subr.mxu0 0.0
    %2192 = vmatpush1.msra.mxu0 %v259
    %2193 = vmatprep.subr.mxu0 0.0
    %2194 = vmatpush1.msra.mxu0 0.0
    %2195 = vmatprep.subr.mxu0 0.0
    %2196 = vmatpush1.msra.mxu0 0.0
    %2197 = vmatprep.subr.mxu0 0.0
    %2198 = vmatpush1.msra.mxu0 0.0
    %2199 = vmatprep.subr.mxu0 0.0
    %2200 = vmatpush1.msra.mxu0 0.0
    %2201 = vmatprep.subr.mxu0 0.0
    %2202 = vmatpush1.msra.mxu0 0.0
    %2203 = vmatprep.subr.mxu0 0.0
    %2204 = vmatpush1.msra.mxu0 0.0
    %2205 = vmatprep.subr.mxu0 0.0
    %2206 = vmatpush1.msra.mxu0 0.0
    %2207 = vmatprep.subr.mxu0 0.0
    %2208 = vmatpush1.msra.mxu0 0.0
    %2209 = vmatprep.subr.mxu0 0.0
    %2210 = vmatpush1.msra.mxu0 0.0
    %2211 = vmatprep.subr.mxu0 0.0
    %2212 = vmatpush1.msra.mxu0 0.0
    %2213 = vmatprep.subr.mxu0 0.0
    %2214 = vmatpush1.msra.mxu0 0.0
    %2215 = vmatprep.subr.mxu0 0.0
    %2216 = vmatpush1.msra.mxu0 0.0
    %2217 = vmatprep.subr.mxu0 0.0
    %2218 = vmatpush1.msra.mxu0 0.0
    %2219 = vmatprep.subr.mxu0 0.0
    %2220 = vmatpush1.msra.mxu0 0.0
    %2221 = vmatprep.subr.mxu0 0.0
    %2222 = vmatpush1.msra.mxu0 0.0
    %2223 = vmatprep.subr.mxu0 0.0
    %2224 = vmatpush1.msra.mxu0 0.0
    %2225 = vmatprep.subr.mxu0 0.0
    %2226 = vmatpush1.msra.mxu0 0.0
    %2227 = vmatprep.subr.mxu0 0.0
    %2228 = vmatpush1.msra.mxu0 0.0
    %2229 = vmatprep.subr.mxu0 0.0
    %2230 = vmatpush1.msra.mxu0 0.0
    %2231 = vmatprep.subr.mxu0 0.0
    %2232 = vmatpush1.msra.mxu0 0.0
    %2233 = vmatprep.subr.mxu0 0.0
    %2234 = vmatpush1.msra.mxu0 0.0
    %2235 = vmatprep.subr.mxu0 0.0
    %2236 = vmatpush1.msra.mxu0 0.0
    %2237 = vmatprep.subr.mxu0 0.0
    %2238 = vmatpush1.msra.mxu0 0.0
    %2239 = vmatprep.subr.mxu0 0.0
    %2240 = vmatpush1.msra.mxu0 0.0
    %2241 = vmatprep.subr.mxu0 0.0
    %2242 = vmatpush1.msra.mxu0 0.0
    %2243 = vmatprep.subr.mxu0 0.0
    %2244 = vmatpush1.msra.mxu0 0.0
    %2245 = vmatprep.subr.mxu0 0.0
    %2246 = vmatpush1.msra.mxu0 0.0
    %2247 = vmatprep.subr.mxu0 0.0
    %2248 = vmatpush1.msra.mxu0 0.0
    %2249 = vmatprep.mubr.f32.mxu0 0.0
    %2250 = vmatmul.mubr.f32.gmra.mrb[0].mxu0 %v2183
    %v2251 = vpop.f32.mrb[0].mxu0
    %v2252 = vadd.f32 %v2177, %v2251
    %v2253 = vpop.f32.mrb[0].mxu0
    %2254 = vdwg.mxu0
    %v2255 = vadd.f32 %v2252, %v276
    %v2256 = vmul.f32 %v2255, 0.5
    %v2257 = vtanh.pop %v2256
    %v2258 = vmul.f32 %v2257, 0.5
    %v2259 = vadd.f32 %v2258, 0.5
    %v2260 = vtanh.pop %v2255
    %v2261 = vmul.f32 %v2259, %v1837
    %2263 = vrot.lane.b32.xlu0 %v2260, 64
    %v2264 = vpop.permute.xlu0 %2263
    %v2266 = vmul.f32 %v2259, %v2264
    %2268 = vrot.lane.b32.xlu0 %v2266, 32
    %v2269 = vpop.permute.xlu0 %2268
    %v2271 = vadd.f32 %v2261, %v2269
    %v2272 = vtanh.pop %v2271
    %2274 = vrot.lane.b32.xlu0 %v2272, 64
    %v2275 = vpop.permute.xlu0 %2274
    %v2277 = vmul.f32 %v2259, %v2275
    %2279 = vrot.lane.b32.xlu0 %v2016, 32
    %v2280 = vpop.permute.xlu0 %2279
    %v2281 = vsel %vm282, %v2280, 0
    %2283 = vmatprep.subr.mxu0 0.0
    %2284 = vmatpush1.msra.mxu0 %v268
    %2285 = vmatprep.subr.mxu0 0.0
    %2286 = vmatpush1.msra.mxu0 %v269
    %2287 = vmatprep.subr.mxu0 0.0
    %2288 = vmatpush1.msra.mxu0 %v270
    %2289 = vmatprep.subr.mxu0 0.0
    %2290 = vmatpush1.msra.mxu0 %v271
    %2291 = vmatprep.subr.mxu0 0.0
    %2292 = vmatpush1.msra.mxu0 0.0
    %2293 = vmatprep.subr.mxu0 0.0
    %2294 = vmatpush1.msra.mxu0 0.0
    %2295 = vmatprep.subr.mxu0 0.0
    %2296 = vmatpush1.msra.mxu0 0.0
    %2297 = vmatprep.subr.mxu0 0.0
    %2298 = vmatpush1.msra.mxu0 0.0
    %2299 = vmatprep.subr.mxu0 0.0
    %2300 = vmatpush1.msra.mxu0 0.0
    %2301 = vmatprep.subr.mxu0 0.0
    %2302 = vmatpush1.msra.mxu0 0.0
    %2303 = vmatprep.subr.mxu0 0.0
    %2304 = vmatpush1.msra.mxu0 0.0
    %2305 = vmatprep.subr.mxu0 0.0
    %2306 = vmatpush1.msra.mxu0 0.0
    %2307 = vmatprep.subr.mxu0 0.0
    %2308 = vmatpush1.msra.mxu0 0.0
    %2309 = vmatprep.subr.mxu0 0.0
    %2310 = vmatpush1.msra.mxu0 0.0
    %2311 = vmatprep.subr.mxu0 0.0
    %2312 = vmatpush1.msra.mxu0 0.0
    %2313 = vmatprep.subr.mxu0 0.0
    %2314 = vmatpush1.msra.mxu0 0.0
    %2315 = vmatprep.subr.mxu0 0.0
    %2316 = vmatpush1.msra.mxu0 0.0
    %2317 = vmatprep.subr.mxu0 0.0
    %2318 = vmatpush1.msra.mxu0 0.0
    %2319 = vmatprep.subr.mxu0 0.0
    %2320 = vmatpush1.msra.mxu0 0.0
    %2321 = vmatprep.subr.mxu0 0.0
    %2322 = vmatpush1.msra.mxu0 0.0
    %2323 = vmatprep.subr.mxu0 0.0
    %2324 = vmatpush1.msra.mxu0 0.0
    %2325 = vmatprep.subr.mxu0 0.0
    %2326 = vmatpush1.msra.mxu0 0.0
    %2327 = vmatprep.subr.mxu0 0.0
    %2328 = vmatpush1.msra.mxu0 0.0
    %2329 = vmatprep.subr.mxu0 0.0
    %2330 = vmatpush1.msra.mxu0 0.0
    %2331 = vmatprep.subr.mxu0 0.0
    %2332 = vmatpush1.msra.mxu0 0.0
    %2333 = vmatprep.subr.mxu0 0.0
    %2334 = vmatpush1.msra.mxu0 0.0
    %2335 = vmatprep.subr.mxu0 0.0
    %2336 = vmatpush1.msra.mxu0 0.0
    %2337 = vmatprep.subr.mxu0 0.0
    %2338 = vmatpush1.msra.mxu0 0.0
    %2339 = vmatprep.subr.mxu0 0.0
    %2340 = vmatpush1.msra.mxu0 0.0
    %2341 = vmatprep.subr.mxu0 0.0
    %2342 = vmatpush1.msra.mxu0 0.0
    %2343 = vmatprep.subr.mxu0 0.0
    %2344 = vmatpush1.msra.mxu0 0.0
    %2345 = vmatprep.subr.mxu0 0.0
    %2346 = vmatpush1.msra.mxu0 0.0
    %2347 = vmatprep.mubr.f32.mxu0 0.0
    %2348 = vmatmul.mubr.f32.gmra.mrb[0].mxu0 %v2281
    %v2349 = vpop.f32.mrb[0].mxu0
    %v2350 = vadd.f32 0.0, %v2349
    %v2351 = vpop.f32.mrb[0].mxu0
    %2352 = vdwg.mxu0
    %2354 = vrot.lane.b32.xlu0 %v2277, 32
    %v2355 = vpop.permute.xlu0 %2354
    %v2356 = vsel %vm282, %v2355, 0
    %2358 = vmatprep.subr.mxu0 0.0
    %2359 = vmatpush1.msra.mxu0 %v264
    %2360 = vmatprep.subr.mxu0 0.0
    %2361 = vmatpush1.msra.mxu0 %v265
    %2362 = vmatprep.subr.mxu0 0.0
    %2363 = vmatpush1.msra.mxu0 %v266
    %2364 = vmatprep.subr.mxu0 0.0
    %2365 = vmatpush1.msra.mxu0 %v267
    %2366 = vmatprep.subr.mxu0 0.0
    %2367 = vmatpush1.msra.mxu0 0.0
    %2368 = vmatprep.subr.mxu0 0.0
    %2369 = vmatpush1.msra.mxu0 0.0
    %2370 = vmatprep.subr.mxu0 0.0
    %2371 = vmatpush1.msra.mxu0 0.0
    %2372 = vmatprep.subr.mxu0 0.0
    %2373 = vmatpush1.msra.mxu0 0.0
    %2374 = vmatprep.subr.mxu0 0.0
    %2375 = vmatpush1.msra.mxu0 0.0
    %2376 = vmatprep.subr.mxu0 0.0
    %2377 = vmatpush1.msra.mxu0 0.0
    %2378 = vmatprep.subr.mxu0 0.0
    %2379 = vmatpush1.msra.mxu0 0.0
    %2380 = vmatprep.subr.mxu0 0.0
    %2381 = vmatpush1.msra.mxu0 0.0
    %2382 = vmatprep.subr.mxu0 0.0
    %2383 = vmatpush1.msra.mxu0 0.0
    %2384 = vmatprep.subr.mxu0 0.0
    %2385 = vmatpush1.msra.mxu0 0.0
    %2386 = vmatprep.subr.mxu0 0.0
    %2387 = vmatpush1.msra.mxu0 0.0
    %2388 = vmatprep.subr.mxu0 0.0
    %2389 = vmatpush1.msra.mxu0 0.0
    %2390 = vmatprep.subr.mxu0 0.0
    %2391 = vmatpush1.msra.mxu0 0.0
    %2392 = vmatprep.subr.mxu0 0.0
    %2393 = vmatpush1.msra.mxu0 0.0
    %2394 = vmatprep.subr.mxu0 0.0
    %2395 = vmatpush1.msra.mxu0 0.0
    %2396 = vmatprep.subr.mxu0 0.0
    %2397 = vmatpush1.msra.mxu0 0.0
    %2398 = vmatprep.subr.mxu0 0.0
    %2399 = vmatpush1.msra.mxu0 0.0
    %2400 = vmatprep.subr.mxu0 0.0
    %2401 = vmatpush1.msra.mxu0 0.0
    %2402 = vmatprep.subr.mxu0 0.0
    %2403 = vmatpush1.msra.mxu0 0.0
    %2404 = vmatprep.subr.mxu0 0.0
    %2405 = vmatpush1.msra.mxu0 0.0
    %2406 = vmatprep.subr.mxu0 0.0
    %2407 = vmatpush1.msra.mxu0 0.0
    %2408 = vmatprep.subr.mxu0 0.0
    %2409 = vmatpush1.msra.mxu0 0.0
    %2410 = vmatprep.subr.mxu0 0.0
    %2411 = vmatpush1.msra.mxu0 0.0
    %2412 = vmatprep.subr.mxu0 0.0
    %2413 = vmatpush1.msra.mxu0 0.0
    %2414 = vmatprep.subr.mxu0 0.0
    %2415 = vmatpush1.msra.mxu0 0.0
    %2416 = vmatprep.subr.mxu0 0.0
    %2417 = vmatpush1.msra.mxu0 0.0
    %2418 = vmatprep.subr.mxu0 0.0
    %2419 = vmatpush1.msra.mxu0 0.0
    %2420 = vmatprep.subr.mxu0 0.0
    %2421 = vmatpush1.msra.mxu0 0.0
    %2422 = vmatprep.mubr.f32.mxu0 0.0
    %2423 = vmatmul.mubr.f32.gmra.mrb[0].mxu0 %v2356
    %v2424 = vpop.f32.mrb[0].mxu0
    %v2425 = vadd.f32 %v2350, %v2424
    %v2426 = vpop.f32.mrb[0].mxu0
    %2427 = vdwg.mxu0
    %v2428 = vadd.f32 %v2425, %v281
    %v2429 = vmul.f32 %v2428, 0.5
    %v2430 = vtanh.pop %v2429
    %v2431 = vmul.f32 %v2430, 0.5
    %v2432 = vadd.f32 %v2431, 0.5
    %v2433 = vtanh.pop %v2428
    %v2434 = vmul.f32 %v2432, %v2010
    %2436 = vrot.lane.b32.xlu0 %v2433, 64
    %v2437 = vpop.permute.xlu0 %2436
    %v2439 = vmul.f32 %v2432, %v2437
    %2441 = vrot.lane.b32.xlu0 %v2439, 32
    %v2442 = vpop.permute.xlu0 %2441
    %v2444 = vadd.f32 %v2434, %v2442
    %v2445 = vtanh.pop %v2444
    %2447 = vrot.lane.b32.xlu0 %v2445, 64
    %v2448 = vpop.permute.xlu0 %2447
    %v2450 = vmul.f32 %v2432, %v2448
    %2451 = vmatprep.subr.mxu0 0.0
    %2452 = vmatpush1.msra.mxu0 %v252
    %2453 = vmatprep.subr.mxu0 0.0
    %2454 = vmatpush1.msra.mxu0 %v253
    %2455 = vmatprep.subr.mxu0 0.0
    %2456 = vmatpush1.msra.mxu0 %v254
    %2457 = vmatprep.subr.mxu0 0.0
    %2458 = vmatpush1.msra.mxu0 %v255
    %2459 = vmatprep.subr.mxu0 0.0
    %2460 = vmatpush1.msra.mxu0 0.0
    %2461 = vmatprep.subr.mxu0 0.0
    %2462 = vmatpush1.msra.mxu0 0.0
    %2463 = vmatprep.subr.mxu0 0.0
    %2464 = vmatpush1.msra.mxu0 0.0
    %2465 = vmatprep.subr.mxu0 0.0
    %2466 = vmatpush1.msra.mxu0 0.0
    %2467 = vmatprep.subr.mxu0 0.0
    %2468 = vmatpush1.msra.mxu0 0.0
    %2469 = vmatprep.subr.mxu0 0.0
    %2470 = vmatpush1.msra.mxu0 0.0
    %2471 = vmatprep.subr.mxu0 0.0
    %2472 = vmatpush1.msra.mxu0 0.0
    %2473 = vmatprep.subr.mxu0 0.0
    %2474 = vmatpush1.msra.mxu0 0.0
    %2475 = vmatprep.subr.mxu0 0.0
    %2476 = vmatpush1.msra.mxu0 0.0
    %2477 = vmatprep.subr.mxu0 0.0
    %2478 = vmatpush1.msra.mxu0 0.0
    %2479 = vmatprep.subr.mxu0 0.0
    %2480 = vmatpush1.msra.mxu0 0.0
    %2481 = vmatprep.subr.mxu0 0.0
    %2482 = vmatpush1.msra.mxu0 0.0
    %2483 = vmatprep.subr.mxu0 0.0
    %2484 = vmatpush1.msra.mxu0 0.0
    %2485 = vmatprep.subr.mxu0 0.0
    %2486 = vmatpush1.msra.mxu0 0.0
    %2487 = vmatprep.subr.mxu0 0.0
    %2488 = vmatpush1.msra.mxu0 0.0
    %2489 = vmatprep.subr.mxu0 0.0
    %2490 = vmatpush1.msra.mxu0 0.0
    %2491 = vmatprep.subr.mxu0 0.0
    %2492 = vmatpush1.msra.mxu0 0.0
    %2493 = vmatprep.subr.mxu0 0.0
    %2494 = vmatpush1.msra.mxu0 0.0
    %2495 = vmatprep.subr.mxu0 0.0
    %2496 = vmatpush1.msra.mxu0 0.0
    %2497 = vmatprep.subr.mxu0 0.0
    %2498 = vmatpush1.msra.mxu0 0.0
    %2499 = vmatprep.subr.mxu0 0.0
    %2500 = vmatpush1.msra.mxu0 0.0
    %2501 = vmatprep.subr.mxu0 0.0
    %2502 = vmatpush1.msra.mxu0 0.0
    %2503 = vmatprep.subr.mxu0 0.0
    %2504 = vmatpush1.msra.mxu0 0.0
    %2505 = vmatprep.subr.mxu0 0.0
    %2506 = vmatpush1.msra.mxu0 0.0
    %2507 = vmatprep.subr.mxu0 0.0
    %2508 = vmatpush1.msra.mxu0 0.0
    %2509 = vmatprep.subr.mxu0 0.0
    %2510 = vmatpush1.msra.mxu0 0.0
    %2511 = vmatprep.subr.mxu0 0.0
    %2512 = vmatpush1.msra.mxu0 0.0
    %2513 = vmatprep.subr.mxu0 0.0
    %2514 = vmatpush1.msra.mxu0 0.0
    %2515 = vmatprep.mubr.f32.mxu0 0.0
    %2516 = vmatmul.mubr.f32.gmra.mrb[0].mxu0 %v2183
    %v2517 = vpop.f32.mrb[0].mxu0
    %v2518 = vadd.f32 0.0, %v2517
    %v2519 = vpop.f32.mrb[0].mxu0
    %2520 = vdwg.mxu0
    %v2521 = vadd.f32 %v249, %v2518
    %v2522 = vmul.f32 %v2521, 0.5
    %v2523 = vtanh.pop %v2522
    %v2524 = vmul.f32 %v2523, 0.5
    %v2525 = vadd.f32 %v2524, 0.5
    %v2526 = vtanh.pop %v2521
    %v2527 = vmul.f32 %v2525, %v2103
    %2529 = vrot.lane.b32.xlu0 %v2526, 64
    %v2530 = vpop.permute.xlu0 %2529
    %v2532 = vmul.f32 %v2525, %v2530
    %2534 = vrot.lane.b32.xlu0 %v2532, 32
    %v2535 = vpop.permute.xlu0 %2534
    %v2537 = vadd.f32 %v2527, %v2535
    %v2538 = vtanh.pop %v2537
    %2540 = vrot.lane.b32.xlu0 %v2538, 64
    %v2541 = vpop.permute.xlu0 %2540
    %v2543 = vmul.f32 %v2525, %v2541
    %2544 = vmatprep.subr.mxu0 0.0
    %2545 = vmatpush1.msra.mxu0 %v260
    %2546 = vmatprep.subr.mxu0 0.0
    %2547 = vmatpush1.msra.mxu0 %v261
    %2548 = vmatprep.subr.mxu0 0.0
    %2549 = vmatpush1.msra.mxu0 %v262
    %2550 = vmatprep.subr.mxu0 0.0
    %2551 = vmatpush1.msra.mxu0 %v263
    %2552 = vmatprep.subr.mxu0 0.0
    %2553 = vmatpush1.msra.mxu0 0.0
    %2554 = vmatprep.subr.mxu0 0.0
    %2555 = vmatpush1.msra.mxu0 0.0
    %2556 = vmatprep.subr.mxu0 0.0
    %2557 = vmatpush1.msra.mxu0 0.0
    %2558 = vmatprep.subr.mxu0 0.0
    %2559 = vmatpush1.msra.mxu0 0.0
    %2560 = vmatprep.subr.mxu0 0.0
    %2561 = vmatpush1.msra.mxu0 0.0
    %2562 = vmatprep.subr.mxu0 0.0
    %2563 = vmatpush1.msra.mxu0 0.0
    %2564 = vmatprep.subr.mxu0 0.0
    %2565 = vmatpush1.msra.mxu0 0.0
    %2566 = vmatprep.subr.mxu0 0.0
    %2567 = vmatpush1.msra.mxu0 0.0
    %2568 = vmatprep.subr.mxu0 0.0
    %2569 = vmatpush1.msra.mxu0 0.0
    %2570 = vmatprep.subr.mxu0 0.0
    %2571 = vmatpush1.msra.mxu0 0.0
    %2572 = vmatprep.subr.mxu0 0.0
    %2573 = vmatpush1.msra.mxu0 0.0
    %2574 = vmatprep.subr.mxu0 0.0
    %2575 = vmatpush1.msra.mxu0 0.0
    %2576 = vmatprep.subr.mxu0 0.0
    %2577 = vmatpush1.msra.mxu0 0.0
    %2578 = vmatprep.subr.mxu0 0.0
    %2579 = vmatpush1.msra.mxu0 0.0
    %2580 = vmatprep.subr.mxu0 0.0
    %2581 = vmatpush1.msra.mxu0 0.0
    %2582 = vmatprep.subr.mxu0 0.0
    %2583 = vmatpush1.msra.mxu0 0.0
    %2584 = vmatprep.subr.mxu0 0.0
    %2585 = vmatpush1.msra.mxu0 0.0
    %2586 = vmatprep.subr.mxu0 0.0
    %2587 = vmatpush1.msra.mxu0 0.0
    %2588 = vmatprep.subr.mxu0 0.0
    %2589 = vmatpush1.msra.mxu0 0.0
    %2590 = vmatprep.subr.mxu0 0.0
    %2591 = vmatpush1.msra.mxu0 0.0
    %2592 = vmatprep.subr.mxu0 0.0
    %2593 = vmatpush1.msra.mxu0 0.0
    %2594 = vmatprep.subr.mxu0 0.0
    %2595 = vmatpush1.msra.mxu0 0.0
    %2596 = vmatprep.subr.mxu0 0.0
    %2597 = vmatpush1.msra.mxu0 0.0
    %2598 = vmatprep.subr.mxu0 0.0
    %2599 = vmatpush1.msra.mxu0 0.0
    %2600 = vmatprep.subr.mxu0 0.0
    %2601 = vmatpush1.msra.mxu0 0.0
    %2602 = vmatprep.subr.mxu0 0.0
    %2603 = vmatpush1.msra.mxu0 0.0
    %2604 = vmatprep.subr.mxu0 0.0
    %2605 = vmatpush1.msra.mxu0 0.0
    %2606 = vmatprep.subr.mxu0 0.0
    %2607 = vmatpush1.msra.mxu0 0.0
    %2608 = vmatprep.mubr.f32.mxu0 0.0
    %2609 = vmatmul.mubr.f32.gmra.mrb[0].mxu0 %v2356
    %v2610 = vpop.f32.mrb[0].mxu0
    %v2611 = vadd.f32 0.0, %v2610
    %v2612 = vpop.f32.mrb[0].mxu0
    %2613 = vdwg.mxu0
    %2615 = vrot.lane.b32.xlu0 %v2543, 32
    %v2616 = vpop.permute.xlu0 %2615
    %v2617 = vsel %vm282, %v2616, 0
    %2619 = vmatprep.subr.mxu0 0.0
    %2620 = vmatpush1.msra.mxu0 %v256
    %2621 = vmatprep.subr.mxu0 0.0
    %2622 = vmatpush1.msra.mxu0 %v257
    %2623 = vmatprep.subr.mxu0 0.0
    %2624 = vmatpush1.msra.mxu0 %v258
    %2625 = vmatprep.subr.mxu0 0.0
    %2626 = vmatpush1.msra.mxu0 %v259
    %2627 = vmatprep.subr.mxu0 0.0
    %2628 = vmatpush1.msra.mxu0 0.0
    %2629 = vmatprep.subr.mxu0 0.0
    %2630 = vmatpush1.msra.mxu0 0.0
    %2631 = vmatprep.subr.mxu0 0.0
    %2632 = vmatpush1.msra.mxu0 0.0
    %2633 = vmatprep.subr.mxu0 0.0
    %2634 = vmatpush1.msra.mxu0 0.0
    %2635 = vmatprep.subr.mxu0 0.0
    %2636 = vmatpush1.msra.mxu0 0.0
    %2637 = vmatprep.subr.mxu0 0.0
    %2638 = vmatpush1.msra.mxu0 0.0
    %2639 = vmatprep.subr.mxu0 0.0
    %2640 = vmatpush1.msra.mxu0 0.0
    %2641 = vmatprep.subr.mxu0 0.0
    %2642 = vmatpush1.msra.mxu0 0.0
    %2643 = vmatprep.subr.mxu0 0.0
    %2644 = vmatpush1.msra.mxu0 0.0
    %2645 = vmatprep.subr.mxu0 0.0
    %2646 = vmatpush1.msra.mxu0 0.0
    %2647 = vmatprep.subr.mxu0 0.0
    %2648 = vmatpush1.msra.mxu0 0.0
    %2649 = vmatprep.subr.mxu0 0.0
    %2650 = vmatpush1.msra.mxu0 0.0
    %2651 = vmatprep.subr.mxu0 0.0
    %2652 = vmatpush1.msra.mxu0 0.0
    %2653 = vmatprep.subr.mxu0 0.0
    %2654 = vmatpush1.msra.mxu0 0.0
    %2655 = vmatprep.subr.mxu0 0.0
    %2656 = vmatpush1.msra.mxu0 0.0
    %2657 = vmatprep.subr.mxu0 0.0
    %2658 = vmatpush1.msra.mxu0 0.0
    %2659 = vmatprep.subr.mxu0 0.0
    %2660 = vmatpush1.msra.mxu0 0.0
    %2661 = vmatprep.subr.mxu0 0.0
    %2662 = vmatpush1.msra.mxu0 0.0
    %2663 = vmatprep.subr.mxu0 0.0
    %2664 = vmatpush1.msra.mxu0 0.0
    %2665 = vmatprep.subr.mxu0 0.0
    %2666 = vmatpush1.msra.mxu0 0.0
    %2667 = vmatprep.subr.mxu0 0.0
    %2668 = vmatpush1.msra.mxu0 0.0
    %2669 = vmatprep.subr.mxu0 0.0
    %2670 = vmatpush1.msra.mxu0 0.0
    %2671 = vmatprep.subr.mxu0 0.0
    %2672 = vmatpush1.msra.mxu0 0.0
    %2673 = vmatprep.subr.mxu0 0.0
    %2674 = vmatpush1.msra.mxu0 0.0
    %2675 = vmatprep.subr.mxu0 0.0
    %2676 = vmatpush1.msra.mxu0 0.0
    %2677 = vmatprep.subr.mxu0 0.0
    %2678 = vmatpush1.msra.mxu0 0.0
    %2679 = vmatprep.subr.mxu0 0.0
    %2680 = vmatpush1.msra.mxu0 0.0
    %2681 = vmatprep.subr.mxu0 0.0
    %2682 = vmatpush1.msra.mxu0 0.0
    %2683 = vmatprep.mubr.f32.mxu0 0.0
    %2684 = vmatmul.mubr.f32.gmra.mrb[0].mxu0 %v2617
    %v2685 = vpop.f32.mrb[0].mxu0
    %v2686 = vadd.f32 %v2611, %v2685
    %v2687 = vpop.f32.mrb[0].mxu0
    %2688 = vdwg.mxu0
    %v2689 = vadd.f32 %v2686, %v276
    %v2690 = vmul.f32 %v2689, 0.5
    %v2691 = vtanh.pop %v2690
    %v2692 = vmul.f32 %v2691, 0.5
    %v2693 = vadd.f32 %v2692, 0.5
    %v2694 = vtanh.pop %v2689
    %v2695 = vmul.f32 %v2693, %v2271
    %2697 = vrot.lane.b32.xlu0 %v2694, 64
    %v2698 = vpop.permute.xlu0 %2697
    %v2700 = vmul.f32 %v2693, %v2698
    %2702 = vrot.lane.b32.xlu0 %v2700, 32
    %v2703 = vpop.permute.xlu0 %2702
    %v2705 = vadd.f32 %v2695, %v2703
    %v2706 = vtanh.pop %v2705
    %2708 = vrot.lane.b32.xlu0 %v2706, 64
    %v2709 = vpop.permute.xlu0 %2708
    %v2711 = vmul.f32 %v2693, %v2709
    %2713 = vrot.lane.b32.xlu0 %v2450, 32
    %v2714 = vpop.permute.xlu0 %2713
    %v2715 = vsel %vm282, %v2714, 0
    %2717 = vmatprep.subr.mxu0 0.0
    %2718 = vmatpush1.msra.mxu0 %v268
    %2719 = vmatprep.subr.mxu0 0.0
    %2720 = vmatpush1.msra.mxu0 %v269
    %2721 = vmatprep.subr.mxu0 0.0
    %2722 = vmatpush1.msra.mxu0 %v270
    %2723 = vmatprep.subr.mxu0 0.0
    %2724 = vmatpush1.msra.mxu0 %v271
    %2725 = vmatprep.subr.mxu0 0.0
    %2726 = vmatpush1.msra.mxu0 0.0
    %2727 = vmatprep.subr.mxu0 0.0
    %2728 = vmatpush1.msra.mxu0 0.0
    %2729 = vmatprep.subr.mxu0 0.0
    %2730 = vmatpush1.msra.mxu0 0.0
    %2731 = vmatprep.subr.mxu0 0.0
    %2732 = vmatpush1.msra.mxu0 0.0
    %2733 = vmatprep.subr.mxu0 0.0
    %2734 = vmatpush1.msra.mxu0 0.0
    %2735 = vmatprep.subr.mxu0 0.0
    %2736 = vmatpush1.msra.mxu0 0.0
    %2737 = vmatprep.subr.mxu0 0.0
    %2738 = vmatpush1.msra.mxu0 0.0
    %2739 = vmatprep.subr.mxu0 0.0
    %2740 = vmatpush1.msra.mxu0 0.0
    %2741 = vmatprep.subr.mxu0 0.0
    %2742 = vmatpush1.msra.mxu0 0.0
    %2743 = vmatprep.subr.mxu0 0.0
    %2744 = vmatpush1.msra.mxu0 0.0
    %2745 = vmatprep.subr.mxu0 0.0
    %2746 = vmatpush1.msra.mxu0 0.0
    %2747 = vmatprep.subr.mxu0 0.0
    %2748 = vmatpush1.msra.mxu0 0.0
    %2749 = vmatprep.subr.mxu0 0.0
    %2750 = vmatpush1.msra.mxu0 0.0
    %2751 = vmatprep.subr.mxu0 0.0
    %2752 = vmatpush1.msra.mxu0 0.0
    %2753 = vmatprep.subr.mxu0 0.0
    %2754 = vmatpush1.msra.mxu0 0.0
    %2755 = vmatprep.subr.mxu0 0.0
    %2756 = vmatpush1.msra.mxu0 0.0
    %2757 = vmatprep.subr.mxu0 0.0
    %2758 = vmatpush1.msra.mxu0 0.0
    %2759 = vmatprep.subr.mxu0 0.0
    %2760 = vmatpush1.msra.mxu0 0.0
    %2761 = vmatprep.subr.mxu0 0.0
    %2762 = vmatpush1.msra.mxu0 0.0
    %2763 = vmatprep.subr.mxu0 0.0
    %2764 = vmatpush1.msra.mxu0 0.0
    %2765 = vmatprep.subr.mxu0 0.0
    %2766 = vmatpush1.msra.mxu0 0.0
    %2767 = vmatprep.subr.mxu0 0.0
    %2768 = vmatpush1.msra.mxu0 0.0
    %2769 = vmatprep.subr.mxu0 0.0
    %2770 = vmatpush1.msra.mxu0 0.0
    %2771 = vmatprep.subr.mxu0 0.0
    %2772 = vmatpush1.msra.mxu0 0.0
    %2773 = vmatprep.subr.mxu0 0.0
    %2774 = vmatpush1.msra.mxu0 0.0
    %2775 = vmatprep.subr.mxu0 0.0
    %2776 = vmatpush1.msra.mxu0 0.0
    %2777 = vmatprep.subr.mxu0 0.0
    %2778 = vmatpush1.msra.mxu0 0.0
    %2779 = vmatprep.subr.mxu0 0.0
    %2780 = vmatpush1.msra.mxu0 0.0
    %2781 = vmatprep.mubr.f32.mxu0 0.0
    %2782 = vmatmul.mubr.f32.gmra.mrb[0].mxu0 %v2715
    %v2783 = vpop.f32.mrb[0].mxu0
    %v2784 = vadd.f32 0.0, %v2783
    %v2785 = vpop.f32.mrb[0].mxu0
    %2786 = vdwg.mxu0
    %2788 = vrot.lane.b32.xlu0 %v2711, 32
    %v2789 = vpop.permute.xlu0 %2788
    %v2790 = vsel %vm282, %v2789, 0
    %2792 = vmatprep.subr.mxu0 0.0
    %2793 = vmatpush1.msra.mxu0 %v264
    %2794 = vmatprep.subr.mxu0 0.0
    %2795 = vmatpush1.msra.mxu0 %v265
    %2796 = vmatprep.subr.mxu0 0.0
    %2797 = vmatpush1.msra.mxu0 %v266
    %2798 = vmatprep.subr.mxu0 0.0
    %2799 = vmatpush1.msra.mxu0 %v267
    %2800 = vmatprep.subr.mxu0 0.0
    %2801 = vmatpush1.msra.mxu0 0.0
    %2802 = vmatprep.subr.mxu0 0.0
    %2803 = vmatpush1.msra.mxu0 0.0
    %2804 = vmatprep.subr.mxu0 0.0
    %2805 = vmatpush1.msra.mxu0 0.0
    %2806 = vmatprep.subr.mxu0 0.0
    %2807 = vmatpush1.msra.mxu0 0.0
    %2808 = vmatprep.subr.mxu0 0.0
    %2809 = vmatpush1.msra.mxu0 0.0
    %2810 = vmatprep.subr.mxu0 0.0
    %2811 = vmatpush1.msra.mxu0 0.0
    %2812 = vmatprep.subr.mxu0 0.0
    %2813 = vmatpush1.msra.mxu0 0.0
    %2814 = vmatprep.subr.mxu0 0.0
    %2815 = vmatpush1.msra.mxu0 0.0
    %2816 = vmatprep.subr.mxu0 0.0
    %2817 = vmatpush1.msra.mxu0 0.0
    %2818 = vmatprep.subr.mxu0 0.0
    %2819 = vmatpush1.msra.mxu0 0.0
    %2820 = vmatprep.subr.mxu0 0.0
    %2821 = vmatpush1.msra.mxu0 0.0
    %2822 = vmatprep.subr.mxu0 0.0
    %2823 = vmatpush1.msra.mxu0 0.0
    %2824 = vmatprep.subr.mxu0 0.0
    %2825 = vmatpush1.msra.mxu0 0.0
    %2826 = vmatprep.subr.mxu0 0.0
    %2827 = vmatpush1.msra.mxu0 0.0
    %2828 = vmatprep.subr.mxu0 0.0
    %2829 = vmatpush1.msra.mxu0 0.0
    %2830 = vmatprep.subr.mxu0 0.0
    %2831 = vmatpush1.msra.mxu0 0.0
    %2832 = vmatprep.subr.mxu0 0.0
    %2833 = vmatpush1.msra.mxu0 0.0
    %2834 = vmatprep.subr.mxu0 0.0
    %2835 = vmatpush1.msra.mxu0 0.0
    %2836 = vmatprep.subr.mxu0 0.0
    %2837 = vmatpush1.msra.mxu0 0.0
    %2838 = vmatprep.subr.mxu0 0.0
    %2839 = vmatpush1.msra.mxu0 0.0
    %2840 = vmatprep.subr.mxu0 0.0
    %2841 = vmatpush1.msra.mxu0 0.0
    %2842 = vmatprep.subr.mxu0 0.0
    %2843 = vmatpush1.msra.mxu0 0.0
    %2844 = vmatprep.subr.mxu0 0.0
    %2845 = vmatpush1.msra.mxu0 0.0
    %2846 = vmatprep.subr.mxu0 0.0
    %2847 = vmatpush1.msra.mxu0 0.0
    %2848 = vmatprep.subr.mxu0 0.0
    %2849 = vmatpush1.msra.mxu0 0.0
    %2850 = vmatprep.subr.mxu0 0.0
    %2851 = vmatpush1.msra.mxu0 0.0
    %2852 = vmatprep.subr.mxu0 0.0
    %2853 = vmatpush1.msra.mxu0 0.0
    %2854 = vmatprep.subr.mxu0 0.0
    %2855 = vmatpush1.msra.mxu0 0.0
    %2856 = vmatprep.mubr.f32.mxu0 0.0
    %2857 = vmatmul.mubr.f32.gmra.mrb[0].mxu0 %v2790
    %v2858 = vpop.f32.mrb[0].mxu0
    %v2859 = vadd.f32 %v2784, %v2858
    %v2860 = vpop.f32.mrb[0].mxu0
    %2861 = vdwg.mxu0
    %v2862 = vadd.f32 %v2859, %v281
    %v2863 = vmul.f32 %v2862, 0.5
    %v2864 = vtanh.pop %v2863
    %v2865 = vmul.f32 %v2864, 0.5
    %v2866 = vadd.f32 %v2865, 0.5
    %v2867 = vtanh.pop %v2862
    %v2868 = vmul.f32 %v2866, %v2444
    %2870 = vrot.lane.b32.xlu0 %v2867, 64
    %v2871 = vpop.permute.xlu0 %2870
    %v2873 = vmul.f32 %v2866, %v2871
    %2875 = vrot.lane.b32.xlu0 %v2873, 32
    %v2876 = vpop.permute.xlu0 %2875
    %v2878 = vadd.f32 %v2868, %v2876
    %v2879 = vtanh.pop %v2878
    %2881 = vrot.lane.b32.xlu0 %v2879, 64
    %v2882 = vpop.permute.xlu0 %2881
    %v2884 = vmul.f32 %v2866, %v2882
    %2885 = vmatprep.subr.mxu0 0.0
    %2886 = vmatpush1.msra.mxu0 %v252
    %2887 = vmatprep.subr.mxu0 0.0
    %2888 = vmatpush1.msra.mxu0 %v253
    %2889 = vmatprep.subr.mxu0 0.0
    %2890 = vmatpush1.msra.mxu0 %v254
    %2891 = vmatprep.subr.mxu0 0.0
    %2892 = vmatpush1.msra.mxu0 %v255
    %2893 = vmatprep.subr.mxu0 0.0
    %2894 = vmatpush1.msra.mxu0 0.0
    %2895 = vmatprep.subr.mxu0 0.0
    %2896 = vmatpush1.msra.mxu0 0.0
    %2897 = vmatprep.subr.mxu0 0.0
    %2898 = vmatpush1.msra.mxu0 0.0
    %2899 = vmatprep.subr.mxu0 0.0
    %2900 = vmatpush1.msra.mxu0 0.0
    %2901 = vmatprep.subr.mxu0 0.0
    %2902 = vmatpush1.msra.mxu0 0.0
    %2903 = vmatprep.subr.mxu0 0.0
    %2904 = vmatpush1.msra.mxu0 0.0
    %2905 = vmatprep.subr.mxu0 0.0
    %2906 = vmatpush1.msra.mxu0 0.0
    %2907 = vmatprep.subr.mxu0 0.0
    %2908 = vmatpush1.msra.mxu0 0.0
    %2909 = vmatprep.subr.mxu0 0.0
    %2910 = vmatpush1.msra.mxu0 0.0
    %2911 = vmatprep.subr.mxu0 0.0
    %2912 = vmatpush1.msra.mxu0 0.0
    %2913 = vmatprep.subr.mxu0 0.0
    %2914 = vmatpush1.msra.mxu0 0.0
    %2915 = vmatprep.subr.mxu0 0.0
    %2916 = vmatpush1.msra.mxu0 0.0
    %2917 = vmatprep.subr.mxu0 0.0
    %2918 = vmatpush1.msra.mxu0 0.0
    %2919 = vmatprep.subr.mxu0 0.0
    %2920 = vmatpush1.msra.mxu0 0.0
    %2921 = vmatprep.subr.mxu0 0.0
    %2922 = vmatpush1.msra.mxu0 0.0
    %2923 = vmatprep.subr.mxu0 0.0
    %2924 = vmatpush1.msra.mxu0 0.0
    %2925 = vmatprep.subr.mxu0 0.0
    %2926 = vmatpush1.msra.mxu0 0.0
    %2927 = vmatprep.subr.mxu0 0.0
    %2928 = vmatpush1.msra.mxu0 0.0
    %2929 = vmatprep.subr.mxu0 0.0
    %2930 = vmatpush1.msra.mxu0 0.0
    %2931 = vmatprep.subr.mxu0 0.0
    %2932 = vmatpush1.msra.mxu0 0.0
    %2933 = vmatprep.subr.mxu0 0.0
    %2934 = vmatpush1.msra.mxu0 0.0
    %2935 = vmatprep.subr.mxu0 0.0
    %2936 = vmatpush1.msra.mxu0 0.0
    %2937 = vmatprep.subr.mxu0 0.0
    %2938 = vmatpush1.msra.mxu0 0.0
    %2939 = vmatprep.subr.mxu0 0.0
    %2940 = vmatpush1.msra.mxu0 0.0
    %2941 = vmatprep.subr.mxu0 0.0
    %2942 = vmatpush1.msra.mxu0 0.0
    %2943 = vmatprep.subr.mxu0 0.0
    %2944 = vmatpush1.msra.mxu0 0.0
    %2945 = vmatprep.subr.mxu0 0.0
    %2946 = vmatpush1.msra.mxu0 0.0
    %2947 = vmatprep.subr.mxu0 0.0
    %2948 = vmatpush1.msra.mxu0 0.0
    %2949 = vmatprep.mubr.f32.mxu0 0.0
    %2950 = vmatmul.mubr.f32.gmra.mrb[0].mxu0 %v2617
    %v2951 = vpop.f32.mrb[0].mxu0
    %v2952 = vadd.f32 0.0, %v2951
    %v2953 = vpop.f32.mrb[0].mxu0
    %2954 = vdwg.mxu0
    %v2955 = vadd.f32 %v250, %v2952
    %v2956 = vmul.f32 %v2955, 0.5
    %v2957 = vtanh.pop %v2956
    %v2958 = vmul.f32 %v2957, 0.5
    %v2959 = vadd.f32 %v2958, 0.5
    %v2960 = vtanh.pop %v2955
    %v2961 = vmul.f32 %v2959, %v2537
    %2963 = vrot.lane.b32.xlu0 %v2960, 64
    %v2964 = vpop.permute.xlu0 %2963
    %v2966 = vmul.f32 %v2959, %v2964
    %2968 = vrot.lane.b32.xlu0 %v2966, 32
    %v2969 = vpop.permute.xlu0 %2968
    %v2971 = vadd.f32 %v2961, %v2969
    %v2972 = vtanh.pop %v2971
    %2974 = vrot.lane.b32.xlu0 %v2972, 64
    %v2975 = vpop.permute.xlu0 %2974
    %v2977 = vmul.f32 %v2959, %v2975
    %2978 = vmatprep.subr.mxu0 0.0
    %2979 = vmatpush1.msra.mxu0 %v260
    %2980 = vmatprep.subr.mxu0 0.0
    %2981 = vmatpush1.msra.mxu0 %v261
    %2982 = vmatprep.subr.mxu0 0.0
    %2983 = vmatpush1.msra.mxu0 %v262
    %2984 = vmatprep.subr.mxu0 0.0
    %2985 = vmatpush1.msra.mxu0 %v263
    %2986 = vmatprep.subr.mxu0 0.0
    %2987 = vmatpush1.msra.mxu0 0.0
    %2988 = vmatprep.subr.mxu0 0.0
    %2989 = vmatpush1.msra.mxu0 0.0
    %2990 = vmatprep.subr.mxu0 0.0
    %2991 = vmatpush1.msra.mxu0 0.0
    %2992 = vmatprep.subr.mxu0 0.0
    %2993 = vmatpush1.msra.mxu0 0.0
    %2994 = vmatprep.subr.mxu0 0.0
    %2995 = vmatpush1.msra.mxu0 0.0
    %2996 = vmatprep.subr.mxu0 0.0
    %2997 = vmatpush1.msra.mxu0 0.0
    %2998 = vmatprep.subr.mxu0 0.0
    %2999 = vmatpush1.msra.mxu0 0.0
    %3000 = vmatprep.subr.mxu0 0.0
    %3001 = vmatpush1.msra.mxu0 0.0
    %3002 = vmatprep.subr.mxu0 0.0
    %3003 = vmatpush1.msra.mxu0 0.0
    %3004 = vmatprep.subr.mxu0 0.0
    %3005 = vmatpush1.msra.mxu0 0.0
    %3006 = vmatprep.subr.mxu0 0.0
    %3007 = vmatpush1.msra.mxu0 0.0
    %3008 = vmatprep.subr.mxu0 0.0
    %3009 = vmatpush1.msra.mxu0 0.0
    %3010 = vmatprep.subr.mxu0 0.0
    %3011 = vmatpush1.msra.mxu0 0.0
    %3012 = vmatprep.subr.mxu0 0.0
    %3013 = vmatpush1.msra.mxu0 0.0
    %3014 = vmatprep.subr.mxu0 0.0
    %3015 = vmatpush1.msra.mxu0 0.0
    %3016 = vmatprep.subr.mxu0 0.0
    %3017 = vmatpush1.msra.mxu0 0.0
    %3018 = vmatprep.subr.mxu0 0.0
    %3019 = vmatpush1.msra.mxu0 0.0
    %3020 = vmatprep.subr.mxu0 0.0
    %3021 = vmatpush1.msra.mxu0 0.0
    %3022 = vmatprep.subr.mxu0 0.0
    %3023 = vmatpush1.msra.mxu0 0.0
    %3024 = vmatprep.subr.mxu0 0.0
    %3025 = vmatpush1.msra.mxu0 0.0
    %3026 = vmatprep.subr.mxu0 0.0
    %3027 = vmatpush1.msra.mxu0 0.0
    %3028 = vmatprep.subr.mxu0 0.0
    %3029 = vmatpush1.msra.mxu0 0.0
    %3030 = vmatprep.subr.mxu0 0.0
    %3031 = vmatpush1.msra.mxu0 0.0
    %3032 = vmatprep.subr.mxu0 0.0
    %3033 = vmatpush1.msra.mxu0 0.0
    %3034 = vmatprep.subr.mxu0 0.0
    %3035 = vmatpush1.msra.mxu0 0.0
    %3036 = vmatprep.subr.mxu0 0.0
    %3037 = vmatpush1.msra.mxu0 0.0
    %3038 = vmatprep.subr.mxu0 0.0
    %3039 = vmatpush1.msra.mxu0 0.0
    %3040 = vmatprep.subr.mxu0 0.0
    %3041 = vmatpush1.msra.mxu0 0.0
    %3042 = vmatprep.mubr.f32.mxu0 0.0
    %3043 = vmatmul.mubr.f32.gmra.mrb[0].mxu0 %v2790
    %v3044 = vpop.f32.mrb[0].mxu0
    %v3045 = vadd.f32 0.0, %v3044
    %v3046 = vpop.f32.mrb[0].mxu0
    %3047 = vdwg.mxu0
    %3049 = vrot.lane.b32.xlu0 %v2977, 32
    %v3050 = vpop.permute.xlu0 %3049
    %v3051 = vsel %vm282, %v3050, 0
    %3053 = vmatprep.subr.mxu0 0.0
    %3054 = vmatpush1.msra.mxu0 %v256
    %3055 = vmatprep.subr.mxu0 0.0
    %3056 = vmatpush1.msra.mxu0 %v257
    %3057 = vmatprep.subr.mxu0 0.0
    %3058 = vmatpush1.msra.mxu0 %v258
    %3059 = vmatprep.subr.mxu0 0.0
    %3060 = vmatpush1.msra.mxu0 %v259
    %3061 = vmatprep.subr.mxu0 0.0
    %3062 = vmatpush1.msra.mxu0 0.0
    %3063 = vmatprep.subr.mxu0 0.0
    %3064 = vmatpush1.msra.mxu0 0.0
    %3065 = vmatprep.subr.mxu0 0.0
    %3066 = vmatpush1.msra.mxu0 0.0
    %3067 = vmatprep.subr.mxu0 0.0
    %3068 = vmatpush1.msra.mxu0 0.0
    %3069 = vmatprep.subr.mxu0 0.0
    %3070 = vmatpush1.msra.mxu0 0.0
    %3071 = vmatprep.subr.mxu0 0.0
    %3072 = vmatpush1.msra.mxu0 0.0
    %3073 = vmatprep.subr.mxu0 0.0
    %3074 = vmatpush1.msra.mxu0 0.0
    %3075 = vmatprep.subr.mxu0 0.0
    %3076 = vmatpush1.msra.mxu0 0.0
    %3077 = vmatprep.subr.mxu0 0.0
    %3078 = vmatpush1.msra.mxu0 0.0
    %3079 = vmatprep.subr.mxu0 0.0
    %3080 = vmatpush1.msra.mxu0 0.0
    %3081 = vmatprep.subr.mxu0 0.0
    %3082 = vmatpush1.msra.mxu0 0.0
    %3083 = vmatprep.subr.mxu0 0.0
    %3084 = vmatpush1.msra.mxu0 0.0
    %3085 = vmatprep.subr.mxu0 0.0
    %3086 = vmatpush1.msra.mxu0 0.0
    %3087 = vmatprep.subr.mxu0 0.0
    %3088 = vmatpush1.msra.mxu0 0.0
    %3089 = vmatprep.subr.mxu0 0.0
    %3090 = vmatpush1.msra.mxu0 0.0
    %3091 = vmatprep.subr.mxu0 0.0
    %3092 = vmatpush1.msra.mxu0 0.0
    %3093 = vmatprep.subr.mxu0 0.0
    %3094 = vmatpush1.msra.mxu0 0.0
    %3095 = vmatprep.subr.mxu0 0.0
    %3096 = vmatpush1.msra.mxu0 0.0
    %3097 = vmatprep.subr.mxu0 0.0
    %3098 = vmatpush1.msra.mxu0 0.0
    %3099 = vmatprep.subr.mxu0 0.0
    %3100 = vmatpush1.msra.mxu0 0.0
    %3101 = vmatprep.subr.mxu0 0.0
    %3102 = vmatpush1.msra.mxu0 0.0
    %3103 = vmatprep.subr.mxu0 0.0
    %3104 = vmatpush1.msra.mxu0 0.0
    %3105 = vmatprep.subr.mxu0 0.0
    %3106 = vmatpush1.msra.mxu0 0.0
    %3107 = vmatprep.subr.mxu0 0.0
    %3108 = vmatpush1.msra.mxu0 0.0
    %3109 = vmatprep.subr.mxu0 0.0
    %3110 = vmatpush1.msra.mxu0 0.0
    %3111 = vmatprep.subr.mxu0 0.0
    %3112 = vmatpush1.msra.mxu0 0.0
    %3113 = vmatprep.subr.mxu0 0.0
    %3114 = vmatpush1.msra.mxu0 0.0
    %3115 = vmatprep.subr.mxu0 0.0
    %3116 = vmatpush1.msra.mxu0 0.0
    %3117 = vmatprep.mubr.f32.mxu0 0.0
    %3118 = vmatmul.mubr.f32.gmra.mrb[0].mxu0 %v3051
    %v3119 = vpop.f32.mrb[0].mxu0
    %v3120 = vadd.f32 %v3045, %v3119
    %v3121 = vpop.f32.mrb[0].mxu0
    %3122 = vdwg.mxu0
    %v3123 = vadd.f32 %v3120, %v276
    %v3124 = vmul.f32 %v3123, 0.5
    %v3125 = vtanh.pop %v3124
    %v3126 = vmul.f32 %v3125, 0.5
    %v3127 = vadd.f32 %v3126, 0.5
    %v3128 = vtanh.pop %v3123
    %v3129 = vmul.f32 %v3127, %v2705
    %3131 = vrot.lane.b32.xlu0 %v3128, 64
    %v3132 = vpop.permute.xlu0 %3131
    %v3134 = vmul.f32 %v3127, %v3132
    %3136 = vrot.lane.b32.xlu0 %v3134, 32
    %v3137 = vpop.permute.xlu0 %3136
    %v3139 = vadd.f32 %v3129, %v3137
    %v3140 = vtanh.pop %v3139
    %3142 = vrot.lane.b32.xlu0 %v3140, 64
    %v3143 = vpop.permute.xlu0 %3142
    %v3145 = vmul.f32 %v3127, %v3143
    %3147 = vrot.lane.b32.xlu0 %v2884, 32
    %v3148 = vpop.permute.xlu0 %3147
    %v3149 = vsel %vm282, %v3148, 0
    %3151 = vmatprep.subr.mxu0 0.0
    %3152 = vmatpush1.msra.mxu0 %v268
    %3153 = vmatprep.subr.mxu0 0.0
    %3154 = vmatpush1.msra.mxu0 %v269
    %3155 = vmatprep.subr.mxu0 0.0
    %3156 = vmatpush1.msra.mxu0 %v270
    %3157 = vmatprep.subr.mxu0 0.0
    %3158 = vmatpush1.msra.mxu0 %v271
    %3159 = vmatprep.subr.mxu0 0.0
    %3160 = vmatpush1.msra.mxu0 0.0
    %3161 = vmatprep.subr.mxu0 0.0
    %3162 = vmatpush1.msra.mxu0 0.0
    %3163 = vmatprep.subr.mxu0 0.0
    %3164 = vmatpush1.msra.mxu0 0.0
    %3165 = vmatprep.subr.mxu0 0.0
    %3166 = vmatpush1.msra.mxu0 0.0
    %3167 = vmatprep.subr.mxu0 0.0
    %3168 = vmatpush1.msra.mxu0 0.0
    %3169 = vmatprep.subr.mxu0 0.0
    %3170 = vmatpush1.msra.mxu0 0.0
    %3171 = vmatprep.subr.mxu0 0.0
    %3172 = vmatpush1.msra.mxu0 0.0
    %3173 = vmatprep.subr.mxu0 0.0
    %3174 = vmatpush1.msra.mxu0 0.0
    %3175 = vmatprep.subr.mxu0 0.0
    %3176 = vmatpush1.msra.mxu0 0.0
    %3177 = vmatprep.subr.mxu0 0.0
    %3178 = vmatpush1.msra.mxu0 0.0
    %3179 = vmatprep.subr.mxu0 0.0
    %3180 = vmatpush1.msra.mxu0 0.0
    %3181 = vmatprep.subr.mxu0 0.0
    %3182 = vmatpush1.msra.mxu0 0.0
    %3183 = vmatprep.subr.mxu0 0.0
    %3184 = vmatpush1.msra.mxu0 0.0
    %3185 = vmatprep.subr.mxu0 0.0
    %3186 = vmatpush1.msra.mxu0 0.0
    %3187 = vmatprep.subr.mxu0 0.0
    %3188 = vmatpush1.msra.mxu0 0.0
    %3189 = vmatprep.subr.mxu0 0.0
    %3190 = vmatpush1.msra.mxu0 0.0
    %3191 = vmatprep.subr.mxu0 0.0
    %3192 = vmatpush1.msra.mxu0 0.0
    %3193 = vmatprep.subr.mxu0 0.0
    %3194 = vmatpush1.msra.mxu0 0.0
    %3195 = vmatprep.subr.mxu0 0.0
    %3196 = vmatpush1.msra.mxu0 0.0
    %3197 = vmatprep.subr.mxu0 0.0
    %3198 = vmatpush1.msra.mxu0 0.0
    %3199 = vmatprep.subr.mxu0 0.0
    %3200 = vmatpush1.msra.mxu0 0.0
    %3201 = vmatprep.subr.mxu0 0.0
    %3202 = vmatpush1.msra.mxu0 0.0
    %3203 = vmatprep.subr.mxu0 0.0
    %3204 = vmatpush1.msra.mxu0 0.0
    %3205 = vmatprep.subr.mxu0 0.0
    %3206 = vmatpush1.msra.mxu0 0.0
    %3207 = vmatprep.subr.mxu0 0.0
    %3208 = vmatpush1.msra.mxu0 0.0
    %3209 = vmatprep.subr.mxu0 0.0
    %3210 = vmatpush1.msra.mxu0 0.0
    %3211 = vmatprep.subr.mxu0 0.0
    %3212 = vmatpush1.msra.mxu0 0.0
    %3213 = vmatprep.subr.mxu0 0.0
    %3214 = vmatpush1.msra.mxu0 0.0
    %3215 = vmatprep.mubr.f32.mxu0 0.0
    %3216 = vmatmul.mubr.f32.gmra.mrb[0].mxu0 %v3149
    %v3217 = vpop.f32.mrb[0].mxu0
    %v3218 = vadd.f32 0.0, %v3217
    %v3219 = vpop.f32.mrb[0].mxu0
    %3220 = vdwg.mxu0
    %3222 = vrot.lane.b32.xlu0 %v3145, 32
    %v3223 = vpop.permute.xlu0 %3222
    %v3224 = vsel %vm282, %v3223, 0
    %3226 = vmatprep.subr.mxu0 0.0
    %3227 = vmatpush1.msra.mxu0 %v264
    %3228 = vmatprep.subr.mxu0 0.0
    %3229 = vmatpush1.msra.mxu0 %v265
    %3230 = vmatprep.subr.mxu0 0.0
    %3231 = vmatpush1.msra.mxu0 %v266
    %3232 = vmatprep.subr.mxu0 0.0
    %3233 = vmatpush1.msra.mxu0 %v267
    %3234 = vmatprep.subr.mxu0 0.0
    %3235 = vmatpush1.msra.mxu0 0.0
    %3236 = vmatprep.subr.mxu0 0.0
    %3237 = vmatpush1.msra.mxu0 0.0
    %3238 = vmatprep.subr.mxu0 0.0
    %3239 = vmatpush1.msra.mxu0 0.0
    %3240 = vmatprep.subr.mxu0 0.0
    %3241 = vmatpush1.msra.mxu0 0.0
    %3242 = vmatprep.subr.mxu0 0.0
    %3243 = vmatpush1.msra.mxu0 0.0
    %3244 = vmatprep.subr.mxu0 0.0
    %3245 = vmatpush1.msra.mxu0 0.0
    %3246 = vmatprep.subr.mxu0 0.0
    %3247 = vmatpush1.msra.mxu0 0.0
    %3248 = vmatprep.subr.mxu0 0.0
    %3249 = vmatpush1.msra.mxu0 0.0
    %3250 = vmatprep.subr.mxu0 0.0
    %3251 = vmatpush1.msra.mxu0 0.0
    %3252 = vmatprep.subr.mxu0 0.0
    %3253 = vmatpush1.msra.mxu0 0.0
    %3254 = vmatprep.subr.mxu0 0.0
    %3255 = vmatpush1.msra.mxu0 0.0
    %3256 = vmatprep.subr.mxu0 0.0
    %3257 = vmatpush1.msra.mxu0 0.0
    %3258 = vmatprep.subr.mxu0 0.0
    %3259 = vmatpush1.msra.mxu0 0.0
    %3260 = vmatprep.subr.mxu0 0.0
    %3261 = vmatpush1.msra.mxu0 0.0
    %3262 = vmatprep.subr.mxu0 0.0
    %3263 = vmatpush1.msra.mxu0 0.0
    %3264 = vmatprep.subr.mxu0 0.0
    %3265 = vmatpush1.msra.mxu0 0.0
    %3266 = vmatprep.subr.mxu0 0.0
    %3267 = vmatpush1.msra.mxu0 0.0
    %3268 = vmatprep.subr.mxu0 0.0
    %3269 = vmatpush1.msra.mxu0 0.0
    %3270 = vmatprep.subr.mxu0 0.0
    %3271 = vmatpush1.msra.mxu0 0.0
    %3272 = vmatprep.subr.mxu0 0.0
    %3273 = vmatpush1.msra.mxu0 0.0
    %3274 = vmatprep.subr.mxu0 0.0
    %3275 = vmatpush1.msra.mxu0 0.0
    %3276 = vmatprep.subr.mxu0 0.0
    %3277 = vmatpush1.msra.mxu0 0.0
    %3278 = vmatprep.subr.mxu0 0.0
    %3279 = vmatpush1.msra.mxu0 0.0
    %3280 = vmatprep.subr.mxu0 0.0
    %3281 = vmatpush1.msra.mxu0 0.0
    %3282 = vmatprep.subr.mxu0 0.0
    %3283 = vmatpush1.msra.mxu0 0.0
    %3284 = vmatprep.subr.mxu0 0.0
    %3285 = vmatpush1.msra.mxu0 0.0
    %3286 = vmatprep.subr.mxu0 0.0
    %3287 = vmatpush1.msra.mxu0 0.0
    %3288 = vmatprep.subr.mxu0 0.0
    %3289 = vmatpush1.msra.mxu0 0.0
    %3290 = vmatprep.mubr.f32.mxu0 0.0
    %3291 = vmatmul.mubr.f32.gmra.mrb[0].mxu0 %v3224
    %v3292 = vpop.f32.mrb[0].mxu0
    %v3293 = vadd.f32 %v3218, %v3292
    %v3294 = vpop.f32.mrb[0].mxu0
    %3295 = vdwg.mxu0
    %v3296 = vadd.f32 %v3293, %v281
    %v3297 = vmul.f32 %v3296, 0.5
    %v3298 = vtanh.pop %v3297
    %v3299 = vmul.f32 %v3298, 0.5
    %v3300 = vadd.f32 %v3299, 0.5
    %v3301 = vtanh.pop %v3296
    %v3302 = vmul.f32 %v3300, %v2878
    %3304 = vrot.lane.b32.xlu0 %v3301, 64
    %v3305 = vpop.permute.xlu0 %3304
    %v3307 = vmul.f32 %v3300, %v3305
    %3309 = vrot.lane.b32.xlu0 %v3307, 32
    %v3310 = vpop.permute.xlu0 %3309
    %v3312 = vadd.f32 %v3302, %v3310
    %v3313 = vtanh.pop %v3312
    %3315 = vrot.lane.b32.xlu0 %v3313, 64
    %v3316 = vpop.permute.xlu0 %3315
    %v3318 = vmul.f32 %v3300, %v3316
    %3319 = vmatprep.subr.mxu0 0.0
    %3320 = vmatpush1.msra.mxu0 %v252
    %3321 = vmatprep.subr.mxu0 0.0
    %3322 = vmatpush1.msra.mxu0 %v253
    %3323 = vmatprep.subr.mxu0 0.0
    %3324 = vmatpush1.msra.mxu0 %v254
    %3325 = vmatprep.subr.mxu0 0.0
    %3326 = vmatpush1.msra.mxu0 %v255
    %3327 = vmatprep.subr.mxu0 0.0
    %3328 = vmatpush1.msra.mxu0 0.0
    %3329 = vmatprep.subr.mxu0 0.0
    %3330 = vmatpush1.msra.mxu0 0.0
    %3331 = vmatprep.subr.mxu0 0.0
    %3332 = vmatpush1.msra.mxu0 0.0
    %3333 = vmatprep.subr.mxu0 0.0
    %3334 = vmatpush1.msra.mxu0 0.0
    %3335 = vmatprep.subr.mxu0 0.0
    %3336 = vmatpush1.msra.mxu0 0.0
    %3337 = vmatprep.subr.mxu0 0.0
    %3338 = vmatpush1.msra.mxu0 0.0
    %3339 = vmatprep.subr.mxu0 0.0
    %3340 = vmatpush1.msra.mxu0 0.0
    %3341 = vmatprep.subr.mxu0 0.0
    %3342 = vmatpush1.msra.mxu0 0.0
    %3343 = vmatprep.subr.mxu0 0.0
    %3344 = vmatpush1.msra.mxu0 0.0
    %3345 = vmatprep.subr.mxu0 0.0
    %3346 = vmatpush1.msra.mxu0 0.0
    %3347 = vmatprep.subr.mxu0 0.0
    %3348 = vmatpush1.msra.mxu0 0.0
    %3349 = vmatprep.subr.mxu0 0.0
    %3350 = vmatpush1.msra.mxu0 0.0
    %3351 = vmatprep.subr.mxu0 0.0
    %3352 = vmatpush1.msra.mxu0 0.0
    %3353 = vmatprep.subr.mxu0 0.0
    %3354 = vmatpush1.msra.mxu0 0.0
    %3355 = vmatprep.subr.mxu0 0.0
    %3356 = vmatpush1.msra.mxu0 0.0
    %3357 = vmatprep.subr.mxu0 0.0
    %3358 = vmatpush1.msra.mxu0 0.0
    %3359 = vmatprep.subr.mxu0 0.0
    %3360 = vmatpush1.msra.mxu0 0.0
    %3361 = vmatprep.subr.mxu0 0.0
    %3362 = vmatpush1.msra.mxu0 0.0
    %3363 = vmatprep.subr.mxu0 0.0
    %3364 = vmatpush1.msra.mxu0 0.0
    %3365 = vmatprep.subr.mxu0 0.0
    %3366 = vmatpush1.msra.mxu0 0.0
    %3367 = vmatprep.subr.mxu0 0.0
    %3368 = vmatpush1.msra.mxu0 0.0
    %3369 = vmatprep.subr.mxu0 0.0
    %3370 = vmatpush1.msra.mxu0 0.0
    %3371 = vmatprep.subr.mxu0 0.0
    %3372 = vmatpush1.msra.mxu0 0.0
    %3373 = vmatprep.subr.mxu0 0.0
    %3374 = vmatpush1.msra.mxu0 0.0
    %3375 = vmatprep.subr.mxu0 0.0
    %3376 = vmatpush1.msra.mxu0 0.0
    %3377 = vmatprep.subr.mxu0 0.0
    %3378 = vmatpush1.msra.mxu0 0.0
    %3379 = vmatprep.subr.mxu0 0.0
    %3380 = vmatpush1.msra.mxu0 0.0
    %3381 = vmatprep.subr.mxu0 0.0
    %3382 = vmatpush1.msra.mxu0 0.0
    %3383 = vmatprep.mubr.f32.mxu0 0.0
    %3384 = vmatmul.mubr.f32.gmra.mrb[0].mxu0 %v3051
    %v3385 = vpop.f32.mrb[0].mxu0
    %v3386 = vadd.f32 0.0, %v3385
    %v3387 = vpop.f32.mrb[0].mxu0
    %3388 = vdwg.mxu0
    %v3389 = vadd.f32 %v251, %v3386
    %v3390 = vmul.f32 %v3389, 0.5
    %v3391 = vtanh.pop %v3390
    %v3392 = vmul.f32 %v3391, 0.5
    %v3393 = vadd.f32 %v3392, 0.5
    %v3394 = vtanh.pop %v3389
    %v3395 = vmul.f32 %v3393, %v2971
    %3397 = vrot.lane.b32.xlu0 %v3394, 64
    %v3398 = vpop.permute.xlu0 %3397
    %v3400 = vmul.f32 %v3393, %v3398
    %3402 = vrot.lane.b32.xlu0 %v3400, 32
    %v3403 = vpop.permute.xlu0 %3402
    %v3405 = vadd.f32 %v3395, %v3403
    %v3406 = vtanh.pop %v3405
    %3408 = vrot.lane.b32.xlu0 %v3406, 64
    %v3409 = vpop.permute.xlu0 %3408
    %v3411 = vmul.f32 %v3393, %v3409
    %3412 = vmatprep.subr.mxu0 0.0
    %3413 = vmatpush1.msra.mxu0 %v260
    %3414 = vmatprep.subr.mxu0 0.0
    %3415 = vmatpush1.msra.mxu0 %v261
    %3416 = vmatprep.subr.mxu0 0.0
    %3417 = vmatpush1.msra.mxu0 %v262
    %3418 = vmatprep.subr.mxu0 0.0
    %3419 = vmatpush1.msra.mxu0 %v263
    %3420 = vmatprep.subr.mxu0 0.0
    %3421 = vmatpush1.msra.mxu0 0.0
    %3422 = vmatprep.subr.mxu0 0.0
    %3423 = vmatpush1.msra.mxu0 0.0
    %3424 = vmatprep.subr.mxu0 0.0
    %3425 = vmatpush1.msra.mxu0 0.0
    %3426 = vmatprep.subr.mxu0 0.0
    %3427 = vmatpush1.msra.mxu0 0.0
    %3428 = vmatprep.subr.mxu0 0.0
    %3429 = vmatpush1.msra.mxu0 0.0
    %3430 = vmatprep.subr.mxu0 0.0
    %3431 = vmatpush1.msra.mxu0 0.0
    %3432 = vmatprep.subr.mxu0 0.0
    %3433 = vmatpush1.msra.mxu0 0.0
    %3434 = vmatprep.subr.mxu0 0.0
    %3435 = vmatpush1.msra.mxu0 0.0
    %3436 = vmatprep.subr.mxu0 0.0
    %3437 = vmatpush1.msra.mxu0 0.0
    %3438 = vmatprep.subr.mxu0 0.0
    %3439 = vmatpush1.msra.mxu0 0.0
    %3440 = vmatprep.subr.mxu0 0.0
    %3441 = vmatpush1.msra.mxu0 0.0
    %3442 = vmatprep.subr.mxu0 0.0
    %3443 = vmatpush1.msra.mxu0 0.0
    %3444 = vmatprep.subr.mxu0 0.0
    %3445 = vmatpush1.msra.mxu0 0.0
    %3446 = vmatprep.subr.mxu0 0.0
    %3447 = vmatpush1.msra.mxu0 0.0
    %3448 = vmatprep.subr.mxu0 0.0
    %3449 = vmatpush1.msra.mxu0 0.0
    %3450 = vmatprep.subr.mxu0 0.0
    %3451 = vmatpush1.msra.mxu0 0.0
    %3452 = vmatprep.subr.mxu0 0.0
    %3453 = vmatpush1.msra.mxu0 0.0
    %3454 = vmatprep.subr.mxu0 0.0
    %3455 = vmatpush1.msra.mxu0 0.0
    %3456 = vmatprep.subr.mxu0 0.0
    %3457 = vmatpush1.msra.mxu0 0.0
    %3458 = vmatprep.subr.mxu0 0.0
    %3459 = vmatpush1.msra.mxu0 0.0
    %3460 = vmatprep.subr.mxu0 0.0
    %3461 = vmatpush1.msra.mxu0 0.0
    %3462 = vmatprep.subr.mxu0 0.0
    %3463 = vmatpush1.msra.mxu0 0.0
    %3464 = vmatprep.subr.mxu0 0.0
    %3465 = vmatpush1.msra.mxu0 0.0
    %3466 = vmatprep.subr.mxu0 0.0
    %3467 = vmatpush1.msra.mxu0 0.0
    %3468 = vmatprep.subr.mxu0 0.0
    %3469 = vmatpush1.msra.mxu0 0.0
    %3470 = vmatprep.subr.mxu0 0.0
    %3471 = vmatpush1.msra.mxu0 0.0
    %3472 = vmatprep.subr.mxu0 0.0
    %3473 = vmatpush1.msra.mxu0 0.0
    %3474 = vmatprep.subr.mxu0 0.0
    %3475 = vmatpush1.msra.mxu0 0.0
    %3476 = vmatprep.mubr.f32.mxu0 0.0
    %3477 = vmatmul.mubr.f32.gmra.mrb[0].mxu0 %v3224
    %v3478 = vpop.f32.mrb[0].mxu0
    %v3479 = vadd.f32 0.0, %v3478
    %v3480 = vpop.f32.mrb[0].mxu0
    %3481 = vdwg.mxu0
    %3483 = vrot.lane.b32.xlu0 %v3411, 32
    %v3484 = vpop.permute.xlu0 %3483
    %v3485 = vsel %vm282, %v3484, 0
    %3487 = vmatprep.subr.mxu0 0.0
    %3488 = vmatpush1.msra.mxu0 %v256
    %3489 = vmatprep.subr.mxu0 0.0
    %3490 = vmatpush1.msra.mxu0 %v257
    %3491 = vmatprep.subr.mxu0 0.0
    %3492 = vmatpush1.msra.mxu0 %v258
    %3493 = vmatprep.subr.mxu0 0.0
    %3494 = vmatpush1.msra.mxu0 %v259
    %3495 = vmatprep.subr.mxu0 0.0
    %3496 = vmatpush1.msra.mxu0 0.0
    %3497 = vmatprep.subr.mxu0 0.0
    %3498 = vmatpush1.msra.mxu0 0.0
    %3499 = vmatprep.subr.mxu0 0.0
    %3500 = vmatpush1.msra.mxu0 0.0
    %3501 = vmatprep.subr.mxu0 0.0
    %3502 = vmatpush1.msra.mxu0 0.0
    %3503 = vmatprep.subr.mxu0 0.0
    %3504 = vmatpush1.msra.mxu0 0.0
    %3505 = vmatprep.subr.mxu0 0.0
    %3506 = vmatpush1.msra.mxu0 0.0
    %3507 = vmatprep.subr.mxu0 0.0
    %3508 = vmatpush1.msra.mxu0 0.0
    %3509 = vmatprep.subr.mxu0 0.0
    %3510 = vmatpush1.msra.mxu0 0.0
    %3511 = vmatprep.subr.mxu0 0.0
    %3512 = vmatpush1.msra.mxu0 0.0
    %3513 = vmatprep.subr.mxu0 0.0
    %3514 = vmatpush1.msra.mxu0 0.0
    %3515 = vmatprep.subr.mxu0 0.0
    %3516 = vmatpush1.msra.mxu0 0.0
    %3517 = vmatprep.subr.mxu0 0.0
    %3518 = vmatpush1.msra.mxu0 0.0
    %3519 = vmatprep.subr.mxu0 0.0
    %3520 = vmatpush1.msra.mxu0 0.0
    %3521 = vmatprep.subr.mxu0 0.0
    %3522 = vmatpush1.msra.mxu0 0.0
    %3523 = vmatprep.subr.mxu0 0.0
    %3524 = vmatpush1.msra.mxu0 0.0
    %3525 = vmatprep.subr.mxu0 0.0
    %3526 = vmatpush1.msra.mxu0 0.0
    %3527 = vmatprep.subr.mxu0 0.0
    %3528 = vmatpush1.msra.mxu0 0.0
    %3529 = vmatprep.subr.mxu0 0.0
    %3530 = vmatpush1.msra.mxu0 0.0
    %3531 = vmatprep.subr.mxu0 0.0
    %3532 = vmatpush1.msra.mxu0 0.0
    %3533 = vmatprep.subr.mxu0 0.0
    %3534 = vmatpush1.msra.mxu0 0.0
    %3535 = vmatprep.subr.mxu0 0.0
    %3536 = vmatpush1.msra.mxu0 0.0
    %3537 = vmatprep.subr.mxu0 0.0
    %3538 = vmatpush1.msra.mxu0 0.0
    %3539 = vmatprep.subr.mxu0 0.0
    %3540 = vmatpush1.msra.mxu0 0.0
    %3541 = vmatprep.subr.mxu0 0.0
    %3542 = vmatpush1.msra.mxu0 0.0
    %3543 = vmatprep.subr.mxu0 0.0
    %3544 = vmatpush1.msra.mxu0 0.0
    %3545 = vmatprep.subr.mxu0 0.0
    %3546 = vmatpush1.msra.mxu0 0.0
    %3547 = vmatprep.subr.mxu0 0.0
    %3548 = vmatpush1.msra.mxu0 0.0
    %3549 = vmatprep.subr.mxu0 0.0
    %3550 = vmatpush1.msra.mxu0 0.0
    %3551 = vmatprep.mubr.f32.mxu0 0.0
    %3552 = vmatmul.mubr.f32.gmra.mrb[0].mxu0 %v3485
    %v3553 = vpop.f32.mrb[0].mxu0
    %v3554 = vadd.f32 %v3479, %v3553
    %v3555 = vpop.f32.mrb[0].mxu0
    %3556 = vdwg.mxu0
    %v3557 = vadd.f32 %v3554, %v276
    %v3558 = vmul.f32 %v3557, 0.5
    %v3559 = vtanh.pop %v3558
    %v3560 = vmul.f32 %v3559, 0.5
    %v3561 = vadd.f32 %v3560, 0.5
    %v3562 = vtanh.pop %v3557
    %v3563 = vmul.f32 %v3561, %v3139
    %3565 = vrot.lane.b32.xlu0 %v3562, 64
    %v3566 = vpop.permute.xlu0 %3565
    %v3568 = vmul.f32 %v3561, %v3566
    %3570 = vrot.lane.b32.xlu0 %v3568, 32
    %v3571 = vpop.permute.xlu0 %3570
    %v3573 = vadd.f32 %v3563, %v3571
    %v3574 = vtanh.pop %v3573
    %3576 = vrot.lane.b32.xlu0 %v3574, 64
    %v3577 = vpop.permute.xlu0 %3576
    %v3579 = vmul.f32 %v3561, %v3577
    %3581 = vrot.lane.b32.xlu0 %v3318, 32
    %v3582 = vpop.permute.xlu0 %3581
    %v3583 = vsel %vm282, %v3582, 0
    %3585 = vmatprep.subr.mxu0 0.0
    %3586 = vmatpush1.msra.mxu0 %v268
    %3587 = vmatprep.subr.mxu0 0.0
    %3588 = vmatpush1.msra.mxu0 %v269
    %3589 = vmatprep.subr.mxu0 0.0
    %3590 = vmatpush1.msra.mxu0 %v270
    %3591 = vmatprep.subr.mxu0 0.0
    %3592 = vmatpush1.msra.mxu0 %v271
    %3593 = vmatprep.subr.mxu0 0.0
    %3594 = vmatpush1.msra.mxu0 0.0
    %3595 = vmatprep.subr.mxu0 0.0
    %3596 = vmatpush1.msra.mxu0 0.0
    %3597 = vmatprep.subr.mxu0 0.0
    %3598 = vmatpush1.msra.mxu0 0.0
    %3599 = vmatprep.subr.mxu0 0.0
    %3600 = vmatpush1.msra.mxu0 0.0
    %3601 = vmatprep.subr.mxu0 0.0
    %3602 = vmatpush1.msra.mxu0 0.0
    %3603 = vmatprep.subr.mxu0 0.0
    %3604 = vmatpush1.msra.mxu0 0.0
    %3605 = vmatprep.subr.mxu0 0.0
    %3606 = vmatpush1.msra.mxu0 0.0
    %3607 = vmatprep.subr.mxu0 0.0
    %3608 = vmatpush1.msra.mxu0 0.0
    %3609 = vmatprep.subr.mxu0 0.0
    %3610 = vmatpush1.msra.mxu0 0.0
    %3611 = vmatprep.subr.mxu0 0.0
    %3612 = vmatpush1.msra.mxu0 0.0
    %3613 = vmatprep.subr.mxu0 0.0
    %3614 = vmatpush1.msra.mxu0 0.0
    %3615 = vmatprep.subr.mxu0 0.0
    %3616 = vmatpush1.msra.mxu0 0.0
    %3617 = vmatprep.subr.mxu0 0.0
    %3618 = vmatpush1.msra.mxu0 0.0
    %3619 = vmatprep.subr.mxu0 0.0
    %3620 = vmatpush1.msra.mxu0 0.0
    %3621 = vmatprep.subr.mxu0 0.0
    %3622 = vmatpush1.msra.mxu0 0.0
    %3623 = vmatprep.subr.mxu0 0.0
    %3624 = vmatpush1.msra.mxu0 0.0
    %3625 = vmatprep.subr.mxu0 0.0
    %3626 = vmatpush1.msra.mxu0 0.0
    %3627 = vmatprep.subr.mxu0 0.0
    %3628 = vmatpush1.msra.mxu0 0.0
    %3629 = vmatprep.subr.mxu0 0.0
    %3630 = vmatpush1.msra.mxu0 0.0
    %3631 = vmatprep.subr.mxu0 0.0
    %3632 = vmatpush1.msra.mxu0 0.0
    %3633 = vmatprep.subr.mxu0 0.0
    %3634 = vmatpush1.msra.mxu0 0.0
    %3635 = vmatprep.subr.mxu0 0.0
    %3636 = vmatpush1.msra.mxu0 0.0
    %3637 = vmatprep.subr.mxu0 0.0
    %3638 = vmatpush1.msra.mxu0 0.0
    %3639 = vmatprep.subr.mxu0 0.0
    %3640 = vmatpush1.msra.mxu0 0.0
    %3641 = vmatprep.subr.mxu0 0.0
    %3642 = vmatpush1.msra.mxu0 0.0
    %3643 = vmatprep.subr.mxu0 0.0
    %3644 = vmatpush1.msra.mxu0 0.0
    %3645 = vmatprep.subr.mxu0 0.0
    %3646 = vmatpush1.msra.mxu0 0.0
    %3647 = vmatprep.subr.mxu0 0.0
    %3648 = vmatpush1.msra.mxu0 0.0
    %3649 = vmatprep.mubr.f32.mxu0 0.0
    %3650 = vmatmul.mubr.f32.gmra.mrb[0].mxu0 %v3583
    %v3651 = vpop.f32.mrb[0].mxu0
    %v3652 = vadd.f32 0.0, %v3651
    %v3653 = vpop.f32.mrb[0].mxu0
    %3654 = vdwg.mxu0
    %3656 = vrot.lane.b32.xlu0 %v3579, 32
    %v3657 = vpop.permute.xlu0 %3656
    %v3658 = vsel %vm282, %v3657, 0
    %3660 = vmatprep.subr.mxu0 0.0
    %3661 = vmatpush1.msra.mxu0 %v264
    %3662 = vmatprep.subr.mxu0 0.0
    %3663 = vmatpush1.msra.mxu0 %v265
    %3664 = vmatprep.subr.mxu0 0.0
    %3665 = vmatpush1.msra.mxu0 %v266
    %3666 = vmatprep.subr.mxu0 0.0
    %3667 = vmatpush1.msra.mxu0 %v267
    %3668 = vmatprep.subr.mxu0 0.0
    %3669 = vmatpush1.msra.mxu0 0.0
    %3670 = vmatprep.subr.mxu0 0.0
    %3671 = vmatpush1.msra.mxu0 0.0
    %3672 = vmatprep.subr.mxu0 0.0
    %3673 = vmatpush1.msra.mxu0 0.0
    %3674 = vmatprep.subr.mxu0 0.0
    %3675 = vmatpush1.msra.mxu0 0.0
    %3676 = vmatprep.subr.mxu0 0.0
    %3677 = vmatpush1.msra.mxu0 0.0
    %3678 = vmatprep.subr.mxu0 0.0
    %3679 = vmatpush1.msra.mxu0 0.0
    %3680 = vmatprep.subr.mxu0 0.0
    %3681 = vmatpush1.msra.mxu0 0.0
    %3682 = vmatprep.subr.mxu0 0.0
    %3683 = vmatpush1.msra.mxu0 0.0
    %3684 = vmatprep.subr.mxu0 0.0
    %3685 = vmatpush1.msra.mxu0 0.0
    %3686 = vmatprep.subr.mxu0 0.0
    %3687 = vmatpush1.msra.mxu0 0.0
    %3688 = vmatprep.subr.mxu0 0.0
    %3689 = vmatpush1.msra.mxu0 0.0
    %3690 = vmatprep.subr.mxu0 0.0
    %3691 = vmatpush1.msra.mxu0 0.0
    %3692 = vmatprep.subr.mxu0 0.0
    %3693 = vmatpush1.msra.mxu0 0.0
    %3694 = vmatprep.subr.mxu0 0.0
    %3695 = vmatpush1.msra.mxu0 0.0
    %3696 = vmatprep.subr.mxu0 0.0
    %3697 = vmatpush1.msra.mxu0 0.0
    %3698 = vmatprep.subr.mxu0 0.0
    %3699 = vmatpush1.msra.mxu0 0.0
    %3700 = vmatprep.subr.mxu0 0.0
    %3701 = vmatpush1.msra.mxu0 0.0
    %3702 = vmatprep.subr.mxu0 0.0
    %3703 = vmatpush1.msra.mxu0 0.0
    %3704 = vmatprep.subr.mxu0 0.0
    %3705 = vmatpush1.msra.mxu0 0.0
    %3706 = vmatprep.subr.mxu0 0.0
    %3707 = vmatpush1.msra.mxu0 0.0
    %3708 = vmatprep.subr.mxu0 0.0
    %3709 = vmatpush1.msra.mxu0 0.0
    %3710 = vmatprep.subr.mxu0 0.0
    %3711 = vmatpush1.msra.mxu0 0.0
    %3712 = vmatprep.subr.mxu0 0.0
    %3713 = vmatpush1.msra.mxu0 0.0
    %3714 = vmatprep.subr.mxu0 0.0
    %3715 = vmatpush1.msra.mxu0 0.0
    %3716 = vmatprep.subr.mxu0 0.0
    %3717 = vmatpush1.msra.mxu0 0.0
    %3718 = vmatprep.subr.mxu0 0.0
    %3719 = vmatpush1.msra.mxu0 0.0
    %3720 = vmatprep.subr.mxu0 0.0
    %3721 = vmatpush1.msra.mxu0 0.0
    %3722 = vmatprep.subr.mxu0 0.0
    %3723 = vmatpush1.msra.mxu0 0.0
    %3724 = vmatprep.mubr.f32.mxu0 0.0
    %3725 = vmatmul.mubr.f32.gmra.mrb[0].mxu0 %v3658
    %v3726 = vpop.f32.mrb[0].mxu0
    %v3727 = vadd.f32 %v3652, %v3726
    %v3728 = vpop.f32.mrb[0].mxu0
    %3729 = vdwg.mxu0
    %v3730 = vadd.f32 %v3727, %v281
    %v3731 = vmul.f32 %v3730, 0.5
    %v3732 = vtanh.pop %v3731
    %v3733 = vmul.f32 %v3732, 0.5
    %v3734 = vadd.f32 %v3733, 0.5
    %v3735 = vtanh.pop %v3730
    %v3736 = vmul.f32 %v3734, %v3312
    %3738 = vrot.lane.b32.xlu0 %v3735, 64
    %v3739 = vpop.permute.xlu0 %3738
    %v3741 = vmul.f32 %v3734, %v3739
    %3743 = vrot.lane.b32.xlu0 %v3741, 32
    %v3744 = vpop.permute.xlu0 %3743
    %v3746 = vadd.f32 %v3736, %v3744
    %v3747 = vtanh.pop %v3746
    %3749 = vrot.lane.b32.xlu0 %v3747, 64
    %v3750 = vpop.permute.xlu0 %3749
    %v3752 = vmul.f32 %v3734, %v3750
    %v3753 = vmax.f32 %v3752, 0.0
    %v3754 = vld [vmem:[%s2] sm:$0xff]
    %v3755 = vld [vmem:[%s4] sm:$0xff]
    %v3756 = vld [vmem:[%s4 + $0x8] sm:$0xff]
    %v3757 = vld [vmem:[%s4 + $0x10] sm:$0xff]
    %v3758 = vld [vmem:[%s4 + $0x18] sm:$0xff]
    %v3759 = vld [vmem:[%s4 + $0x20] sm:$0xff]
    %v3760 = vld [vmem:[%s4 + $0x28] sm:$0xff]
    %v3761 = vld [vmem:[%s4 + $0x30] sm:$0xff]
    %v3762 = vld [vmem:[%s4 + $0x38] sm:$0xff]
    %v3763 = vld [vmem:[%s4 + $0x40] sm:$0xff]
    %v3764 = vld [vmem:[%s4 + $0x48] sm:$0xff]
    %v3765 = vld [vmem:[%s4 + $0x50] sm:$0xff]
    %v3766 = vld [vmem:[%s4 + $0x58] sm:$0xff]
    %s3767 = scalar_lea.vmem %s4, 96
    %v3768 = vld [vmem:[%s3767] ss:$8 sm:$0x3]
    %3770 = vrot.lane.b32.xlu0 %v3753, 32
    %v3771 = vpop.permute.xlu0 %3770
    %v3772 = vsel %vm282, %v3771, 0
    %3774 = vmatprep.subr.mxu0 %v3760
    %3775 = vmatpush1.msra.mxu0 %v3759
    %3776 = vmatprep.subr.mxu0 %v3762
    %3777 = vmatpush1.msra.mxu0 %v3761
    %3778 = vmatprep.subr.mxu0 %v3764
    %3779 = vmatpush1.msra.mxu0 %v3763
    %3780 = vmatprep.subr.mxu0 %v3766
    %3781 = vmatpush1.msra.mxu0 %v3765
    %3782 = vmatprep.subr.mxu0 0.0
    %3783 = vmatpush1.msra.mxu0 0.0
    %3784 = vmatprep.subr.mxu0 0.0
    %3785 = vmatpush1.msra.mxu0 0.0
    %3786 = vmatprep.subr.mxu0 0.0
    %3787 = vmatpush1.msra.mxu0 0.0
    %3788 = vmatprep.subr.mxu0 0.0
    %3789 = vmatpush1.msra.mxu0 0.0
    %3790 = vmatprep.subr.mxu0 0.0
    %3791 = vmatpush1.msra.mxu0 0.0
    %3792 = vmatprep.subr.mxu0 0.0
    %3793 = vmatpush1.msra.mxu0 0.0
    %3794 = vmatprep.subr.mxu0 0.0
    %3795 = vmatpush1.msra.mxu0 0.0
    %3796 = vmatprep.subr.mxu0 0.0
    %3797 = vmatpush1.msra.mxu0 0.0
    %3798 = vmatprep.subr.mxu0 0.0
    %3799 = vmatpush1.msra.mxu0 0.0
    %3800 = vmatprep.subr.mxu0 0.0
    %3801 = vmatpush1.msra.mxu0 0.0
    %3802 = vmatprep.subr.mxu0 0.0
    %3803 = vmatpush1.msra.mxu0 0.0
    %3804 = vmatprep.subr.mxu0 0.0
    %3805 = vmatpush1.msra.mxu0 0.0
    %3806 = vmatprep.subr.mxu0 0.0
    %3807 = vmatpush1.msra.mxu0 0.0
    %3808 = vmatprep.subr.mxu0 0.0
    %3809 = vmatpush1.msra.mxu0 0.0
    %3810 = vmatprep.subr.mxu0 0.0
    %3811 = vmatpush1.msra.mxu0 0.0
    %3812 = vmatprep.subr.mxu0 0.0
    %3813 = vmatpush1.msra.mxu0 0.0
    %3814 = vmatprep.subr.mxu0 0.0
    %3815 = vmatpush1.msra.mxu0 0.0
    %3816 = vmatprep.subr.mxu0 0.0
    %3817 = vmatpush1.msra.mxu0 0.0
    %3818 = vmatprep.subr.mxu0 0.0
    %3819 = vmatpush1.msra.mxu0 0.0
    %3820 = vmatprep.subr.mxu0 0.0
    %3821 = vmatpush1.msra.mxu0 0.0
    %3822 = vmatprep.subr.mxu0 0.0
    %3823 = vmatpush1.msra.mxu0 0.0
    %3824 = vmatprep.subr.mxu0 0.0
    %3825 = vmatpush1.msra.mxu0 0.0
    %3826 = vmatprep.subr.mxu0 0.0
    %3827 = vmatpush1.msra.mxu0 0.0
    %3828 = vmatprep.subr.mxu0 0.0
    %3829 = vmatpush1.msra.mxu0 0.0
    %3830 = vmatprep.subr.mxu0 0.0
    %3831 = vmatpush1.msra.mxu0 0.0
    %3832 = vmatprep.subr.mxu0 0.0
    %3833 = vmatpush1.msra.mxu0 0.0
    %3834 = vmatprep.subr.mxu0 0.0
    %3835 = vmatpush1.msra.mxu0 0.0
    %3836 = vmatprep.subr.mxu0 0.0
    %3837 = vmatpush1.msra.mxu0 0.0
    %3838 = vmatprep.mubr.f32.mxu0 0.0
    %3839 = vmatmul.mubr.f32.gmra.mrb[0].mxu0 %v3772
    %v3840 = vpop.f32.mrb[0].mxu0
    %v3841 = vadd.f32 0.0, %v3840
    %v3842 = vpop.f32.mrb[0].mxu0
    %v3843 = vadd.f32 0.0, %v3842
    %3844 = vdwg.mxu0
    %vm3845 = vcmask 130048
    %v3847 = vsel %vm3845, %v3754, 0
    %3849 = vmatprep.subr.mxu0 %v3756
    %3850 = vmatpush1.msra.mxu0 %v3755
    %3851 = vmatprep.subr.mxu0 %v3758
    %3852 = vmatpush1.msra.mxu0 %v3757
    %3853 = vmatprep.subr.mxu0 0.0
    %3854 = vmatpush1.msra.mxu0 0.0
    %3855 = vmatprep.subr.mxu0 0.0
    %3856 = vmatpush1.msra.mxu0 0.0
    %3857 = vmatprep.subr.mxu0 0.0
    %3858 = vmatpush1.msra.mxu0 0.0
    %3859 = vmatprep.subr.mxu0 0.0
    %3860 = vmatpush1.msra.mxu0 0.0
    %3861 = vmatprep.subr.mxu0 0.0
    %3862 = vmatpush1.msra.mxu0 0.0
    %3863 = vmatprep.subr.mxu0 0.0
    %3864 = vmatpush1.msra.mxu0 0.0
    %3865 = vmatprep.subr.mxu0 0.0
    %3866 = vmatpush1.msra.mxu0 0.0
    %3867 = vmatprep.subr.mxu0 0.0
    %3868 = vmatpush1.msra.mxu0 0.0
    %3869 = vmatprep.subr.mxu0 0.0
    %3870 = vmatpush1.msra.mxu0 0.0
    %3871 = vmatprep.subr.mxu0 0.0
    %3872 = vmatpush1.msra.mxu0 0.0
    %3873 = vmatprep.subr.mxu0 0.0
    %3874 = vmatpush1.msra.mxu0 0.0
    %3875 = vmatprep.subr.mxu0 0.0
    %3876 = vmatpush1.msra.mxu0 0.0
    %3877 = vmatprep.subr.mxu0 0.0
    %3878 = vmatpush1.msra.mxu0 0.0
    %3879 = vmatprep.subr.mxu0 0.0
    %3880 = vmatpush1.msra.mxu0 0.0
    %3881 = vmatprep.subr.mxu0 0.0
    %3882 = vmatpush1.msra.mxu0 0.0
    %3883 = vmatprep.subr.mxu0 0.0
    %3884 = vmatpush1.msra.mxu0 0.0
    %3885 = vmatprep.subr.mxu0 0.0
    %3886 = vmatpush1.msra.mxu0 0.0
    %3887 = vmatprep.subr.mxu0 0.0
    %3888 = vmatpush1.msra.mxu0 0.0
    %3889 = vmatprep.subr.mxu0 0.0
    %3890 = vmatpush1.msra.mxu0 0.0
    %3891 = vmatprep.subr.mxu0 0.0
    %3892 = vmatpush1.msra.mxu0 0.0
    %3893 = vmatprep.subr.mxu0 0.0
    %3894 = vmatpush1.msra.mxu0 0.0
    %3895 = vmatprep.subr.mxu0 0.0
    %3896 = vmatpush1.msra.mxu0 0.0
    %3897 = vmatprep.subr.mxu0 0.0
    %3898 = vmatpush1.msra.mxu0 0.0
    %3899 = vmatprep.subr.mxu0 0.0
    %3900 = vmatpush1.msra.mxu0 0.0
    %3901 = vmatprep.subr.mxu0 0.0
    %3902 = vmatpush1.msra.mxu0 0.0
    %3903 = vmatprep.subr.mxu0 0.0
    %3904 = vmatpush1.msra.mxu0 0.0
    %3905 = vmatprep.subr.mxu0 0.0
    %3906 = vmatpush1.msra.mxu0 0.0
    %3907 = vmatprep.subr.mxu0 0.0
    %3908 = vmatpush1.msra.mxu0 0.0
    %3909 = vmatprep.subr.mxu0 0.0
    %3910 = vmatpush1.msra.mxu0 0.0
    %3911 = vmatprep.subr.mxu0 0.0
    %3912 = vmatpush1.msra.mxu0 0.0
    %3913 = vmatprep.mubr.f32.mxu0 0.0
    %3914 = vmatmul.mubr.f32.gmra.mrb[0].mxu0 %v3847
    %v3915 = vpop.f32.mrb[0].mxu0
    %v3916 = vadd.f32 %v3841, %v3915
    %v3917 = vpop.f32.mrb[0].mxu0
    %v3918 = vadd.f32 %v3843, %v3917
    %3919 = vdwg.mxu0
    %v3921 = vlaneseq
    %v3922 = vshrl.u32 %v3921, 7
    %v3923 = vsub.s32 0, %v3922
    %v3924 = vrot.slane %v3768, %v3923
    %v3925 = vlaneseq
    %v3926 = vshrl.u32 %v3925, 7
    %v3927 = vsub.s32 1, %v3926
    %v3928 = vrot.slane %v3768, %v3927
    %v3931 = vadd.f32 %v3916, %v3924
    %v3932 = vadd.f32 %v3918, %v3928
    %v3933 = vmax.f32 %v3931, 0.0
    %v3934 = vld [vmem:[#allocation2 + $0xa8] sm:$0xff]
    %v3935 = vld [vmem:[#allocation2 + $0xb0] sm:$0xff]
    %v3936 = vld [vmem:[#allocation2 + $0xb8] sm:$0xff]
    %v3937 = vld [vmem:[#allocation2 + $0xc0] sm:$0xff]
    %v3938 = vld [vmem:[#allocation2 + $0xc8] sm:$0xff]
    %v3939 = vld [vmem:[#allocation2 + $0xd0] sm:$0xff]
    %v3940 = vld [vmem:[#allocation2 + $0xd8] sm:$0xff]
    %v3941 = vld [vmem:[#allocation2 + $0xe0] sm:$0xff]
    %v3942 = vld [vmem:[#allocation2 + $0xe8] sm:$0xff]
    %v3943 = vld [vmem:[#allocation2 + $0xf0] sm:$0xff]
    %v3944 = vld [vmem:[#allocation2 + $0xf8] sm:$0xff]
    %v3945 = vld [vmem:[#allocation2 + $0x100] sm:$0xff]
    %v3946 = vld [vmem:[#allocation2 + $0x108] sm:$0xff]
    %v3947 = vld [vmem:[#allocation2 + $0x110] sm:$0xff]
    %v3948 = vld [vmem:[#allocation2 + $0x118] sm:$0xff]
    %v3949 = vld [vmem:[#allocation2 + $0x120] sm:$0xff]
    %v3950 = vld [vmem:[#allocation2 + $0x128] sm:$0xff]
    %v3951 = vld [vmem:[#allocation2 + $0x130] sm:$0xff]
    %v3952 = vld [vmem:[#allocation2 + $0x138] sm:$0xff]
    %v3953 = vld [vmem:[#allocation2 + $0x140] sm:$0xff]
    %v3954 = vld [vmem:[#allocation2 + $0x148] sm:$0xff]
    %v3955 = vld [vmem:[#allocation2 + $0x150] sm:$0xff]
    %v3956 = vld [vmem:[#allocation2 + $0x158] sm:$0x1]
    %3957 = vmatprep.subr.mxu0 0.0
    %3958 = vmatpush1.msra.mxu0 %v3936
    %3959 = vmatprep.subr.mxu0 0.0
    %3960 = vmatpush1.msra.mxu0 %v3937
    %3961 = vmatprep.subr.mxu0 0.0
    %3962 = vmatpush1.msra.mxu0 %v3938
    %3963 = vmatprep.subr.mxu0 0.0
    %3964 = vmatpush1.msra.mxu0 %v3939
    %3965 = vmatprep.subr.mxu0 0.0
    %3966 = vmatpush1.msra.mxu0 %v3940
    %3967 = vmatprep.subr.mxu0 0.0
    %3968 = vmatpush1.msra.mxu0 %v3941
    %3969 = vmatprep.subr.mxu0 0.0
    %3970 = vmatpush1.msra.mxu0 %v3942
    %3971 = vmatprep.subr.mxu0 0.0
    %3972 = vmatpush1.msra.mxu0 %v3943
    %3973 = vmatprep.subr.mxu0 0.0
    %3974 = vmatpush1.msra.mxu0 %v3944
    %3975 = vmatprep.subr.mxu0 0.0
    %3976 = vmatpush1.msra.mxu0 %v3945
    %3977 = vmatprep.subr.mxu0 0.0
    %3978 = vmatpush1.msra.mxu0 %v3946
    %3979 = vmatprep.subr.mxu0 0.0
    %3980 = vmatpush1.msra.mxu0 %v3947
    %3981 = vmatprep.subr.mxu0 0.0
    %3982 = vmatpush1.msra.mxu0 %v3948
    %3983 = vmatprep.subr.mxu0 0.0
    %3984 = vmatpush1.msra.mxu0 %v3949
    %3985 = vmatprep.subr.mxu0 0.0
    %3986 = vmatpush1.msra.mxu0 %v3950
    %3987 = vmatprep.subr.mxu0 0.0
    %3988 = vmatpush1.msra.mxu0 %v3951
    %3989 = vmatprep.subr.mxu0 0.0
    %3990 = vmatpush1.msra.mxu0 0.0
    %3991 = vmatprep.subr.mxu0 0.0
    %3992 = vmatpush1.msra.mxu0 0.0
    %3993 = vmatprep.subr.mxu0 0.0
    %3994 = vmatpush1.msra.mxu0 0.0
    %3995 = vmatprep.subr.mxu0 0.0
    %3996 = vmatpush1.msra.mxu0 0.0
    %3997 = vmatprep.subr.mxu0 0.0
    %3998 = vmatpush1.msra.mxu0 0.0
    %3999 = vmatprep.subr.mxu0 0.0
    %4000 = vmatpush1.msra.mxu0 0.0
    %4001 = vmatprep.subr.mxu0 0.0
    %4002 = vmatpush1.msra.mxu0 0.0
    %4003 = vmatprep.subr.mxu0 0.0
    %4004 = vmatpush1.msra.mxu0 0.0
    %4005 = vmatprep.subr.mxu0 0.0
    %4006 = vmatpush1.msra.mxu0 0.0
    %4007 = vmatprep.subr.mxu0 0.0
    %4008 = vmatpush1.msra.mxu0 0.0
    %4009 = vmatprep.subr.mxu0 0.0
    %4010 = vmatpush1.msra.mxu0 0.0
    %4011 = vmatprep.subr.mxu0 0.0
    %4012 = vmatpush1.msra.mxu0 0.0
    %4013 = vmatprep.subr.mxu0 0.0
    %4014 = vmatpush1.msra.mxu0 0.0
    %4015 = vmatprep.subr.mxu0 0.0
    %4016 = vmatpush1.msra.mxu0 0.0
    %4017 = vmatprep.subr.mxu0 0.0
    %4018 = vmatpush1.msra.mxu0 0.0
    %4019 = vmatprep.subr.mxu0 0.0
    %4020 = vmatpush1.msra.mxu0 0.0
    %4021 = vmatprep.mubr.f32.mxu0 0.0
    %4022 = vmatmul.mubr.f32.gmra.mrb[0].mxu0 %v3933
    %v4023 = vpop.f32.mrb[0].mxu0
    %v4024 = vadd.f32 0.0, %v4023
    %v4025 = vpop.f32.mrb[0].mxu0
    %4026 = vdwg.mxu0
    %4027 = vmatprep.subr.mxu0 0.0
    %4028 = vmatpush1.msra.mxu0 %v3934
    %4029 = vmatprep.subr.mxu0 0.0
    %4030 = vmatpush1.msra.mxu0 %v3935
    %4031 = vmatprep.subr.mxu0 0.0
    %4032 = vmatpush1.msra.mxu0 0.0
    %4033 = vmatprep.subr.mxu0 0.0
    %4034 = vmatpush1.msra.mxu0 0.0
    %4035 = vmatprep.subr.mxu0 0.0
    %4036 = vmatpush1.msra.mxu0 0.0
    %4037 = vmatprep.subr.mxu0 0.0
    %4038 = vmatpush1.msra.mxu0 0.0
    %4039 = vmatprep.subr.mxu0 0.0
    %4040 = vmatpush1.msra.mxu0 0.0
    %4041 = vmatprep.subr.mxu0 0.0
    %4042 = vmatpush1.msra.mxu0 0.0
    %4043 = vmatprep.subr.mxu0 0.0
    %4044 = vmatpush1.msra.mxu0 0.0
    %4045 = vmatprep.subr.mxu0 0.0
    %4046 = vmatpush1.msra.mxu0 0.0
    %4047 = vmatprep.subr.mxu0 0.0
    %4048 = vmatpush1.msra.mxu0 0.0
    %4049 = vmatprep.subr.mxu0 0.0
    %4050 = vmatpush1.msra.mxu0 0.0
    %4051 = vmatprep.subr.mxu0 0.0
    %4052 = vmatpush1.msra.mxu0 0.0
    %4053 = vmatprep.subr.mxu0 0.0
    %4054 = vmatpush1.msra.mxu0 0.0
    %4055 = vmatprep.subr.mxu0 0.0
    %4056 = vmatpush1.msra.mxu0 0.0
    %4057 = vmatprep.subr.mxu0 0.0
    %4058 = vmatpush1.msra.mxu0 0.0
    %4059 = vmatprep.subr.mxu0 0.0
    %4060 = vmatpush1.msra.mxu0 0.0
    %4061 = vmatprep.subr.mxu0 0.0
    %4062 = vmatpush1.msra.mxu0 0.0
    %4063 = vmatprep.subr.mxu0 0.0
    %4064 = vmatpush1.msra.mxu0 0.0
    %4065 = vmatprep.subr.mxu0 0.0
    %4066 = vmatpush1.msra.mxu0 0.0
    %4067 = vmatprep.subr.mxu0 0.0
    %4068 = vmatpush1.msra.mxu0 0.0
    %4069 = vmatprep.subr.mxu0 0.0
    %4070 = vmatpush1.msra.mxu0 0.0
    %4071 = vmatprep.subr.mxu0 0.0
    %4072 = vmatpush1.msra.mxu0 0.0
    %4073 = vmatprep.subr.mxu0 0.0
    %4074 = vmatpush1.msra.mxu0 0.0
    %4075 = vmatprep.subr.mxu0 0.0
    %4076 = vmatpush1.msra.mxu0 0.0
    %4077 = vmatprep.subr.mxu0 0.0
    %4078 = vmatpush1.msra.mxu0 0.0
    %4079 = vmatprep.subr.mxu0 0.0
    %4080 = vmatpush1.msra.mxu0 0.0
    %4081 = vmatprep.subr.mxu0 0.0
    %4082 = vmatpush1.msra.mxu0 0.0
    %4083 = vmatprep.subr.mxu0 0.0
    %4084 = vmatpush1.msra.mxu0 0.0
    %4085 = vmatprep.subr.mxu0 0.0
    %4086 = vmatpush1.msra.mxu0 0.0
    %4087 = vmatprep.subr.mxu0 0.0
    %4088 = vmatpush1.msra.mxu0 0.0
    %4089 = vmatprep.subr.mxu0 0.0
    %4090 = vmatpush1.msra.mxu0 0.0
    %4091 = vmatprep.mubr.f32.mxu0 0.0
    %4092 = vmatmul.mubr.f32.gmra.mrb[0].mxu0 %v3847
    %v4093 = vpop.f32.mrb[0].mxu0
    %v4094 = vadd.f32 %v4024, %v4093
    %v4095 = vpop.f32.mrb[0].mxu0
    %4096 = vdwg.mxu0
    %v4098 = vsel %vm282, %v3932, 0
    %4100 = vmatprep.subr.mxu0 0.0
    %4101 = vmatpush1.msra.mxu0 %v3952
    %4102 = vmatprep.subr.mxu0 0.0
    %4103 = vmatpush1.msra.mxu0 %v3953
    %4104 = vmatprep.subr.mxu0 0.0
    %4105 = vmatpush1.msra.mxu0 %v3954
    %4106 = vmatprep.subr.mxu0 0.0
    %4107 = vmatpush1.msra.mxu0 %v3955
    %4108 = vmatprep.subr.mxu0 0.0
    %4109 = vmatpush1.msra.mxu0 0.0
    %4110 = vmatprep.subr.mxu0 0.0
    %4111 = vmatpush1.msra.mxu0 0.0
    %4112 = vmatprep.subr.mxu0 0.0
    %4113 = vmatpush1.msra.mxu0 0.0
    %4114 = vmatprep.subr.mxu0 0.0
    %4115 = vmatpush1.msra.mxu0 0.0
    %4116 = vmatprep.subr.mxu0 0.0
    %4117 = vmatpush1.msra.mxu0 0.0
    %4118 = vmatprep.subr.mxu0 0.0
    %4119 = vmatpush1.msra.mxu0 0.0
    %4120 = vmatprep.subr.mxu0 0.0
    %4121 = vmatpush1.msra.mxu0 0.0
    %4122 = vmatprep.subr.mxu0 0.0
    %4123 = vmatpush1.msra.mxu0 0.0
    %4124 = vmatprep.subr.mxu0 0.0
    %4125 = vmatpush1.msra.mxu0 0.0
    %4126 = vmatprep.subr.mxu0 0.0
    %4127 = vmatpush1.msra.mxu0 0.0
    %4128 = vmatprep.subr.mxu0 0.0
    %4129 = vmatpush1.msra.mxu0 0.0
    %4130 = vmatprep.subr.mxu0 0.0
    %4131 = vmatpush1.msra.mxu0 0.0
    %4132 = vmatprep.subr.mxu0 0.0
    %4133 = vmatpush1.msra.mxu0 0.0
    %4134 = vmatprep.subr.mxu0 0.0
    %4135 = vmatpush1.msra.mxu0 0.0
    %4136 = vmatprep.subr.mxu0 0.0
    %4137 = vmatpush1.msra.mxu0 0.0
    %4138 = vmatprep.subr.mxu0 0.0
    %4139 = vmatpush1.msra.mxu0 0.0
    %4140 = vmatprep.subr.mxu0 0.0
    %4141 = vmatpush1.msra.mxu0 0.0
    %4142 = vmatprep.subr.mxu0 0.0
    %4143 = vmatpush1.msra.mxu0 0.0
    %4144 = vmatprep.subr.mxu0 0.0
    %4145 = vmatpush1.msra.mxu0 0.0
    %4146 = vmatprep.subr.mxu0 0.0
    %4147 = vmatpush1.msra.mxu0 0.0
    %4148 = vmatprep.subr.mxu0 0.0
    %4149 = vmatpush1.msra.mxu0 0.0
    %4150 = vmatprep.subr.mxu0 0.0
    %4151 = vmatpush1.msra.mxu0 0.0
    %4152 = vmatprep.subr.mxu0 0.0
    %4153 = vmatpush1.msra.mxu0 0.0
    %4154 = vmatprep.subr.mxu0 0.0
    %4155 = vmatpush1.msra.mxu0 0.0
    %4156 = vmatprep.subr.mxu0 0.0
    %4157 = vmatpush1.msra.mxu0 0.0
    %4158 = vmatprep.subr.mxu0 0.0
    %4159 = vmatpush1.msra.mxu0 0.0
    %4160 = vmatprep.subr.mxu0 0.0
    %4161 = vmatpush1.msra.mxu0 0.0
    %4162 = vmatprep.subr.mxu0 0.0
    %4163 = vmatpush1.msra.mxu0 0.0
    %4164 = vmatprep.mubr.f32.mxu0 0.0
    %4165 = vmatmul.mubr.f32.gmra.mrb[0].mxu0 %v4098
    %v4166 = vpop.f32.mrb[0].mxu0
    %v4167 = vadd.f32 0.0, %v4166
    %v4168 = vpop.f32.mrb[0].mxu0
    %4169 = vdwg.mxu0
    %v4170 = vadd.f32 %v4094, %v4167
    %v4171 = vlaneseq
    %v4172 = vshrl.u32 %v4171, 7
    %v4173 = vsub.s32 0, %v4172
    %v4174 = vrot.slane %v3956, %v4173
    %v4175 = vadd.f32 %v4170, %v4174
    %4176 = vst [vmem:[#allocation5] sm:$0xff] %v4175
    // Predicated region
    $region26: #{tpu_custom_call.1} parent=1 // pred_check
      _
    $region27: #{tpu_custom_call.1} parent=1 // pred_check_branch
      %4178 = sbr.rel (0) target = $region29
    $region28: #{tpu_custom_call.1} parent=1 // pred_region
      %s4180 = ssub.s32 128, 128
      %4181 = vsyncadd [#allocation4], %s4180
      %s4183 = sshll.u32 [#allocation5], 4
      %s4184 = int_to_ptr.vmem [resolvable:$true] %s4183
      %4186 = dma.vmem_to_hbm [thread:$0]  %s4184, 128, %s5, [#allocation4]
    $region29: #{tpu_custom_call.1} parent=1 // pred_fallthru
      _
    // Predicated region
    $region30: #{tpu_custom_call.1} parent=1 // pred_check
      _
    $region31: #{tpu_custom_call.1} parent=1 // pred_check_branch
      %4188 = sbr.rel (0) target = $region33
    $region32: #{tpu_custom_call.1} parent=1 // pred_region
      %4189 = dma.done [#allocation4], 128
    $region33: #{tpu_custom_call.1} parent=1 // pred_fallthru
      _
    %4190 = vsyncpa [#allocation3], 1
    %4191 = vsyncpa [#allocation4], 1

</llo_original>
